<compile_context>
chip_gen: v7x
topology: tpu7x:2x2x1
jax: 0.10.0
libtpu: 0.0.40
codegen_flags: <defaults>
</compile_context>

<pallas_src>
import math
import numpy as np
import jax
import jax.numpy as jnp
from jax.experimental import pallas as pl
from jax.experimental.pallas import tpu as pltpu

# ---- small, module-consistent config ----
B, T, D = 2, 16, 32          # batch, seq, encoder_embed_dim
NUM_HEADS = 4                # encoder_attention_heads
HEAD_DIM = D // NUM_HEADS
FFN = 64                     # encoder_ffn_embed_dim
NUM_LAYERS = 2               # encoder_layers
CONV_POS = 8                 # conv_pos (even kernel -> SamePad trims last step)
CONV_GROUPS = 4              # conv_pos_groups
LN_EPS = 1e-5


def _layernorm(x, w, b):
    mean = jnp.mean(x, axis=-1, keepdims=True)
    var = jnp.mean(jnp.square(x - mean), axis=-1, keepdims=True)
    return (x - mean) * jax.lax.rsqrt(var + LN_EPS) * w + b


def _gelu_exact(x):
    # Exact (erf-based) GELU with erf via Abramowitz-Stegun 7.1.26 (|err| < 1.5e-7).
    z = x * (1.0 / math.sqrt(2.0))
    az = jnp.abs(z)
    t = 1.0 / (1.0 + 0.3275911 * az)
    poly = ((((1.061405429 * t - 1.453152027) * t + 1.421413741) * t
             - 0.284496736) * t + 0.254829592) * t
    erf_abs = 1.0 - poly * jnp.exp(-az * az)
    erf_z = jnp.where(z >= 0.0, erf_abs, -erf_abs)
    return 0.5 * x * (1.0 + erf_z)


def _bf16_dot(a, w):
    # bf16 operands, f32 MXU accumulation (bf16-native on v5e/v6e/v7x).
    return jnp.dot(a.astype(jnp.bfloat16), w.astype(jnp.bfloat16),
                   preferred_element_type=jnp.float32)


# ---------------------------------------------------------------------------
# Fused Pallas kernel: whole forward pass, whole batch, single invocation
# ---------------------------------------------------------------------------

def _fused_encoder_kernel(x_ref, conv_w_ref, gvec_ref, mask_ref, wqkv_ref,
                          bqkv_ref, wo_ref, w1_ref, b1_ref, w2_ref, lvec_ref,
                          out_ref):
    x = x_ref[...]                                   # (B, T, D) f32
    K = CONV_POS
    pad = K // 2
    scale = 1.0 / math.sqrt(HEAD_DIM)
    gv = gvec_ref[...]                               # (3, D): conv_b, enc_ln_w, enc_ln_b
    mask = mask_ref[...]                             # (H*T, D) head-major expanded mask

    # ---- positional grouped Conv1d: per-element im2col, batch-folded matmul ----
    zpad = jnp.zeros((pad, D), jnp.float32)
    cols_rows = []
    for b in range(B):                               # static, B = 2
        xp = jnp.concatenate([zpad, x[b], zpad], axis=0)               # (T + K, D)
        cols_rows.append(
            jnp.concatenate([xp[k:k + T, :] for k in range(K)], axis=1))  # (T, K*D)
    cols = jnp.concatenate(cols_rows, axis=0)                          # (B*T, K*D)
    conv = _bf16_dot(cols, conv_w_ref[...]) + gv[0:1, :]               # (B*T, D)

    # residual + exact GELU + encoder LayerNorm (layer_norm_first=False)
    h = x.reshape(B * T, D) + _gelu_exact(conv)
    h = _layernorm(h, gv[1:2, :], gv[2:3, :])

    # ---- post-LN transformer encoder layers (weights stay VMEM-resident) -------
    for l in range(NUM_LAYERS):                      # static
        lv = lvec_ref[l]                             # (6, D): bo, ln1_w, ln1_b, b2, ln2_w, ln2_b

        # fused QKV: one (B*T, D) x (D, 3D) matmul
        qkv = _bf16_dot(h, wqkv_ref[l]) + bqkv_ref[l]                  # (B*T, 3D)
        q = qkv[:, 0:D] * scale
        k_ = qkv[:, D:2 * D]
        v_ = qkv[:, 2 * D:3 * D]

        # attention per batch element (scores must not mix batch rows); all heads
        # at once via the head-column-masked q trick with a precomputed big mask.
        attn_rows = []
        for b in range(B):                           # static, B = 2
            lo, hi = b * T, (b + 1) * T              # 16-row aligned slices
            qb, kb, vb = q[lo:hi], k_[lo:hi], v_[lo:hi]
            q_m = jnp.concatenate([qb] * NUM_HEADS, axis=0) * mask     # (H*T, D)
            s = _bf16_dot(q_m, kb.T)                                   # (H*T, T)
            s = s - jnp.max(s, axis=-1, keepdims=True)
            p = jnp.exp(s)
            p = p * pl.reciprocal(jnp.sum(p, axis=-1, keepdims=True), approx=True)
            o_full = _bf16_dot(p, vb)                                  # (H*T, D)
            attn_rows.append(
                (o_full * mask).reshape(NUM_HEADS, T, D).sum(axis=0))  # (T, D)
        attn = jnp.concatenate(attn_rows, axis=0)                      # (B*T, D)
        attn = _bf16_dot(attn, wo_ref[l]) + lv[0:1, :]

        x1 = _layernorm(h + attn, lv[1:2, :], lv[2:3, :])
        ff = jnp.maximum(_bf16_dot(x1, w1_ref[l]) + b1_ref[l], 0.0)
        ff = _bf16_dot(ff, w2_ref[l]) + lv[3:4, :]
        h = _layernorm(x1 + ff, lv[4:5, :], lv[5:6, :])

    out_ref[...] = h.reshape(B, T, D)


# ---------------------------------------------------------------------------
# pallas_call wrapper: ONE fused call, no grid (everything VMEM-resident)
# ---------------------------------------------------------------------------

_PARAM_KEYS = ['conv_w', 'gvecs', 'head_mask', 'wqkv', 'bqkv', 'wo', 'w1',
               'b1', 'w2', 'lvecs']


def transformer_encoder_forward(x, params):
    # padding_mask=None, eval mode (dropout / layerdrop are identities).
    plist = [params[k] for k in _PARAM_KEYS]
    return pl.pallas_call(
        _fused_encoder_kernel,
        out_shape=jax.ShapeDtypeStruct((B, T, D), jnp.float32),
    )(x, *plist)
    # TODO(synk): at real wav2vec2 dims (D=768, FFN=3072, 12 layers) the resident
    # weight set exceeds VMEM on every generation; add a layer grid axis (marked
    # "arbitrary"), stream per-layer bf16 weights via BlockSpecs indexed by it,
    # keep h in a VMEM scratch accumulator, and raise vmem_limit_bytes.


# ---------------------------------------------------------------------------
# deterministic parameter setup (synthetic init, shapes match the module)
# ---------------------------------------------------------------------------

def init_params(key):
    keys = jax.random.split(key, 1 + NUM_LAYERS)
    std = math.sqrt(4.0 / (CONV_POS * D))
    conv_v = jax.random.normal(keys[0], (D, D // CONV_GROUPS, CONV_POS),
                               jnp.float32) * std
    # weight_norm(dim=2): at this synthetic init g == ||v||, so effective weight == v.
    # TODO(synk): for trained checkpoints fold g/||v|| (per dim=2 slice) into conv_v.
    v_np = np.asarray(conv_v)
    in_pg = D // CONV_GROUPS
    # im2col weight: row index = k*D + in_channel, col = out_channel (block-diag per group).
    w_im2col = np.zeros((CONV_POS * D, D), np.float32)
    for g in range(CONV_GROUPS):
        blk = v_np[g * in_pg:(g + 1) * in_pg, :, :]        # (out_pg, in_pg, K)
        for k in range(CONV_POS):
            w_im2col[k * D + g * in_pg: k * D + (g + 1) * in_pg,
                     g * in_pg:(g + 1) * in_pg] = blk[:, :, k].T

    # expanded head mask: row block h (T rows, head-major) keeps head h's columns
    big_mask = np.zeros((NUM_HEADS * T, D), np.float32)
    for h in range(NUM_HEADS):
        big_mask[h * T:(h + 1) * T, h * HEAD_DIM:(h + 1) * HEAD_DIM] = 1.0

    def lin(k, fan_in, fan_out):
        return jax.random.normal(k, (fan_in, fan_out), jnp.float32) * 0.02

    wqkv, wo, w1, w2 = [], [], [], []
    for i in range(NUM_LAYERS):
        ks = jax.random.split(keys[1 + i], 6)
        wqkv.append(jnp.concatenate(
            [lin(ks[0], D, D), lin(ks[1], D, D), lin(ks[2], D, D)], axis=1))
        wo.append(lin(ks[3], D, D))
        w1.append(lin(ks[4], D, FFN))
        w2.append(lin(ks[5], FFN, D))

    L = NUM_LAYERS
    gvecs = jnp.stack([jnp.zeros((D,), jnp.float32),    # conv bias
                       jnp.ones((D,), jnp.float32),     # encoder LN weight
                       jnp.zeros((D,), jnp.float32)])   # encoder LN bias
    lvec_single = jnp.stack([jnp.zeros((D,), jnp.float32),   # bo
                             jnp.ones((D,), jnp.float32),    # ln1_w
                             jnp.zeros((D,), jnp.float32),   # ln1_b
                             jnp.zeros((D,), jnp.float32),   # b2
                             jnp.ones((D,), jnp.float32),    # ln2_w
                             jnp.zeros((D,), jnp.float32)])  # ln2_b
    lvecs = jnp.tile(lvec_single[None], (L, 1, 1))

    return dict(
        conv_v=conv_v,                                         # reference only
        conv_w=jnp.asarray(w_im2col).astype(jnp.bfloat16),
        gvecs=gvecs,
        head_mask=jnp.asarray(big_mask),
        wqkv=jnp.stack(wqkv).astype(jnp.bfloat16),
        bqkv=jnp.zeros((L, 1, 3 * D), jnp.float32),
        wo=jnp.stack(wo).astype(jnp.bfloat16),
        w1=jnp.stack(w1).astype(jnp.bfloat16),
        b1=jnp.zeros((L, 1, FFN), jnp.float32),
        w2=jnp.stack(w2).astype(jnp.bfloat16),
        lvecs=lvecs,
    )


# ---------------------------------------------------------------------------
# pure-JAX reference (true grouped conv + per-head attention) for sanity checks
# ---------------------------------------------------------------------------

def reference_forward(x, params):
    f32, bf16 = jnp.float32, jnp.bfloat16
    K, pad = CONV_POS, CONV_POS // 2
    conv_b = params['gvecs'][0:1, :]
    enc_ln_w = params['gvecs'][1:2, :]
    enc_ln_b = params['gvecs'][2:3, :]

    # true grouped Conv1d (PyTorch cross-correlation) + SamePad trims last output
    xt = jnp.transpose(x, (0, 2, 1))                           # (B, D, T)
    conv = jax.lax.conv_general_dilated(
        xt, params['conv_v'], window_strides=(1,), padding=[(pad, pad)],
        dimension_numbers=('NCH', 'OIH', 'NCH'),
        feature_group_count=CONV_GROUPS,
        precision=jax.lax.Precision.HIGHEST)
    conv = jnp.transpose(conv[:, :, :T], (0, 2, 1)) + conv_b   # (B, T, D)

    h = x + jax.nn.gelu(conv, approximate=False)
    h = _layernorm(h, enc_ln_w, enc_ln_b)

    scale = 1.0 / math.sqrt(HEAD_DIM)

    def mm(a, w):   # mirror the kernel's bf16-operand / f32-accumulate matmuls
        return jnp.einsum('...ij,jk->...ik', a.astype(bf16), w.astype(bf16),
                          preferred_element_type=f32)

    for l in range(NUM_LAYERS):
        lv = params['lvecs'][l]
        qkv = mm(h, params['wqkv'][l]) + params['bqkv'][l]
        q = (qkv[..., 0:D] * scale).reshape(B, T, NUM_HEADS, HEAD_DIM)
        k_ = qkv[..., D:2 * D].reshape(B, T, NUM_HEADS, HEAD_DIM)
        v_ = qkv[..., 2 * D:3 * D].reshape(B, T, NUM_HEADS, HEAD_DIM)
        s = jnp.einsum('bqhd,bkhd->bhqk', q.astype(bf16), k_.astype(bf16),
                       preferred_element_type=f32)
        p = jax.nn.softmax(s, axis=-1)
        o = jnp.einsum('bhqk,bkhd->bqhd', p.astype(bf16), v_.astype(bf16),
                       preferred_element_type=f32).reshape(B, T, D)
        o = mm(o, params['wo'][l]) + lv[0:1, :]
        x1 = _layernorm(h + o, lv[1:2, :], lv[2:3, :])
        ff = jnp.maximum(mm(x1, params['w1'][l]) + params['b1'][l], 0.0)
        ff = mm(ff, params['w2'][l]) + lv[3:4, :]
        h = _layernorm(x1 + ff, lv[4:5, :], lv[5:6, :])
    return h


if __name__ == "__main__":
    key = jax.random.PRNGKey(0)
    kx, kp = jax.random.split(key)
    x = jax.random.normal(kx, (B, T, D), jnp.float32)
    params = init_params(kp)

    out = transformer_encoder_forward(x, params)
    out = jax.block_until_ready(out)

    ref = reference_forward(x, params)
    np.testing.assert_allclose(np.asarray(out), np.asarray(ref), rtol=2e-2, atol=2e-2)
    print("KERNEL_OK")
</pallas_src>

<mosaic_0001>
module attributes {stable_mosaic.version = 11 : i64} {
  func.func @_fused_encoder_kernel(%arg0: memref<2x16x32xf32, #tpu.memory_space<vmem>>, %arg1: memref<256x32xbf16, #tpu.memory_space<vmem>>, %arg2: memref<3x32xf32, #tpu.memory_space<vmem>>, %arg3: memref<64x32xf32, #tpu.memory_space<vmem>>, %arg4: memref<2x32x96xbf16, #tpu.memory_space<vmem>>, %arg5: memref<2x1x96xf32, #tpu.memory_space<vmem>>, %arg6: memref<2x32x32xbf16, #tpu.memory_space<vmem>>, %arg7: memref<2x32x64xbf16, #tpu.memory_space<vmem>>, %arg8: memref<2x1x64xf32, #tpu.memory_space<vmem>>, %arg9: memref<2x64x32xbf16, #tpu.memory_space<vmem>>, %arg10: memref<2x6x32xf32, #tpu.memory_space<vmem>>, %arg11: memref<2x16x32xf32, #tpu.memory_space<vmem>>) attributes {dimension_semantics = [], scalar_prefetch = 0 : i64, scratch_operands = 0 : i64, tpu.core_type = #tpu.core_type<tc>} {
    %c0 = arith.constant 0 : index
    %c0_0 = arith.constant 0 : index
    %c0_1 = arith.constant 0 : index
    %0 = vector.load %arg0[%c0, %c0_0, %c0_1] : memref<2x16x32xf32, #tpu.memory_space<vmem>>, vector<2x16x32xf32>
    %c0_2 = arith.constant 0 : index
    %c0_3 = arith.constant 0 : index
    %1 = vector.load %arg2[%c0_2, %c0_3] : memref<3x32xf32, #tpu.memory_space<vmem>>, vector<3x32xf32>
    %c0_4 = arith.constant 0 : index
    %c0_5 = arith.constant 0 : index
    %2 = vector.load %arg3[%c0_4, %c0_5] : memref<64x32xf32, #tpu.memory_space<vmem>>, vector<64x32xf32>
    %cst = arith.constant 0.000000e+00 : f32
    %3 = vector.broadcast %cst : f32 to vector<4x32xf32>
    %4 = vector.extract_strided_slice %0 {offsets = [0, 0, 0], sizes = [1, 16, 32], strides = [1, 1, 1]} : vector<2x16x32xf32> to vector<1x16x32xf32>
    %5 = vector.shape_cast %4 : vector<1x16x32xf32> to vector<16x32xf32>
    %6 = tpu.concatenate %3, %5, %3 in 0 : vector<4x32xf32>, vector<16x32xf32>, vector<4x32xf32> -> vector<24x32xf32>
    %7 = vector.extract_strided_slice %6 {offsets = [0, 0], sizes = [16, 32], strides = [1, 1]} : vector<24x32xf32> to vector<16x32xf32>
    %8 = vector.extract_strided_slice %6 {offsets = [1, 0], sizes = [16, 32], strides = [1, 1]} : vector<24x32xf32> to vector<16x32xf32>
    %9 = vector.extract_strided_slice %6 {offsets = [2, 0], sizes = [16, 32], strides = [1, 1]} : vector<24x32xf32> to vector<16x32xf32>
    %10 = vector.extract_strided_slice %6 {offsets = [3, 0], sizes = [16, 32], strides = [1, 1]} : vector<24x32xf32> to vector<16x32xf32>
    %11 = vector.extract_strided_slice %6 {offsets = [4, 0], sizes = [16, 32], strides = [1, 1]} : vector<24x32xf32> to vector<16x32xf32>
    %12 = vector.extract_strided_slice %6 {offsets = [5, 0], sizes = [16, 32], strides = [1, 1]} : vector<24x32xf32> to vector<16x32xf32>
    %13 = vector.extract_strided_slice %6 {offsets = [6, 0], sizes = [16, 32], strides = [1, 1]} : vector<24x32xf32> to vector<16x32xf32>
    %14 = vector.extract_strided_slice %6 {offsets = [7, 0], sizes = [16, 32], strides = [1, 1]} : vector<24x32xf32> to vector<16x32xf32>
    %15 = tpu.concatenate %7, %8, %9, %10, %11, %12, %13, %14 in 1 : vector<16x32xf32>, vector<16x32xf32>, vector<16x32xf32>, vector<16x32xf32>, vector<16x32xf32>, vector<16x32xf32>, vector<16x32xf32>, vector<16x32xf32> -> vector<16x256xf32>
    %16 = vector.extract_strided_slice %0 {offsets = [1, 0, 0], sizes = [1, 16, 32], strides = [1, 1, 1]} : vector<2x16x32xf32> to vector<1x16x32xf32>
    %17 = vector.shape_cast %16 : vector<1x16x32xf32> to vector<16x32xf32>
    %18 = tpu.concatenate %3, %17, %3 in 0 : vector<4x32xf32>, vector<16x32xf32>, vector<4x32xf32> -> vector<24x32xf32>
    %19 = vector.extract_strided_slice %18 {offsets = [0, 0], sizes = [16, 32], strides = [1, 1]} : vector<24x32xf32> to vector<16x32xf32>
    %20 = vector.extract_strided_slice %18 {offsets = [1, 0], sizes = [16, 32], strides = [1, 1]} : vector<24x32xf32> to vector<16x32xf32>
    %21 = vector.extract_strided_slice %18 {offsets = [2, 0], sizes = [16, 32], strides = [1, 1]} : vector<24x32xf32> to vector<16x32xf32>
    %22 = vector.extract_strided_slice %18 {offsets = [3, 0], sizes = [16, 32], strides = [1, 1]} : vector<24x32xf32> to vector<16x32xf32>
    %23 = vector.extract_strided_slice %18 {offsets = [4, 0], sizes = [16, 32], strides = [1, 1]} : vector<24x32xf32> to vector<16x32xf32>
    %24 = vector.extract_strided_slice %18 {offsets = [5, 0], sizes = [16, 32], strides = [1, 1]} : vector<24x32xf32> to vector<16x32xf32>
    %25 = vector.extract_strided_slice %18 {offsets = [6, 0], sizes = [16, 32], strides = [1, 1]} : vector<24x32xf32> to vector<16x32xf32>
    %26 = vector.extract_strided_slice %18 {offsets = [7, 0], sizes = [16, 32], strides = [1, 1]} : vector<24x32xf32> to vector<16x32xf32>
    %27 = tpu.concatenate %19, %20, %21, %22, %23, %24, %25, %26 in 1 : vector<16x32xf32>, vector<16x32xf32>, vector<16x32xf32>, vector<16x32xf32>, vector<16x32xf32>, vector<16x32xf32>, vector<16x32xf32>, vector<16x32xf32> -> vector<16x256xf32>
    %28 = tpu.concatenate %15, %27 in 0 : vector<16x256xf32>, vector<16x256xf32> -> vector<32x256xf32>
    %c0_6 = arith.constant 0 : index
    %c0_7 = arith.constant 0 : index
    %29 = vector.load %arg1[%c0_6, %c0_7] : memref<256x32xbf16, #tpu.memory_space<vmem>>, vector<256x32xbf16>
    %30 = arith.truncf %28 : vector<32x256xf32> to vector<32x256xbf16>
    %cst_8 = arith.constant dense<0.000000e+00> : vector<32x32xf32>
    %31 = tpu.matmul %30, %29, %cst_8 {dimension_numbers = #tpu.dot_dimension_numbers<[1], [0], [0], [1], [0, 0, 1, 1], [], []>} : vector<32x256xbf16>, vector<256x32xbf16>, vector<32x32xf32> -> vector<32x32xf32>
    %32 = vector.extract_strided_slice %1 {offsets = [0, 0], sizes = [1, 32], strides = [1, 1]} : vector<3x32xf32> to vector<1x32xf32>
    %33 = vector.broadcast %32 : vector<1x32xf32> to vector<32x32xf32>
    %34 = arith.addf %31, %33 : vector<32x32xf32>
    %35 = vector.shape_cast %0 : vector<2x16x32xf32> to vector<32x32xf32>
    %cst_9 = arith.constant 0.707106769 : f32
    %36 = vector.broadcast %cst_9 : f32 to vector<32x32xf32>
    %37 = arith.mulf %34, %36 : vector<32x32xf32>
    %38 = math.absf %37 : vector<32x32xf32>
    %cst_10 = arith.constant 0.327591091 : f32
    %39 = vector.broadcast %cst_10 : f32 to vector<32x32xf32>
    %40 = arith.mulf %39, %38 : vector<32x32xf32>
    %cst_11 = arith.constant 1.000000e+00 : f32
    %41 = vector.broadcast %cst_11 : f32 to vector<32x32xf32>
    %42 = arith.addf %41, %40 : vector<32x32xf32>
    %cst_12 = arith.constant 1.000000e+00 : f32
    %43 = vector.broadcast %cst_12 : f32 to vector<32x32xf32>
    %44 = arith.divf %43, %42 : vector<32x32xf32>
    %cst_13 = arith.constant 1.06140542 : f32
    %45 = vector.broadcast %cst_13 : f32 to vector<32x32xf32>
    %46 = arith.mulf %45, %44 : vector<32x32xf32>
    %cst_14 = arith.constant 1.45315206 : f32
    %47 = vector.broadcast %cst_14 : f32 to vector<32x32xf32>
    %48 = arith.subf %46, %47 : vector<32x32xf32>
    %49 = arith.mulf %48, %44 : vector<32x32xf32>
    %cst_15 = arith.constant 1.42141378 : f32
    %50 = vector.broadcast %cst_15 : f32 to vector<32x32xf32>
    %51 = arith.addf %49, %50 : vector<32x32xf32>
    %52 = arith.mulf %51, %44 : vector<32x32xf32>
    %cst_16 = arith.constant 0.284496725 : f32
    %53 = vector.broadcast %cst_16 : f32 to vector<32x32xf32>
    %54 = arith.subf %52, %53 : vector<32x32xf32>
    %55 = arith.mulf %54, %44 : vector<32x32xf32>
    %cst_17 = arith.constant 0.254829586 : f32
    %56 = vector.broadcast %cst_17 : f32 to vector<32x32xf32>
    %57 = arith.addf %55, %56 : vector<32x32xf32>
    %58 = arith.mulf %57, %44 : vector<32x32xf32>
    %cst_18 = arith.constant 0.000000e+00 : f32
    %59 = vector.broadcast %cst_18 : f32 to vector<32x32xf32>
    %60 = arith.subf %59, %38 : vector<32x32xf32>
    %61 = arith.mulf %60, %38 : vector<32x32xf32>
    %62 = math.exp %61 : vector<32x32xf32>
    %63 = arith.mulf %58, %62 : vector<32x32xf32>
    %cst_19 = arith.constant 1.000000e+00 : f32
    %64 = vector.broadcast %cst_19 : f32 to vector<32x32xf32>
    %65 = arith.subf %64, %63 : vector<32x32xf32>
    %cst_20 = arith.constant 0.000000e+00 : f32
    %66 = vector.broadcast %cst_20 : f32 to vector<32x32xf32>
    %67 = arith.cmpf oge, %37, %66 : vector<32x32xf32>
    %cst_21 = arith.constant 0.000000e+00 : f32
    %68 = vector.broadcast %cst_21 : f32 to vector<32x32xf32>
    %69 = arith.subf %68, %65 : vector<32x32xf32>
    %70 = arith.select %67, %65, %69 : vector<32x32xi1>, vector<32x32xf32>
    %cst_22 = arith.constant 5.000000e-01 : f32
    %71 = vector.broadcast %cst_22 : f32 to vector<32x32xf32>
    %72 = arith.mulf %71, %34 : vector<32x32xf32>
    %cst_23 = arith.constant 1.000000e+00 : f32
    %73 = vector.broadcast %cst_23 : f32 to vector<32x32xf32>
    %74 = arith.addf %73, %70 : vector<32x32xf32>
    %75 = arith.mulf %72, %74 : vector<32x32xf32>
    %76 = arith.addf %35, %75 : vector<32x32xf32>
    %77 = vector.extract_strided_slice %1 {offsets = [1, 0], sizes = [1, 32], strides = [1, 1]} : vector<3x32xf32> to vector<1x32xf32>
    %78 = vector.extract_strided_slice %1 {offsets = [2, 0], sizes = [1, 32], strides = [1, 1]} : vector<3x32xf32> to vector<1x32xf32>
    %cst_24 = arith.constant dense<0.000000e+00> : vector<32xf32>
    %79 = vector.multi_reduction <add>, %76, %cst_24 [1] : vector<32x32xf32> to vector<32xf32>
    %80 = vector.shape_cast %79 : vector<32xf32> to vector<32x1xf32>
    %cst_25 = arith.constant 3.200000e+01 : f32
    %81 = vector.broadcast %cst_25 : f32 to vector<32x1xf32>
    %82 = arith.divf %80, %81 : vector<32x1xf32>
    %83 = vector.broadcast %82 : vector<32x1xf32> to vector<32x32xf32>
    %84 = arith.subf %76, %83 : vector<32x32xf32>
    %85 = arith.mulf %84, %84 : vector<32x32xf32>
    %cst_26 = arith.constant dense<0.000000e+00> : vector<32xf32>
    %86 = vector.multi_reduction <add>, %85, %cst_26 [1] : vector<32x32xf32> to vector<32xf32>
    %87 = vector.shape_cast %86 : vector<32xf32> to vector<32x1xf32>
    %cst_27 = arith.constant 3.200000e+01 : f32
    %88 = vector.broadcast %cst_27 : f32 to vector<32x1xf32>
    %89 = arith.divf %87, %88 : vector<32x1xf32>
    %90 = vector.broadcast %82 : vector<32x1xf32> to vector<32x32xf32>
    %91 = arith.subf %76, %90 : vector<32x32xf32>
    %cst_28 = arith.constant 9.99999974E-6 : f32
    %92 = vector.broadcast %cst_28 : f32 to vector<32x1xf32>
    %93 = arith.addf %89, %92 : vector<32x1xf32>
    %94 = math.rsqrt %93 : vector<32x1xf32>
    %95 = vector.broadcast %94 : vector<32x1xf32> to vector<32x32xf32>
    %96 = arith.mulf %91, %95 : vector<32x32xf32>
    %97 = vector.broadcast %77 : vector<1x32xf32> to vector<32x32xf32>
    %98 = arith.mulf %96, %97 : vector<32x32xf32>
    %99 = vector.broadcast %78 : vector<1x32xf32> to vector<32x32xf32>
    %100 = arith.addf %98, %99 : vector<32x32xf32>
    %c0_29 = arith.constant 0 : index
    %c0_30 = arith.constant 0 : index
    %c0_31 = arith.constant 0 : index
    %101 = vector.load %arg10[%c0_29, %c0_30, %c0_31] : memref<2x6x32xf32, #tpu.memory_space<vmem>>, vector<1x6x32xf32>
    %102 = vector.shape_cast %101 : vector<1x6x32xf32> to vector<6x32xf32>
    %c0_32 = arith.constant 0 : index
    %c0_33 = arith.constant 0 : index
    %c0_34 = arith.constant 0 : index
    %103 = vector.load %arg4[%c0_32, %c0_33, %c0_34] : memref<2x32x96xbf16, #tpu.memory_space<vmem>>, vector<1x32x96xbf16>
    %104 = vector.shape_cast %103 : vector<1x32x96xbf16> to vector<32x96xbf16>
    %105 = arith.truncf %100 : vector<32x32xf32> to vector<32x32xbf16>
    %cst_35 = arith.constant dense<0.000000e+00> : vector<32x96xf32>
    %106 = tpu.matmul %105, %104, %cst_35 {dimension_numbers = #tpu.dot_dimension_numbers<[1], [0], [0], [1], [0, 0, 1, 1], [], []>} : vector<32x32xbf16>, vector<32x96xbf16>, vector<32x96xf32> -> vector<32x96xf32>
    %c0_36 = arith.constant 0 : index
    %c0_37 = arith.constant 0 : index
    %c0_38 = arith.constant 0 : index
    %107 = vector.load %arg5[%c0_36, %c0_37, %c0_38] : memref<2x1x96xf32, #tpu.memory_space<vmem>>, vector<1x1x96xf32>
    %108 = vector.shape_cast %107 : vector<1x1x96xf32> to vector<1x96xf32>
    %109 = vector.broadcast %108 : vector<1x96xf32> to vector<32x96xf32>
    %110 = arith.addf %106, %109 : vector<32x96xf32>
    %111 = vector.extract_strided_slice %110 {offsets = [0, 0], sizes = [32, 32], strides = [1, 1]} : vector<32x96xf32> to vector<32x32xf32>
    %cst_39 = arith.constant 0.353553385 : f32
    %112 = vector.broadcast %cst_39 : f32 to vector<32x32xf32>
    %113 = arith.mulf %111, %112 : vector<32x32xf32>
    %114 = vector.extract_strided_slice %110 {offsets = [0, 32], sizes = [32, 32], strides = [1, 1]} : vector<32x96xf32> to vector<32x32xf32>
    %115 = vector.extract_strided_slice %110 {offsets = [0, 64], sizes = [32, 32], strides = [1, 1]} : vector<32x96xf32> to vector<32x32xf32>
    %116 = vector.extract_strided_slice %113 {offsets = [0, 0], sizes = [16, 32], strides = [1, 1]} : vector<32x32xf32> to vector<16x32xf32>
    %117 = vector.extract_strided_slice %114 {offsets = [0, 0], sizes = [16, 32], strides = [1, 1]} : vector<32x32xf32> to vector<16x32xf32>
    %118 = vector.extract_strided_slice %115 {offsets = [0, 0], sizes = [16, 32], strides = [1, 1]} : vector<32x32xf32> to vector<16x32xf32>
    %119 = tpu.concatenate %116, %116, %116, %116 in 0 : vector<16x32xf32>, vector<16x32xf32>, vector<16x32xf32>, vector<16x32xf32> -> vector<64x32xf32>
    %120 = arith.mulf %119, %2 : vector<64x32xf32>
    %121 = tpu.transpose %117, [1, 0] : vector<16x32xf32> -> vector<32x16xf32>
    %122 = arith.truncf %120 : vector<64x32xf32> to vector<64x32xbf16>
    %123 = arith.truncf %121 : vector<32x16xf32> to vector<32x16xbf16>
    %cst_40 = arith.constant dense<0.000000e+00> : vector<64x16xf32>
    %124 = tpu.matmul %122, %123, %cst_40 {dimension_numbers = #tpu.dot_dimension_numbers<[1], [0], [0], [1], [0, 0, 1, 1], [], []>} : vector<64x32xbf16>, vector<32x16xbf16>, vector<64x16xf32> -> vector<64x16xf32>
    %cst_41 = arith.constant dense<0xFF800000> : vector<64xf32>
    %125 = vector.multi_reduction <maximumf>, %124, %cst_41 [1] : vector<64x16xf32> to vector<64xf32>
    %126 = vector.shape_cast %125 : vector<64xf32> to vector<64x1xf32>
    %127 = vector.broadcast %126 : vector<64x1xf32> to vector<64x16xf32>
    %128 = arith.subf %124, %127 : vector<64x16xf32>
    %129 = math.exp %128 : vector<64x16xf32>
    %cst_42 = arith.constant dense<0.000000e+00> : vector<64xf32>
    %130 = vector.multi_reduction <add>, %129, %cst_42 [1] : vector<64x16xf32> to vector<64xf32>
    %131 = vector.shape_cast %130 : vector<64xf32> to vector<64x1xf32>
    %132 = tpu.reciprocal %131 {approx = true} : vector<64x1xf32> -> vector<64x1xf32>
    %133 = vector.broadcast %132 : vector<64x1xf32> to vector<64x16xf32>
    %134 = arith.mulf %129, %133 : vector<64x16xf32>
    %135 = arith.truncf %134 : vector<64x16xf32> to vector<64x16xbf16>
    %136 = arith.truncf %118 : vector<16x32xf32> to vector<16x32xbf16>
    %cst_43 = arith.constant dense<0.000000e+00> : vector<64x32xf32>
    %137 = tpu.matmul %135, %136, %cst_43 {dimension_numbers = #tpu.dot_dimension_numbers<[1], [0], [0], [1], [0, 0, 1, 1], [], []>} : vector<64x16xbf16>, vector<16x32xbf16>, vector<64x32xf32> -> vector<64x32xf32>
    %138 = arith.mulf %137, %2 : vector<64x32xf32>
    %139 = vector.shape_cast %138 : vector<64x32xf32> to vector<4x16x32xf32>
    %cst_44 = arith.constant dense<0.000000e+00> : vector<16x32xf32>
    %140 = vector.multi_reduction <add>, %139, %cst_44 [0] : vector<4x16x32xf32> to vector<16x32xf32>
    %141 = vector.extract_strided_slice %113 {offsets = [16, 0], sizes = [16, 32], strides = [1, 1]} : vector<32x32xf32> to vector<16x32xf32>
    %142 = vector.extract_strided_slice %114 {offsets = [16, 0], sizes = [16, 32], strides = [1, 1]} : vector<32x32xf32> to vector<16x32xf32>
    %143 = vector.extract_strided_slice %115 {offsets = [16, 0], sizes = [16, 32], strides = [1, 1]} : vector<32x32xf32> to vector<16x32xf32>
    %144 = tpu.concatenate %141, %141, %141, %141 in 0 : vector<16x32xf32>, vector<16x32xf32>, vector<16x32xf32>, vector<16x32xf32> -> vector<64x32xf32>
    %145 = arith.mulf %144, %2 : vector<64x32xf32>
    %146 = tpu.transpose %142, [1, 0] : vector<16x32xf32> -> vector<32x16xf32>
    %147 = arith.truncf %145 : vector<64x32xf32> to vector<64x32xbf16>
    %148 = arith.truncf %146 : vector<32x16xf32> to vector<32x16xbf16>
    %cst_45 = arith.constant dense<0.000000e+00> : vector<64x16xf32>
    %149 = tpu.matmul %147, %148, %cst_45 {dimension_numbers = #tpu.dot_dimension_numbers<[1], [0], [0], [1], [0, 0, 1, 1], [], []>} : vector<64x32xbf16>, vector<32x16xbf16>, vector<64x16xf32> -> vector<64x16xf32>
    %cst_46 = arith.constant dense<0xFF800000> : vector<64xf32>
    %150 = vector.multi_reduction <maximumf>, %149, %cst_46 [1] : vector<64x16xf32> to vector<64xf32>
    %151 = vector.shape_cast %150 : vector<64xf32> to vector<64x1xf32>
    %152 = vector.broadcast %151 : vector<64x1xf32> to vector<64x16xf32>
    %153 = arith.subf %149, %152 : vector<64x16xf32>
    %154 = math.exp %153 : vector<64x16xf32>
    %cst_47 = arith.constant dense<0.000000e+00> : vector<64xf32>
    %155 = vector.multi_reduction <add>, %154, %cst_47 [1] : vector<64x16xf32> to vector<64xf32>
    %156 = vector.shape_cast %155 : vector<64xf32> to vector<64x1xf32>
    %157 = tpu.reciprocal %156 {approx = true} : vector<64x1xf32> -> vector<64x1xf32>
    %158 = vector.broadcast %157 : vector<64x1xf32> to vector<64x16xf32>
    %159 = arith.mulf %154, %158 : vector<64x16xf32>
    %160 = arith.truncf %159 : vector<64x16xf32> to vector<64x16xbf16>
    %161 = arith.truncf %143 : vector<16x32xf32> to vector<16x32xbf16>
    %cst_48 = arith.constant dense<0.000000e+00> : vector<64x32xf32>
    %162 = tpu.matmul %160, %161, %cst_48 {dimension_numbers = #tpu.dot_dimension_numbers<[1], [0], [0], [1], [0, 0, 1, 1], [], []>} : vector<64x16xbf16>, vector<16x32xbf16>, vector<64x32xf32> -> vector<64x32xf32>
    %163 = arith.mulf %162, %2 : vector<64x32xf32>
    %164 = vector.shape_cast %163 : vector<64x32xf32> to vector<4x16x32xf32>
    %cst_49 = arith.constant dense<0.000000e+00> : vector<16x32xf32>
    %165 = vector.multi_reduction <add>, %164, %cst_49 [0] : vector<4x16x32xf32> to vector<16x32xf32>
    %166 = tpu.concatenate %140, %165 in 0 : vector<16x32xf32>, vector<16x32xf32> -> vector<32x32xf32>
    %c0_50 = arith.constant 0 : index
    %c0_51 = arith.constant 0 : index
    %c0_52 = arith.constant 0 : index
    %167 = vector.load %arg6[%c0_50, %c0_51, %c0_52] : memref<2x32x32xbf16, #tpu.memory_space<vmem>>, vector<1x32x32xbf16>
    %168 = vector.shape_cast %167 : vector<1x32x32xbf16> to vector<32x32xbf16>
    %169 = arith.truncf %166 : vector<32x32xf32> to vector<32x32xbf16>
    %cst_53 = arith.constant dense<0.000000e+00> : vector<32x32xf32>
    %170 = tpu.matmul %169, %168, %cst_53 {dimension_numbers = #tpu.dot_dimension_numbers<[1], [0], [0], [1], [0, 0, 1, 1], [], []>} : vector<32x32xbf16>, vector<32x32xbf16>, vector<32x32xf32> -> vector<32x32xf32>
    %171 = vector.extract_strided_slice %102 {offsets = [0, 0], sizes = [1, 32], strides = [1, 1]} : vector<6x32xf32> to vector<1x32xf32>
    %172 = vector.broadcast %171 : vector<1x32xf32> to vector<32x32xf32>
    %173 = arith.addf %170, %172 : vector<32x32xf32>
    %174 = arith.addf %100, %173 : vector<32x32xf32>
    %175 = vector.extract_strided_slice %102 {offsets = [1, 0], sizes = [1, 32], strides = [1, 1]} : vector<6x32xf32> to vector<1x32xf32>
    %176 = vector.extract_strided_slice %102 {offsets = [2, 0], sizes = [1, 32], strides = [1, 1]} : vector<6x32xf32> to vector<1x32xf32>
    %cst_54 = arith.constant dense<0.000000e+00> : vector<32xf32>
    %177 = vector.multi_reduction <add>, %174, %cst_54 [1] : vector<32x32xf32> to vector<32xf32>
    %178 = vector.shape_cast %177 : vector<32xf32> to vector<32x1xf32>
    %cst_55 = arith.constant 3.200000e+01 : f32
    %179 = vector.broadcast %cst_55 : f32 to vector<32x1xf32>
    %180 = arith.divf %178, %179 : vector<32x1xf32>
    %181 = vector.broadcast %180 : vector<32x1xf32> to vector<32x32xf32>
    %182 = arith.subf %174, %181 : vector<32x32xf32>
    %183 = arith.mulf %182, %182 : vector<32x32xf32>
    %cst_56 = arith.constant dense<0.000000e+00> : vector<32xf32>
    %184 = vector.multi_reduction <add>, %183, %cst_56 [1] : vector<32x32xf32> to vector<32xf32>
    %185 = vector.shape_cast %184 : vector<32xf32> to vector<32x1xf32>
    %cst_57 = arith.constant 3.200000e+01 : f32
    %186 = vector.broadcast %cst_57 : f32 to vector<32x1xf32>
    %187 = arith.divf %185, %186 : vector<32x1xf32>
    %188 = vector.broadcast %180 : vector<32x1xf32> to vector<32x32xf32>
    %189 = arith.subf %174, %188 : vector<32x32xf32>
    %cst_58 = arith.constant 9.99999974E-6 : f32
    %190 = vector.broadcast %cst_58 : f32 to vector<32x1xf32>
    %191 = arith.addf %187, %190 : vector<32x1xf32>
    %192 = math.rsqrt %191 : vector<32x1xf32>
    %193 = vector.broadcast %192 : vector<32x1xf32> to vector<32x32xf32>
    %194 = arith.mulf %189, %193 : vector<32x32xf32>
    %195 = vector.broadcast %175 : vector<1x32xf32> to vector<32x32xf32>
    %196 = arith.mulf %194, %195 : vector<32x32xf32>
    %197 = vector.broadcast %176 : vector<1x32xf32> to vector<32x32xf32>
    %198 = arith.addf %196, %197 : vector<32x32xf32>
    %c0_59 = arith.constant 0 : index
    %c0_60 = arith.constant 0 : index
    %c0_61 = arith.constant 0 : index
    %199 = vector.load %arg7[%c0_59, %c0_60, %c0_61] : memref<2x32x64xbf16, #tpu.memory_space<vmem>>, vector<1x32x64xbf16>
    %200 = vector.shape_cast %199 : vector<1x32x64xbf16> to vector<32x64xbf16>
    %201 = arith.truncf %198 : vector<32x32xf32> to vector<32x32xbf16>
    %cst_62 = arith.constant dense<0.000000e+00> : vector<32x64xf32>
    %202 = tpu.matmul %201, %200, %cst_62 {dimension_numbers = #tpu.dot_dimension_numbers<[1], [0], [0], [1], [0, 0, 1, 1], [], []>} : vector<32x32xbf16>, vector<32x64xbf16>, vector<32x64xf32> -> vector<32x64xf32>
    %c0_63 = arith.constant 0 : index
    %c0_64 = arith.constant 0 : index
    %c0_65 = arith.constant 0 : index
    %203 = vector.load %arg8[%c0_63, %c0_64, %c0_65] : memref<2x1x64xf32, #tpu.memory_space<vmem>>, vector<1x1x64xf32>
    %204 = vector.shape_cast %203 : vector<1x1x64xf32> to vector<1x64xf32>
    %205 = vector.broadcast %204 : vector<1x64xf32> to vector<32x64xf32>
    %206 = arith.addf %202, %205 : vector<32x64xf32>
    %cst_66 = arith.constant 0.000000e+00 : f32
    %207 = vector.broadcast %cst_66 : f32 to vector<32x64xf32>
    %208 = arith.maximumf %206, %207 : vector<32x64xf32>
    %c0_67 = arith.constant 0 : index
    %c0_68 = arith.constant 0 : index
    %c0_69 = arith.constant 0 : index
    %209 = vector.load %arg9[%c0_67, %c0_68, %c0_69] : memref<2x64x32xbf16, #tpu.memory_space<vmem>>, vector<1x64x32xbf16>
    %210 = vector.shape_cast %209 : vector<1x64x32xbf16> to vector<64x32xbf16>
    %211 = arith.truncf %208 : vector<32x64xf32> to vector<32x64xbf16>
    %cst_70 = arith.constant dense<0.000000e+00> : vector<32x32xf32>
    %212 = tpu.matmul %211, %210, %cst_70 {dimension_numbers = #tpu.dot_dimension_numbers<[1], [0], [0], [1], [0, 0, 1, 1], [], []>} : vector<32x64xbf16>, vector<64x32xbf16>, vector<32x32xf32> -> vector<32x32xf32>
    %213 = vector.extract_strided_slice %102 {offsets = [3, 0], sizes = [1, 32], strides = [1, 1]} : vector<6x32xf32> to vector<1x32xf32>
    %214 = vector.broadcast %213 : vector<1x32xf32> to vector<32x32xf32>
    %215 = arith.addf %212, %214 : vector<32x32xf32>
    %216 = arith.addf %198, %215 : vector<32x32xf32>
    %217 = vector.extract_strided_slice %102 {offsets = [4, 0], sizes = [1, 32], strides = [1, 1]} : vector<6x32xf32> to vector<1x32xf32>
    %218 = vector.extract_strided_slice %102 {offsets = [5, 0], sizes = [1, 32], strides = [1, 1]} : vector<6x32xf32> to vector<1x32xf32>
    %cst_71 = arith.constant dense<0.000000e+00> : vector<32xf32>
    %219 = vector.multi_reduction <add>, %216, %cst_71 [1] : vector<32x32xf32> to vector<32xf32>
    %220 = vector.shape_cast %219 : vector<32xf32> to vector<32x1xf32>
    %cst_72 = arith.constant 3.200000e+01 : f32
    %221 = vector.broadcast %cst_72 : f32 to vector<32x1xf32>
    %222 = arith.divf %220, %221 : vector<32x1xf32>
    %223 = vector.broadcast %222 : vector<32x1xf32> to vector<32x32xf32>
    %224 = arith.subf %216, %223 : vector<32x32xf32>
    %225 = arith.mulf %224, %224 : vector<32x32xf32>
    %cst_73 = arith.constant dense<0.000000e+00> : vector<32xf32>
    %226 = vector.multi_reduction <add>, %225, %cst_73 [1] : vector<32x32xf32> to vector<32xf32>
    %227 = vector.shape_cast %226 : vector<32xf32> to vector<32x1xf32>
    %cst_74 = arith.constant 3.200000e+01 : f32
    %228 = vector.broadcast %cst_74 : f32 to vector<32x1xf32>
    %229 = arith.divf %227, %228 : vector<32x1xf32>
    %230 = vector.broadcast %222 : vector<32x1xf32> to vector<32x32xf32>
    %231 = arith.subf %216, %230 : vector<32x32xf32>
    %cst_75 = arith.constant 9.99999974E-6 : f32
    %232 = vector.broadcast %cst_75 : f32 to vector<32x1xf32>
    %233 = arith.addf %229, %232 : vector<32x1xf32>
    %234 = math.rsqrt %233 : vector<32x1xf32>
    %235 = vector.broadcast %234 : vector<32x1xf32> to vector<32x32xf32>
    %236 = arith.mulf %231, %235 : vector<32x32xf32>
    %237 = vector.broadcast %217 : vector<1x32xf32> to vector<32x32xf32>
    %238 = arith.mulf %236, %237 : vector<32x32xf32>
    %239 = vector.broadcast %218 : vector<1x32xf32> to vector<32x32xf32>
    %240 = arith.addf %238, %239 : vector<32x32xf32>
    %c1 = arith.constant 1 : index
    %c0_76 = arith.constant 0 : index
    %c0_77 = arith.constant 0 : index
    %241 = vector.load %arg10[%c1, %c0_76, %c0_77] : memref<2x6x32xf32, #tpu.memory_space<vmem>>, vector<1x6x32xf32>
    %242 = vector.shape_cast %241 : vector<1x6x32xf32> to vector<6x32xf32>
    %c1_78 = arith.constant 1 : index
    %c0_79 = arith.constant 0 : index
    %c0_80 = arith.constant 0 : index
    %243 = vector.load %arg4[%c1_78, %c0_79, %c0_80] : memref<2x32x96xbf16, #tpu.memory_space<vmem>>, vector<1x32x96xbf16>
    %244 = vector.shape_cast %243 : vector<1x32x96xbf16> to vector<32x96xbf16>
    %245 = arith.truncf %240 : vector<32x32xf32> to vector<32x32xbf16>
    %cst_81 = arith.constant dense<0.000000e+00> : vector<32x96xf32>
    %246 = tpu.matmul %245, %244, %cst_81 {dimension_numbers = #tpu.dot_dimension_numbers<[1], [0], [0], [1], [0, 0, 1, 1], [], []>} : vector<32x32xbf16>, vector<32x96xbf16>, vector<32x96xf32> -> vector<32x96xf32>
    %c1_82 = arith.constant 1 : index
    %c0_83 = arith.constant 0 : index
    %c0_84 = arith.constant 0 : index
    %247 = vector.load %arg5[%c1_82, %c0_83, %c0_84] : memref<2x1x96xf32, #tpu.memory_space<vmem>>, vector<1x1x96xf32>
    %248 = vector.shape_cast %247 : vector<1x1x96xf32> to vector<1x96xf32>
    %249 = vector.broadcast %248 : vector<1x96xf32> to vector<32x96xf32>
    %250 = arith.addf %246, %249 : vector<32x96xf32>
    %251 = vector.extract_strided_slice %250 {offsets = [0, 0], sizes = [32, 32], strides = [1, 1]} : vector<32x96xf32> to vector<32x32xf32>
    %cst_85 = arith.constant 0.353553385 : f32
    %252 = vector.broadcast %cst_85 : f32 to vector<32x32xf32>
    %253 = arith.mulf %251, %252 : vector<32x32xf32>
    %254 = vector.extract_strided_slice %250 {offsets = [0, 32], sizes = [32, 32], strides = [1, 1]} : vector<32x96xf32> to vector<32x32xf32>
    %255 = vector.extract_strided_slice %250 {offsets = [0, 64], sizes = [32, 32], strides = [1, 1]} : vector<32x96xf32> to vector<32x32xf32>
    %256 = vector.extract_strided_slice %253 {offsets = [0, 0], sizes = [16, 32], strides = [1, 1]} : vector<32x32xf32> to vector<16x32xf32>
    %257 = vector.extract_strided_slice %254 {offsets = [0, 0], sizes = [16, 32], strides = [1, 1]} : vector<32x32xf32> to vector<16x32xf32>
    %258 = vector.extract_strided_slice %255 {offsets = [0, 0], sizes = [16, 32], strides = [1, 1]} : vector<32x32xf32> to vector<16x32xf32>
    %259 = tpu.concatenate %256, %256, %256, %256 in 0 : vector<16x32xf32>, vector<16x32xf32>, vector<16x32xf32>, vector<16x32xf32> -> vector<64x32xf32>
    %260 = arith.mulf %259, %2 : vector<64x32xf32>
    %261 = tpu.transpose %257, [1, 0] : vector<16x32xf32> -> vector<32x16xf32>
    %262 = arith.truncf %260 : vector<64x32xf32> to vector<64x32xbf16>
    %263 = arith.truncf %261 : vector<32x16xf32> to vector<32x16xbf16>
    %cst_86 = arith.constant dense<0.000000e+00> : vector<64x16xf32>
    %264 = tpu.matmul %262, %263, %cst_86 {dimension_numbers = #tpu.dot_dimension_numbers<[1], [0], [0], [1], [0, 0, 1, 1], [], []>} : vector<64x32xbf16>, vector<32x16xbf16>, vector<64x16xf32> -> vector<64x16xf32>
    %cst_87 = arith.constant dense<0xFF800000> : vector<64xf32>
    %265 = vector.multi_reduction <maximumf>, %264, %cst_87 [1] : vector<64x16xf32> to vector<64xf32>
    %266 = vector.shape_cast %265 : vector<64xf32> to vector<64x1xf32>
    %267 = vector.broadcast %266 : vector<64x1xf32> to vector<64x16xf32>
    %268 = arith.subf %264, %267 : vector<64x16xf32>
    %269 = math.exp %268 : vector<64x16xf32>
    %cst_88 = arith.constant dense<0.000000e+00> : vector<64xf32>
    %270 = vector.multi_reduction <add>, %269, %cst_88 [1] : vector<64x16xf32> to vector<64xf32>
    %271 = vector.shape_cast %270 : vector<64xf32> to vector<64x1xf32>
    %272 = tpu.reciprocal %271 {approx = true} : vector<64x1xf32> -> vector<64x1xf32>
    %273 = vector.broadcast %272 : vector<64x1xf32> to vector<64x16xf32>
    %274 = arith.mulf %269, %273 : vector<64x16xf32>
    %275 = arith.truncf %274 : vector<64x16xf32> to vector<64x16xbf16>
    %276 = arith.truncf %258 : vector<16x32xf32> to vector<16x32xbf16>
    %cst_89 = arith.constant dense<0.000000e+00> : vector<64x32xf32>
    %277 = tpu.matmul %275, %276, %cst_89 {dimension_numbers = #tpu.dot_dimension_numbers<[1], [0], [0], [1], [0, 0, 1, 1], [], []>} : vector<64x16xbf16>, vector<16x32xbf16>, vector<64x32xf32> -> vector<64x32xf32>
    %278 = arith.mulf %277, %2 : vector<64x32xf32>
    %279 = vector.shape_cast %278 : vector<64x32xf32> to vector<4x16x32xf32>
    %cst_90 = arith.constant dense<0.000000e+00> : vector<16x32xf32>
    %280 = vector.multi_reduction <add>, %279, %cst_90 [0] : vector<4x16x32xf32> to vector<16x32xf32>
    %281 = vector.extract_strided_slice %253 {offsets = [16, 0], sizes = [16, 32], strides = [1, 1]} : vector<32x32xf32> to vector<16x32xf32>
    %282 = vector.extract_strided_slice %254 {offsets = [16, 0], sizes = [16, 32], strides = [1, 1]} : vector<32x32xf32> to vector<16x32xf32>
    %283 = vector.extract_strided_slice %255 {offsets = [16, 0], sizes = [16, 32], strides = [1, 1]} : vector<32x32xf32> to vector<16x32xf32>
    %284 = tpu.concatenate %281, %281, %281, %281 in 0 : vector<16x32xf32>, vector<16x32xf32>, vector<16x32xf32>, vector<16x32xf32> -> vector<64x32xf32>
    %285 = arith.mulf %284, %2 : vector<64x32xf32>
    %286 = tpu.transpose %282, [1, 0] : vector<16x32xf32> -> vector<32x16xf32>
    %287 = arith.truncf %285 : vector<64x32xf32> to vector<64x32xbf16>
    %288 = arith.truncf %286 : vector<32x16xf32> to vector<32x16xbf16>
    %cst_91 = arith.constant dense<0.000000e+00> : vector<64x16xf32>
    %289 = tpu.matmul %287, %288, %cst_91 {dimension_numbers = #tpu.dot_dimension_numbers<[1], [0], [0], [1], [0, 0, 1, 1], [], []>} : vector<64x32xbf16>, vector<32x16xbf16>, vector<64x16xf32> -> vector<64x16xf32>
    %cst_92 = arith.constant dense<0xFF800000> : vector<64xf32>
    %290 = vector.multi_reduction <maximumf>, %289, %cst_92 [1] : vector<64x16xf32> to vector<64xf32>
    %291 = vector.shape_cast %290 : vector<64xf32> to vector<64x1xf32>
    %292 = vector.broadcast %291 : vector<64x1xf32> to vector<64x16xf32>
    %293 = arith.subf %289, %292 : vector<64x16xf32>
    %294 = math.exp %293 : vector<64x16xf32>
    %cst_93 = arith.constant dense<0.000000e+00> : vector<64xf32>
    %295 = vector.multi_reduction <add>, %294, %cst_93 [1] : vector<64x16xf32> to vector<64xf32>
    %296 = vector.shape_cast %295 : vector<64xf32> to vector<64x1xf32>
    %297 = tpu.reciprocal %296 {approx = true} : vector<64x1xf32> -> vector<64x1xf32>
    %298 = vector.broadcast %297 : vector<64x1xf32> to vector<64x16xf32>
    %299 = arith.mulf %294, %298 : vector<64x16xf32>
    %300 = arith.truncf %299 : vector<64x16xf32> to vector<64x16xbf16>
    %301 = arith.truncf %283 : vector<16x32xf32> to vector<16x32xbf16>
    %cst_94 = arith.constant dense<0.000000e+00> : vector<64x32xf32>
    %302 = tpu.matmul %300, %301, %cst_94 {dimension_numbers = #tpu.dot_dimension_numbers<[1], [0], [0], [1], [0, 0, 1, 1], [], []>} : vector<64x16xbf16>, vector<16x32xbf16>, vector<64x32xf32> -> vector<64x32xf32>
    %303 = arith.mulf %302, %2 : vector<64x32xf32>
    %304 = vector.shape_cast %303 : vector<64x32xf32> to vector<4x16x32xf32>
    %cst_95 = arith.constant dense<0.000000e+00> : vector<16x32xf32>
    %305 = vector.multi_reduction <add>, %304, %cst_95 [0] : vector<4x16x32xf32> to vector<16x32xf32>
    %306 = tpu.concatenate %280, %305 in 0 : vector<16x32xf32>, vector<16x32xf32> -> vector<32x32xf32>
    %c1_96 = arith.constant 1 : index
    %c0_97 = arith.constant 0 : index
    %c0_98 = arith.constant 0 : index
    %307 = vector.load %arg6[%c1_96, %c0_97, %c0_98] : memref<2x32x32xbf16, #tpu.memory_space<vmem>>, vector<1x32x32xbf16>
    %308 = vector.shape_cast %307 : vector<1x32x32xbf16> to vector<32x32xbf16>
    %309 = arith.truncf %306 : vector<32x32xf32> to vector<32x32xbf16>
    %cst_99 = arith.constant dense<0.000000e+00> : vector<32x32xf32>
    %310 = tpu.matmul %309, %308, %cst_99 {dimension_numbers = #tpu.dot_dimension_numbers<[1], [0], [0], [1], [0, 0, 1, 1], [], []>} : vector<32x32xbf16>, vector<32x32xbf16>, vector<32x32xf32> -> vector<32x32xf32>
    %311 = vector.extract_strided_slice %242 {offsets = [0, 0], sizes = [1, 32], strides = [1, 1]} : vector<6x32xf32> to vector<1x32xf32>
    %312 = vector.broadcast %311 : vector<1x32xf32> to vector<32x32xf32>
    %313 = arith.addf %310, %312 : vector<32x32xf32>
    %314 = arith.addf %240, %313 : vector<32x32xf32>
    %315 = vector.extract_strided_slice %242 {offsets = [1, 0], sizes = [1, 32], strides = [1, 1]} : vector<6x32xf32> to vector<1x32xf32>
    %316 = vector.extract_strided_slice %242 {offsets = [2, 0], sizes = [1, 32], strides = [1, 1]} : vector<6x32xf32> to vector<1x32xf32>
    %cst_100 = arith.constant dense<0.000000e+00> : vector<32xf32>
    %317 = vector.multi_reduction <add>, %314, %cst_100 [1] : vector<32x32xf32> to vector<32xf32>
    %318 = vector.shape_cast %317 : vector<32xf32> to vector<32x1xf32>
    %cst_101 = arith.constant 3.200000e+01 : f32
    %319 = vector.broadcast %cst_101 : f32 to vector<32x1xf32>
    %320 = arith.divf %318, %319 : vector<32x1xf32>
    %321 = vector.broadcast %320 : vector<32x1xf32> to vector<32x32xf32>
    %322 = arith.subf %314, %321 : vector<32x32xf32>
    %323 = arith.mulf %322, %322 : vector<32x32xf32>
    %cst_102 = arith.constant dense<0.000000e+00> : vector<32xf32>
    %324 = vector.multi_reduction <add>, %323, %cst_102 [1] : vector<32x32xf32> to vector<32xf32>
    %325 = vector.shape_cast %324 : vector<32xf32> to vector<32x1xf32>
    %cst_103 = arith.constant 3.200000e+01 : f32
    %326 = vector.broadcast %cst_103 : f32 to vector<32x1xf32>
    %327 = arith.divf %325, %326 : vector<32x1xf32>
    %328 = vector.broadcast %320 : vector<32x1xf32> to vector<32x32xf32>
    %329 = arith.subf %314, %328 : vector<32x32xf32>
    %cst_104 = arith.constant 9.99999974E-6 : f32
    %330 = vector.broadcast %cst_104 : f32 to vector<32x1xf32>
    %331 = arith.addf %327, %330 : vector<32x1xf32>
    %332 = math.rsqrt %331 : vector<32x1xf32>
    %333 = vector.broadcast %332 : vector<32x1xf32> to vector<32x32xf32>
    %334 = arith.mulf %329, %333 : vector<32x32xf32>
    %335 = vector.broadcast %315 : vector<1x32xf32> to vector<32x32xf32>
    %336 = arith.mulf %334, %335 : vector<32x32xf32>
    %337 = vector.broadcast %316 : vector<1x32xf32> to vector<32x32xf32>
    %338 = arith.addf %336, %337 : vector<32x32xf32>
    %c1_105 = arith.constant 1 : index
    %c0_106 = arith.constant 0 : index
    %c0_107 = arith.constant 0 : index
    %339 = vector.load %arg7[%c1_105, %c0_106, %c0_107] : memref<2x32x64xbf16, #tpu.memory_space<vmem>>, vector<1x32x64xbf16>
    %340 = vector.shape_cast %339 : vector<1x32x64xbf16> to vector<32x64xbf16>
    %341 = arith.truncf %338 : vector<32x32xf32> to vector<32x32xbf16>
    %cst_108 = arith.constant dense<0.000000e+00> : vector<32x64xf32>
    %342 = tpu.matmul %341, %340, %cst_108 {dimension_numbers = #tpu.dot_dimension_numbers<[1], [0], [0], [1], [0, 0, 1, 1], [], []>} : vector<32x32xbf16>, vector<32x64xbf16>, vector<32x64xf32> -> vector<32x64xf32>
    %c1_109 = arith.constant 1 : index
    %c0_110 = arith.constant 0 : index
    %c0_111 = arith.constant 0 : index
    %343 = vector.load %arg8[%c1_109, %c0_110, %c0_111] : memref<2x1x64xf32, #tpu.memory_space<vmem>>, vector<1x1x64xf32>
    %344 = vector.shape_cast %343 : vector<1x1x64xf32> to vector<1x64xf32>
    %345 = vector.broadcast %344 : vector<1x64xf32> to vector<32x64xf32>
    %346 = arith.addf %342, %345 : vector<32x64xf32>
    %cst_112 = arith.constant 0.000000e+00 : f32
    %347 = vector.broadcast %cst_112 : f32 to vector<32x64xf32>
    %348 = arith.maximumf %346, %347 : vector<32x64xf32>
    %c1_113 = arith.constant 1 : index
    %c0_114 = arith.constant 0 : index
    %c0_115 = arith.constant 0 : index
    %349 = vector.load %arg9[%c1_113, %c0_114, %c0_115] : memref<2x64x32xbf16, #tpu.memory_space<vmem>>, vector<1x64x32xbf16>
    %350 = vector.shape_cast %349 : vector<1x64x32xbf16> to vector<64x32xbf16>
    %351 = arith.truncf %348 : vector<32x64xf32> to vector<32x64xbf16>
    %cst_116 = arith.constant dense<0.000000e+00> : vector<32x32xf32>
    %352 = tpu.matmul %351, %350, %cst_116 {dimension_numbers = #tpu.dot_dimension_numbers<[1], [0], [0], [1], [0, 0, 1, 1], [], []>} : vector<32x64xbf16>, vector<64x32xbf16>, vector<32x32xf32> -> vector<32x32xf32>
    %353 = vector.extract_strided_slice %242 {offsets = [3, 0], sizes = [1, 32], strides = [1, 1]} : vector<6x32xf32> to vector<1x32xf32>
    %354 = vector.broadcast %353 : vector<1x32xf32> to vector<32x32xf32>
    %355 = arith.addf %352, %354 : vector<32x32xf32>
    %356 = arith.addf %338, %355 : vector<32x32xf32>
    %357 = vector.extract_strided_slice %242 {offsets = [4, 0], sizes = [1, 32], strides = [1, 1]} : vector<6x32xf32> to vector<1x32xf32>
    %358 = vector.extract_strided_slice %242 {offsets = [5, 0], sizes = [1, 32], strides = [1, 1]} : vector<6x32xf32> to vector<1x32xf32>
    %cst_117 = arith.constant dense<0.000000e+00> : vector<32xf32>
    %359 = vector.multi_reduction <add>, %356, %cst_117 [1] : vector<32x32xf32> to vector<32xf32>
    %360 = vector.shape_cast %359 : vector<32xf32> to vector<32x1xf32>
    %cst_118 = arith.constant 3.200000e+01 : f32
    %361 = vector.broadcast %cst_118 : f32 to vector<32x1xf32>
    %362 = arith.divf %360, %361 : vector<32x1xf32>
    %363 = vector.broadcast %362 : vector<32x1xf32> to vector<32x32xf32>
    %364 = arith.subf %356, %363 : vector<32x32xf32>
    %365 = arith.mulf %364, %364 : vector<32x32xf32>
    %cst_119 = arith.constant dense<0.000000e+00> : vector<32xf32>
    %366 = vector.multi_reduction <add>, %365, %cst_119 [1] : vector<32x32xf32> to vector<32xf32>
    %367 = vector.shape_cast %366 : vector<32xf32> to vector<32x1xf32>
    %cst_120 = arith.constant 3.200000e+01 : f32
    %368 = vector.broadcast %cst_120 : f32 to vector<32x1xf32>
    %369 = arith.divf %367, %368 : vector<32x1xf32>
    %370 = vector.broadcast %362 : vector<32x1xf32> to vector<32x32xf32>
    %371 = arith.subf %356, %370 : vector<32x32xf32>
    %cst_121 = arith.constant 9.99999974E-6 : f32
    %372 = vector.broadcast %cst_121 : f32 to vector<32x1xf32>
    %373 = arith.addf %369, %372 : vector<32x1xf32>
    %374 = math.rsqrt %373 : vector<32x1xf32>
    %375 = vector.broadcast %374 : vector<32x1xf32> to vector<32x32xf32>
    %376 = arith.mulf %371, %375 : vector<32x32xf32>
    %377 = vector.broadcast %357 : vector<1x32xf32> to vector<32x32xf32>
    %378 = arith.mulf %376, %377 : vector<32x32xf32>
    %379 = vector.broadcast %358 : vector<1x32xf32> to vector<32x32xf32>
    %380 = arith.addf %378, %379 : vector<32x32xf32>
    %381 = vector.shape_cast %380 : vector<32x32xf32> to vector<2x16x32xf32>
    %c0_122 = arith.constant 0 : index
    %c0_123 = arith.constant 0 : index
    %c0_124 = arith.constant 0 : index
    %382 = vector.load %arg11[%c0_122, %c0_123, %c0_124] : memref<2x16x32xf32, #tpu.memory_space<vmem>>, vector<2x16x32xf32>
    tpu.vector_store %arg11[%c0_122, %c0_123, %c0_124], %381 {strides = array<i32>} : memref<2x16x32xf32, #tpu.memory_space<vmem>>, vector<2x16x32xf32>,
    return
  }
}

</mosaic_0001>

<llo_original>
// kernel: tpu_custom_call.1
$region0: #{tpu_custom_call.1}
  #allocation0 [shape = 'u32[]', space=smem, size = 0x4, offset = 0x4, fixed_abs, tag = 'smem constant byte address 0x4 - core index']
  #allocation1 [shape = 'u32[144,128]{1,0:T(1,128)}', space=vmem, size = 0x12000, scoped, tag = 'internal scratch']
  %s0 = inlined_call_operand.vmem [shape: f32[2,16,32], index: 0, kind: input, shape index: {}]
  %s1 = inlined_call_operand.vmem [shape: bf16[256,32], index: 1, kind: input, shape index: {}]
  %s2 = inlined_call_operand.vmem [shape: f32[3,32], index: 2, kind: input, shape index: {}]
  %s3 = inlined_call_operand.vmem [shape: f32[64,32], index: 3, kind: input, shape index: {}]
  %s4 = inlined_call_operand.vmem [shape: bf16[2,32,96], index: 4, kind: input, shape index: {}]
  %s5 = inlined_call_operand.vmem [shape: f32[2,1,96], index: 5, kind: input, shape index: {}]
  %s6 = inlined_call_operand.vmem [shape: bf16[2,32,32], index: 6, kind: input, shape index: {}]
  %s7 = inlined_call_operand.vmem [shape: bf16[2,32,64], index: 7, kind: input, shape index: {}]
  %s8 = inlined_call_operand.vmem [shape: f32[2,1,64], index: 8, kind: input, shape index: {}]
  %s9 = inlined_call_operand.vmem [shape: bf16[2,64,32], index: 9, kind: input, shape index: {}]
  %s10 = inlined_call_operand.vmem [shape: f32[2,6,32], index: 10, kind: input, shape index: {}]
  %s11 = inlined_call_operand.hbm [shape: f32[2,16,32], index: 11, kind: output, shape index: {}]
  %s12 = sld [smem:[#allocation0]]
  $region54: #{tpu_custom_call.1} parent=0
    _
  %s14 = ssub.s32 1, %s12
  %s15 = scalar_select 0, %s14, %s12
  $region1: #{tpu_custom_call.1} parent=0
    #allocation2 [shape = 'u8[16384]{0}', space=vmem, size = 0x4000, scoped, tag = 'output window, operand 0, single buffered']
    #allocation3 [shape = 's32[1]{0}', space=sflag, size = 0x4, scoped, tag = 'scoped memory for tpu_custom_call.1']
    %16 = vsyncpa [#allocation3], 0
    // Predicated region
    $region2: #{tpu_custom_call.1} parent=1 // pred_check
      _
    $region3: #{tpu_custom_call.1} parent=1 // pred_check_branch
      %18 = sbr.rel (0) target = $region5
    $region4: #{tpu_custom_call.1} parent=1 // pred_region
      _
    $region5: #{tpu_custom_call.1} parent=1 // pred_fallthru
      _
    // Predicated region
    $region6: #{tpu_custom_call.1} parent=1 // pred_check
      _
    $region7: #{tpu_custom_call.1} parent=1 // pred_check_branch
      %20 = sbr.rel (0) target = $region9
    $region8: #{tpu_custom_call.1} parent=1 // pred_region
      _
    $region9: #{tpu_custom_call.1} parent=1 // pred_fallthru
      _
    // Predicated region
    $region10: #{tpu_custom_call.1} parent=1 // pred_check
      _
    $region11: #{tpu_custom_call.1} parent=1 // pred_check_branch
      %22 = sbr.rel (0) target = $region13
    $region12: #{tpu_custom_call.1} parent=1 // pred_region
      _
    $region13: #{tpu_custom_call.1} parent=1 // pred_fallthru
      _
    // Predicated region
    $region14: #{tpu_custom_call.1} parent=1 // pred_check
      _
    $region15: #{tpu_custom_call.1} parent=1 // pred_check_branch
      %24 = sbr.rel (0) target = $region17
    $region16: #{tpu_custom_call.1} parent=1 // pred_region
      _
    $region17: #{tpu_custom_call.1} parent=1 // pred_fallthru
      _
    // Predicated region
    $region18: #{tpu_custom_call.1} parent=1 // pred_check
      _
    $region19: #{tpu_custom_call.1} parent=1 // pred_check_branch
      %26 = sbr.rel (0) target = $region21
    $region20: #{tpu_custom_call.1} parent=1 // pred_region
      _
    $region21: #{tpu_custom_call.1} parent=1 // pred_fallthru
      _
    // Predicated region
    $region22: #{tpu_custom_call.1} parent=1 // pred_check
      _
    $region23: #{tpu_custom_call.1} parent=1 // pred_check_branch
      %28 = sbr.rel (0) target = $region25
    $region24: #{tpu_custom_call.1} parent=1 // pred_region
      _
    $region25: #{tpu_custom_call.1} parent=1 // pred_fallthru
      _
    // Predicated region
    $region26: #{tpu_custom_call.1} parent=1 // pred_check
      _
    $region27: #{tpu_custom_call.1} parent=1 // pred_check_branch
      %30 = sbr.rel (0) target = $region29
    $region28: #{tpu_custom_call.1} parent=1 // pred_region
      _
    $region29: #{tpu_custom_call.1} parent=1 // pred_fallthru
      _
    // Predicated region
    $region30: #{tpu_custom_call.1} parent=1 // pred_check
      _
    $region31: #{tpu_custom_call.1} parent=1 // pred_check_branch
      %32 = sbr.rel (0) target = $region33
    $region32: #{tpu_custom_call.1} parent=1 // pred_region
      _
    $region33: #{tpu_custom_call.1} parent=1 // pred_fallthru
      _
    // Predicated region
    $region34: #{tpu_custom_call.1} parent=1 // pred_check
      _
    $region35: #{tpu_custom_call.1} parent=1 // pred_check_branch
      %34 = sbr.rel (0) target = $region37
    $region36: #{tpu_custom_call.1} parent=1 // pred_region
      _
    $region37: #{tpu_custom_call.1} parent=1 // pred_fallthru
      _
    // Predicated region
    $region38: #{tpu_custom_call.1} parent=1 // pred_check
      _
    $region39: #{tpu_custom_call.1} parent=1 // pred_check_branch
      %36 = sbr.rel (0) target = $region41
    $region40: #{tpu_custom_call.1} parent=1 // pred_region
      _
    $region41: #{tpu_custom_call.1} parent=1 // pred_fallthru
      _
    // Predicated region
    $region42: #{tpu_custom_call.1} parent=1 // pred_check
      _
    $region43: #{tpu_custom_call.1} parent=1 // pred_check_branch
      %38 = sbr.rel (0) target = $region45
    $region44: #{tpu_custom_call.1} parent=1 // pred_region
      _
    $region45: #{tpu_custom_call.1} parent=1 // pred_fallthru
      _
    %v40 = vld [vmem:[%s0] sm:$0xff]
    %v41 = vld [vmem:[%s0 + $0x8] sm:$0xff]
    %v42 = vld [vmem:[%s0 + $0x10] sm:$0xff]
    %v43 = vld [vmem:[%s0 + $0x18] sm:$0xff]
    %v44 = vld [vmem:[%s2] sm:$0x7]
    %v45 = vld [vmem:[%s3] sm:$0xff]
    %v46 = vld [vmem:[%s3 + $0x8] sm:$0xff]
    %v47 = vld [vmem:[%s3 + $0x10] sm:$0xff]
    %v48 = vld [vmem:[%s3 + $0x18] sm:$0xff]
    %v49 = vld [vmem:[%s3 + $0x20] sm:$0xff]
    %v50 = vld [vmem:[%s3 + $0x28] sm:$0xff]
    %v51 = vld [vmem:[%s3 + $0x30] sm:$0xff]
    %v52 = vld [vmem:[%s3 + $0x38] sm:$0xff]
    %vm55 = vcmask 1043456
    %v56 = vrot.slane %v40, 4
    %v57 = vrot.slane %v41, 4
    %v58 = vsel %vm55, %v56, %v57
    %v62 = vsel %vm55, 0.0, %v56
    %v63 = vsel %vm55, %v57, 0.0
    %vm66 = vcmask 1046528
    %v67 = vrot.slane %v62, 1
    %v68 = vrot.slane %v58, 1
    %v69 = vsel %vm66, %v67, %v68
    %v70 = vrot.slane %v63, 1
    %v71 = vsel %vm66, %v68, %v70
    %72 = vrot.lane.b32.xlu0 %v69, 32
    %v73 = vpop.permute.xlu0 %72
    %74 = vrot.lane.b32.xlu0 %v71, 32
    %v75 = vpop.permute.xlu0 %74
    %vm78 = vcmask 1045504
    %v79 = vrot.slane %v62, 2
    %v80 = vrot.slane %v58, 2
    %v81 = vsel %vm78, %v79, %v80
    %v82 = vrot.slane %v63, 2
    %v83 = vsel %vm78, %v80, %v82
    %84 = vrot.lane.b32.xlu0 %v81, 64
    %v85 = vpop.permute.xlu0 %84
    %86 = vrot.lane.b32.xlu0 %v83, 64
    %v87 = vpop.permute.xlu0 %86
    %vm90 = vcmask 1044480
    %v91 = vrot.slane %v62, 3
    %v92 = vrot.slane %v58, 3
    %v93 = vsel %vm90, %v91, %v92
    %v94 = vrot.slane %v63, 3
    %v95 = vsel %vm90, %v92, %v94
    %96 = vrot.lane.b32.xlu0 %v93, 96
    %v97 = vpop.permute.xlu0 %96
    %98 = vrot.lane.b32.xlu0 %v95, 96
    %v99 = vpop.permute.xlu0 %98
    %v102 = vrot.slane %v62, 4
    %v103 = vrot.slane %v58, 4
    %v104 = vsel %vm55, %v102, %v103
    %v105 = vrot.slane %v63, 4
    %v106 = vsel %vm55, %v103, %v105
    %vm109 = vcmask 1042432
    %v110 = vrot.slane %v62, 5
    %v111 = vrot.slane %v58, 5
    %v112 = vsel %vm109, %v110, %v111
    %v113 = vrot.slane %v63, 5
    %v114 = vsel %vm109, %v111, %v113
    %115 = vrot.lane.b32.xlu0 %v112, 32
    %v116 = vpop.permute.xlu0 %115
    %117 = vrot.lane.b32.xlu0 %v114, 32
    %v118 = vpop.permute.xlu0 %117
    %vm121 = vcmask 1041408
    %v122 = vrot.slane %v62, 6
    %v123 = vrot.slane %v58, 6
    %v124 = vsel %vm121, %v122, %v123
    %v125 = vrot.slane %v63, 6
    %v126 = vsel %vm121, %v123, %v125
    %127 = vrot.lane.b32.xlu0 %v124, 64
    %v128 = vpop.permute.xlu0 %127
    %129 = vrot.lane.b32.xlu0 %v126, 64
    %v130 = vpop.permute.xlu0 %129
    %vm133 = vcmask 1040384
    %v134 = vrot.slane %v62, 7
    %v135 = vrot.slane %v58, 7
    %v136 = vsel %vm133, %v134, %v135
    %v137 = vrot.slane %v63, 7
    %v138 = vsel %vm133, %v135, %v137
    %139 = vrot.lane.b32.xlu0 %v136, 96
    %v140 = vpop.permute.xlu0 %139
    %141 = vrot.lane.b32.xlu0 %v138, 96
    %v142 = vpop.permute.xlu0 %141
    %vm145 = vcmask 261120
    %v146 = vsel %vm145, %v62, %v73
    %v147 = vsel %vm145, %v58, %v75
    %vm148 = vcmask 523264
    %v149 = vsel %vm148, %v146, %v85
    %v150 = vsel %vm148, %v147, %v87
    %vm151 = vcmask 785408
    %v152 = vsel %vm151, %v149, %v97
    %v153 = vsel %vm151, %v150, %v99
    %v154 = vsel %vm145, %v104, %v116
    %v155 = vsel %vm145, %v106, %v118
    %v156 = vsel %vm148, %v154, %v128
    %v157 = vsel %vm148, %v155, %v130
    %v158 = vsel %vm151, %v156, %v140
    %v159 = vsel %vm151, %v157, %v142
    %v162 = vrot.slane %v42, 4
    %v163 = vrot.slane %v43, 4
    %v164 = vsel %vm55, %v162, %v163
    %v168 = vsel %vm55, 0.0, %v162
    %v169 = vsel %vm55, %v163, 0.0
    %v172 = vrot.slane %v168, 1
    %v173 = vrot.slane %v164, 1
    %v174 = vsel %vm66, %v172, %v173
    %v175 = vrot.slane %v169, 1
    %v176 = vsel %vm66, %v173, %v175
    %177 = vrot.lane.b32.xlu0 %v174, 32
    %v178 = vpop.permute.xlu0 %177
    %179 = vrot.lane.b32.xlu0 %v176, 32
    %v180 = vpop.permute.xlu0 %179
    %v183 = vrot.slane %v168, 2
    %v184 = vrot.slane %v164, 2
    %v185 = vsel %vm78, %v183, %v184
    %v186 = vrot.slane %v169, 2
    %v187 = vsel %vm78, %v184, %v186
    %188 = vrot.lane.b32.xlu0 %v185, 64
    %v189 = vpop.permute.xlu0 %188
    %190 = vrot.lane.b32.xlu0 %v187, 64
    %v191 = vpop.permute.xlu0 %190
    %v194 = vrot.slane %v168, 3
    %v195 = vrot.slane %v164, 3
    %v196 = vsel %vm90, %v194, %v195
    %v197 = vrot.slane %v169, 3
    %v198 = vsel %vm90, %v195, %v197
    %199 = vrot.lane.b32.xlu0 %v196, 96
    %v200 = vpop.permute.xlu0 %199
    %201 = vrot.lane.b32.xlu0 %v198, 96
    %v202 = vpop.permute.xlu0 %201
    %v205 = vrot.slane %v168, 4
    %v206 = vrot.slane %v164, 4
    %v207 = vsel %vm55, %v205, %v206
    %v208 = vrot.slane %v169, 4
    %v209 = vsel %vm55, %v206, %v208
    %v212 = vrot.slane %v168, 5
    %v213 = vrot.slane %v164, 5
    %v214 = vsel %vm109, %v212, %v213
    %v215 = vrot.slane %v169, 5
    %v216 = vsel %vm109, %v213, %v215
    %217 = vrot.lane.b32.xlu0 %v214, 32
    %v218 = vpop.permute.xlu0 %217
    %219 = vrot.lane.b32.xlu0 %v216, 32
    %v220 = vpop.permute.xlu0 %219
    %v223 = vrot.slane %v168, 6
    %v224 = vrot.slane %v164, 6
    %v225 = vsel %vm121, %v223, %v224
    %v226 = vrot.slane %v169, 6
    %v227 = vsel %vm121, %v224, %v226
    %228 = vrot.lane.b32.xlu0 %v225, 64
    %v229 = vpop.permute.xlu0 %228
    %230 = vrot.lane.b32.xlu0 %v227, 64
    %v231 = vpop.permute.xlu0 %230
    %v234 = vrot.slane %v168, 7
    %v235 = vrot.slane %v164, 7
    %v236 = vsel %vm133, %v234, %v235
    %v237 = vrot.slane %v169, 7
    %v238 = vsel %vm133, %v235, %v237
    %239 = vrot.lane.b32.xlu0 %v236, 96
    %v240 = vpop.permute.xlu0 %239
    %241 = vrot.lane.b32.xlu0 %v238, 96
    %v242 = vpop.permute.xlu0 %241
    %v245 = vsel %vm145, %v168, %v178
    %v246 = vsel %vm145, %v164, %v180
    %v247 = vsel %vm148, %v245, %v189
    %v248 = vsel %vm148, %v246, %v191
    %v249 = vsel %vm151, %v247, %v200
    %v250 = vsel %vm151, %v248, %v202
    %v251 = vsel %vm145, %v207, %v218
    %v252 = vsel %vm145, %v209, %v220
    %v253 = vsel %vm148, %v251, %v229
    %v254 = vsel %vm148, %v252, %v231
    %v255 = vsel %vm151, %v253, %v240
    %v256 = vsel %vm151, %v254, %v242
    %v257 = vld [vmem:[%s1] sm:$0xf]
    %v258 = vld [vmem:[%s1 + $0x4] sm:$0xf]
    %v259 = vld [vmem:[%s1 + $0x8] sm:$0xf]
    %v260 = vld [vmem:[%s1 + $0xc] sm:$0xf]
    %v261 = vld [vmem:[%s1 + $0x10] sm:$0xf]
    %v262 = vld [vmem:[%s1 + $0x14] sm:$0xf]
    %v263 = vld [vmem:[%s1 + $0x18] sm:$0xf]
    %v264 = vld [vmem:[%s1 + $0x1c] sm:$0xf]
    %v265 = vld [vmem:[%s1 + $0x20] sm:$0xf]
    %v266 = vld [vmem:[%s1 + $0x24] sm:$0xf]
    %v267 = vld [vmem:[%s1 + $0x28] sm:$0xf]
    %v268 = vld [vmem:[%s1 + $0x2c] sm:$0xf]
    %v269 = vld [vmem:[%s1 + $0x30] sm:$0xf]
    %v270 = vld [vmem:[%s1 + $0x34] sm:$0xf]
    %v271 = vld [vmem:[%s1 + $0x38] sm:$0xf]
    %v272 = vld [vmem:[%s1 + $0x3c] sm:$0xf]
    %v273 = vld [vmem:[%s1 + $0x40] sm:$0xf]
    %v274 = vld [vmem:[%s1 + $0x44] sm:$0xf]
    %v275 = vld [vmem:[%s1 + $0x48] sm:$0xf]
    %v276 = vld [vmem:[%s1 + $0x4c] sm:$0xf]
    %v277 = vld [vmem:[%s1 + $0x50] sm:$0xf]
    %v278 = vld [vmem:[%s1 + $0x54] sm:$0xf]
    %v279 = vld [vmem:[%s1 + $0x58] sm:$0xf]
    %v280 = vld [vmem:[%s1 + $0x5c] sm:$0xf]
    %v281 = vld [vmem:[%s1 + $0x60] sm:$0xf]
    %v282 = vld [vmem:[%s1 + $0x64] sm:$0xf]
    %v283 = vld [vmem:[%s1 + $0x68] sm:$0xf]
    %v284 = vld [vmem:[%s1 + $0x6c] sm:$0xf]
    %v285 = vld [vmem:[%s1 + $0x70] sm:$0xf]
    %v286 = vld [vmem:[%s1 + $0x74] sm:$0xf]
    %v287 = vld [vmem:[%s1 + $0x78] sm:$0xf]
    %v288 = vld [vmem:[%s1 + $0x7c] sm:$0xf]
    %v289 = vpack.c.bf16 %v153, %v152
    %v290 = vpack.c.bf16 %v159, %v158
    %v291 = vpack.c.bf16 %v250, %v249
    %v292 = vpack.c.bf16 %v256, %v255
    %v293 = vlaneseq
    %v294 = vshrl.u32 %v293, 7
    %v295 = vsub.s32 0, %v294
    %v296 = vrot.slane %v44, %v295
    %v329 = vunpack.c.l.b16 %v257
    %v330 = vunpack.c.l.b16 %v258
    %v331 = vunpack.c.l.b16 %v259
    %v332 = vunpack.c.l.b16 %v260
    %v333 = vunpack.c.l.b16 %v261
    %v334 = vunpack.c.l.b16 %v262
    %v335 = vunpack.c.l.b16 %v263
    %v336 = vunpack.c.l.b16 %v264
    %v337 = vunpack.c.l.b16 %v265
    %v338 = vunpack.c.l.b16 %v266
    %v339 = vunpack.c.l.b16 %v267
    %v340 = vunpack.c.l.b16 %v268
    %v341 = vunpack.c.l.b16 %v269
    %v342 = vunpack.c.l.b16 %v270
    %v343 = vunpack.c.l.b16 %v271
    %v344 = vunpack.c.l.b16 %v272
    %v345 = vunpack.c.l.b16 %v273
    %v346 = vunpack.c.l.b16 %v274
    %v347 = vunpack.c.l.b16 %v275
    %v348 = vunpack.c.l.b16 %v276
    %v349 = vunpack.c.l.b16 %v277
    %v350 = vunpack.c.l.b16 %v278
    %v351 = vunpack.c.l.b16 %v279
    %v352 = vunpack.c.l.b16 %v280
    %v353 = vunpack.c.l.b16 %v281
    %v354 = vunpack.c.l.b16 %v282
    %v355 = vunpack.c.l.b16 %v283
    %v356 = vunpack.c.l.b16 %v284
    %v357 = vunpack.c.l.b16 %v285
    %v358 = vunpack.c.l.b16 %v286
    %v359 = vunpack.c.l.b16 %v287
    %v360 = vunpack.c.l.b16 %v288
    %v361 = vpack.c.b16 %v330, %v329
    %v362 = vpack.c.b16 %v332, %v331
    %v363 = vpack.c.b16 %v334, %v333
    %v364 = vpack.c.b16 %v336, %v335
    %v365 = vpack.c.b16 %v338, %v337
    %v366 = vpack.c.b16 %v340, %v339
    %v367 = vpack.c.b16 %v342, %v341
    %v368 = vpack.c.b16 %v344, %v343
    %v369 = vpack.c.b16 %v346, %v345
    %v370 = vpack.c.b16 %v348, %v347
    %v371 = vpack.c.b16 %v350, %v349
    %v372 = vpack.c.b16 %v352, %v351
    %v373 = vpack.c.b16 %v354, %v353
    %v374 = vpack.c.b16 %v356, %v355
    %v375 = vpack.c.b16 %v358, %v357
    %v376 = vpack.c.b16 %v360, %v359
    %393 = vmatprep.subr.bf16.mxu0 0
    %394 = vmatpush1.bf16.msra.mxu0 %v361
    %395 = vmatprep.subr.bf16.mxu0 0
    %396 = vmatpush1.bf16.msra.mxu0 %v362
    %397 = vmatprep.subr.bf16.mxu0 0
    %398 = vmatpush1.bf16.msra.mxu0 %v363
    %399 = vmatprep.subr.bf16.mxu0 0
    %400 = vmatpush1.bf16.msra.mxu0 %v364
    %401 = vmatprep.subr.bf16.mxu0 0
    %402 = vmatpush1.bf16.msra.mxu0 %v365
    %403 = vmatprep.subr.bf16.mxu0 0
    %404 = vmatpush1.bf16.msra.mxu0 %v366
    %405 = vmatprep.subr.bf16.mxu0 0
    %406 = vmatpush1.bf16.msra.mxu0 %v367
    %407 = vmatprep.subr.bf16.mxu0 0
    %408 = vmatpush1.bf16.msra.mxu0 %v368
    %409 = vmatprep.subr.bf16.mxu0 0
    %410 = vmatpush1.bf16.msra.mxu0 %v369
    %411 = vmatprep.subr.bf16.mxu0 0
    %412 = vmatpush1.bf16.msra.mxu0 %v370
    %413 = vmatprep.subr.bf16.mxu0 0
    %414 = vmatpush1.bf16.msra.mxu0 %v371
    %415 = vmatprep.subr.bf16.mxu0 0
    %416 = vmatpush1.bf16.msra.mxu0 %v372
    %417 = vmatprep.subr.bf16.mxu0 0
    %418 = vmatpush1.bf16.msra.mxu0 %v373
    %419 = vmatprep.subr.bf16.mxu0 0
    %420 = vmatpush1.bf16.msra.mxu0 %v374
    %421 = vmatprep.subr.bf16.mxu0 0
    %422 = vmatpush1.bf16.msra.mxu0 %v375
    %423 = vmatprep.subr.bf16.mxu0 0
    %424 = vmatpush1.bf16.msra.mxu0 %v376
    %425 = vmatprep.mubr.bf16.mxu0 %v290
    %426 = vmatmul.mubr.bf16.gmra.mrb[0].mxu0 %v289
    %v427 = vpop.f32.mrb[0].mxu0
    %v428 = vadd.f32 %v296, %v427
    %v429 = vpop.f32.mrb[0].mxu0
    %v430 = vpop.f32.mrb[0].mxu0
    %v431 = vadd.f32 %v296, %v430
    %v432 = vpop.f32.mrb[0].mxu0
    %433 = vmatprep.mubr.bf16.mxu0 %v292
    %434 = vmatmul.mubr.bf16.gmra.mrb[0].mxu0 %v291
    %v435 = vpop.f32.mrb[0].mxu0
    %v436 = vadd.f32 %v296, %v435
    %v437 = vpop.f32.mrb[0].mxu0
    %v438 = vpop.f32.mrb[0].mxu0
    %v439 = vadd.f32 %v296, %v438
    %v440 = vpop.f32.mrb[0].mxu0
    %441 = vdwg.mxu0
    %v442 = vmul.f32 %v428, 0.70710677
    %v443 = vmul.f32 %v431, 0.70710677
    %v444 = vmul.f32 %v436, 0.70710677
    %v445 = vmul.f32 %v439, 0.70710677
    %v446 = vand.u32 2147483647, %v442
    %v447 = vand.u32 2147483647, %v443
    %v448 = vand.u32 2147483647, %v444
    %v449 = vand.u32 2147483647, %v445
    %v450 = vmul.f32 %v446, 0.3275911
    %v451 = vmul.f32 %v447, 0.3275911
    %v452 = vmul.f32 %v448, 0.3275911
    %v453 = vmul.f32 %v449, 0.3275911
    %v454 = vadd.f32 %v450, 1.0
    %v455 = vadd.f32 %v451, 1.0
    %v456 = vadd.f32 %v452, 1.0
    %v457 = vadd.f32 %v453, 1.0
    %v458 = vrcp.pop %v454
    %v459 = vmul.f32 1.0, %v458
    %v460 = vrcp.pop %v455
    %v461 = vmul.f32 1.0, %v460
    %v462 = vrcp.pop %v456
    %v463 = vmul.f32 1.0, %v462
    %v464 = vrcp.pop %v457
    %v465 = vmul.f32 1.0, %v464
    %v466 = vmul.f32 %v459, 1.0614054
    %v467 = vmul.f32 %v461, 1.0614054
    %v468 = vmul.f32 %v463, 1.0614054
    %v469 = vmul.f32 %v465, 1.0614054
    %v470 = vsub.f32 %v466, 1.4531521
    %v471 = vsub.f32 %v467, 1.4531521
    %v472 = vsub.f32 %v468, 1.4531521
    %v473 = vsub.f32 %v469, 1.4531521
    %v474 = vmul.f32 %v470, %v459
    %v475 = vmul.f32 %v471, %v461
    %v476 = vmul.f32 %v472, %v463
    %v477 = vmul.f32 %v473, %v465
    %v478 = vadd.f32 %v474, 1.4214138
    %v479 = vadd.f32 %v475, 1.4214138
    %v480 = vadd.f32 %v476, 1.4214138
    %v481 = vadd.f32 %v477, 1.4214138
    %v482 = vmul.f32 %v478, %v459
    %v483 = vmul.f32 %v479, %v461
    %v484 = vmul.f32 %v480, %v463
    %v485 = vmul.f32 %v481, %v465
    %v486 = vsub.f32 %v482, 0.28449672
    %v487 = vsub.f32 %v483, 0.28449672
    %v488 = vsub.f32 %v484, 0.28449672
    %v489 = vsub.f32 %v485, 0.28449672
    %v490 = vmul.f32 %v486, %v459
    %v491 = vmul.f32 %v487, %v461
    %v492 = vmul.f32 %v488, %v463
    %v493 = vmul.f32 %v489, %v465
    %v494 = vadd.f32 %v490, 0.2548296
    %v495 = vadd.f32 %v491, 0.2548296
    %v496 = vadd.f32 %v492, 0.2548296
    %v497 = vadd.f32 %v493, 0.2548296
    %v498 = vmul.f32 %v494, %v459
    %v499 = vmul.f32 %v495, %v461
    %v500 = vmul.f32 %v496, %v463
    %v501 = vmul.f32 %v497, %v465
    %v502 = vsub.f32 0.0, %v446
    %v503 = vsub.f32 0.0, %v447
    %v504 = vsub.f32 0.0, %v448
    %v505 = vsub.f32 0.0, %v449
    %v506 = vmul.f32 %v502, %v446
    %v507 = vmul.f32 %v503, %v447
    %v508 = vmul.f32 %v504, %v448
    %v509 = vmul.f32 %v505, %v449
    %v510 = vmul.f32 %v506, 1.442695
    %v511 = vpow.pop %v510
    %v512 = vmul.f32 %v507, 1.442695
    %v513 = vpow.pop %v512
    %v514 = vmul.f32 %v508, 1.442695
    %v515 = vpow.pop %v514
    %v516 = vmul.f32 %v509, 1.442695
    %v517 = vpow.pop %v516
    %v518 = vmul.f32 %v498, %v511
    %v519 = vmul.f32 %v499, %v513
    %v520 = vmul.f32 %v500, %v515
    %v521 = vmul.f32 %v501, %v517
    %v522 = vsub.f32 1.0, %v518
    %v523 = vsub.f32 1.0, %v519
    %v524 = vsub.f32 1.0, %v520
    %v525 = vsub.f32 1.0, %v521
    %vm526 = vcmp.ge.f32.partialorder %v442, 0.0
    %vm527 = vcmp.ge.f32.partialorder %v443, 0.0
    %vm528 = vcmp.ge.f32.partialorder %v444, 0.0
    %vm529 = vcmp.ge.f32.partialorder %v445, 0.0
    %v530 = vsub.f32 0.0, %v522
    %v531 = vsub.f32 0.0, %v523
    %v532 = vsub.f32 0.0, %v524
    %v533 = vsub.f32 0.0, %v525
    %v534 = vsel %vm526, %v522, %v530
    %v535 = vsel %vm527, %v523, %v531
    %v536 = vsel %vm528, %v524, %v532
    %v537 = vsel %vm529, %v525, %v533
    %v538 = vmul.f32 %v428, 0.5
    %v539 = vmul.f32 %v431, 0.5
    %v540 = vmul.f32 %v436, 0.5
    %v541 = vmul.f32 %v439, 0.5
    %v542 = vadd.f32 %v534, 1.0
    %v543 = vadd.f32 %v535, 1.0
    %v544 = vadd.f32 %v536, 1.0
    %v545 = vadd.f32 %v537, 1.0
    %v546 = vmul.f32 %v538, %v542
    %v547 = vmul.f32 %v539, %v543
    %v548 = vmul.f32 %v540, %v544
    %v549 = vmul.f32 %v541, %v545
    %v550 = vadd.f32 %v40, %v546
    %v551 = vadd.f32 %v41, %v547
    %v552 = vadd.f32 %v42, %v548
    %v553 = vadd.f32 %v43, %v549
    %v554 = vsel %vm145, %v550, 0.0
    %555 = vadd.xlane.f32.xlu0 %v554
    %v556 = vpop.xlane.xlu0 %555
    %v557 = vsel %vm145, %v551, 0.0
    %558 = vadd.xlane.f32.xlu0 %v557
    %v559 = vpop.xlane.xlu0 %558
    %v560 = vsel %vm145, %v552, 0.0
    %561 = vadd.xlane.f32.xlu0 %v560
    %v562 = vpop.xlane.xlu0 %561
    %v563 = vsel %vm145, %v553, 0.0
    %564 = vadd.xlane.f32.xlu0 %v563
    %v565 = vpop.xlane.xlu0 %564
    %v566 = vrcp.pop 32.0
    %v567 = vmul.f32 %v556, %v566
    %v568 = vmul.f32 %v559, %v566
    %v569 = vmul.f32 %v562, %v566
    %v570 = vmul.f32 %v565, %v566
    %v571 = vsub.f32 %v550, %v567
    %v572 = vsub.f32 %v551, %v568
    %v573 = vsub.f32 %v552, %v569
    %v574 = vsub.f32 %v553, %v570
    %v575 = vmul.f32 %v571, %v571
    %v576 = vmul.f32 %v572, %v572
    %v577 = vmul.f32 %v573, %v573
    %v578 = vmul.f32 %v574, %v574
    %v579 = vsel %vm145, %v575, 0.0
    %580 = vadd.xlane.f32.xlu0 %v579
    %v581 = vpop.xlane.xlu0 %580
    %v582 = vsel %vm145, %v576, 0.0
    %583 = vadd.xlane.f32.xlu0 %v582
    %v584 = vpop.xlane.xlu0 %583
    %v585 = vsel %vm145, %v577, 0.0
    %586 = vadd.xlane.f32.xlu0 %v585
    %v587 = vpop.xlane.xlu0 %586
    %v588 = vsel %vm145, %v578, 0.0
    %589 = vadd.xlane.f32.xlu0 %v588
    %v590 = vpop.xlane.xlu0 %589
    %v591 = vmul.f32 %v581, %v566
    %v592 = vmul.f32 %v584, %v566
    %v593 = vmul.f32 %v587, %v566
    %v594 = vmul.f32 %v590, %v566
    %v595 = vadd.f32 %v591, 1e-05
    %v596 = vadd.f32 %v592, 1e-05
    %v597 = vadd.f32 %v593, 1e-05
    %v598 = vadd.f32 %v594, 1e-05
    %v599 = vrsqrt.pop %v595
    %v600 = vrsqrt.pop %v596
    %v601 = vrsqrt.pop %v597
    %v602 = vrsqrt.pop %v598
    %v603 = vmul.f32 %v571, %v599
    %v604 = vmul.f32 %v572, %v600
    %v605 = vmul.f32 %v573, %v601
    %v606 = vmul.f32 %v574, %v602
    %v607 = vlaneseq
    %v608 = vshrl.u32 %v607, 7
    %v609 = vsub.s32 1, %v608
    %v610 = vrot.slane %v44, %v609
    %v611 = vmul.f32 %v603, %v610
    %v612 = vmul.f32 %v604, %v610
    %v613 = vmul.f32 %v605, %v610
    %v614 = vmul.f32 %v606, %v610
    %v615 = vlaneseq
    %v616 = vshrl.u32 %v615, 7
    %v617 = vsub.s32 2, %v616
    %v618 = vrot.slane %v44, %v617
    %v619 = vadd.f32 %v611, %v618
    %v620 = vadd.f32 %v612, %v618
    %v621 = vadd.f32 %v613, %v618
    %v622 = vadd.f32 %v614, %v618
    %v623 = vld [vmem:[%s10] sm:$0x3f]
    %v624 = vld [vmem:[%s4] sm:$0xf]
    %v625 = vld [vmem:[%s4 + $0x4] sm:$0xf]
    %v626 = vld [vmem:[%s4 + $0x8] sm:$0xf]
    %v627 = vld [vmem:[%s4 + $0xc] sm:$0xf]
    %v628 = vpack.c.bf16 %v620, %v619
    %v629 = vpack.c.bf16 %v622, %v621
    %v630 = vld [vmem:[%s5] sm:$0x1]
    %v632 = vlaneseq
    %v633 = vshrl.u32 %v632, 7
    %v634 = vsub.s32 0, %v633
    %v635 = vrot.slane %v630, %v634
    %v641 = vunpack.c.l.b16 %v624
    %v642 = vunpack.c.l.b16 %v625
    %v643 = vunpack.c.l.b16 %v626
    %v644 = vunpack.c.l.b16 %v627
    %v645 = vpack.c.b16 %v642, %v641
    %v646 = vpack.c.b16 %v644, %v643
    %v650 = vsel %vm145, %v628, 0
    %v653 = vsel %vm145, %v629, 0
    %655 = vmatprep.subr.bf16.mxu0 0
    %656 = vmatpush1.bf16.msra.mxu0 %v645
    %657 = vmatprep.subr.bf16.mxu0 0
    %658 = vmatpush1.bf16.msra.mxu0 %v646
    %659 = vmatprep.subr.bf16.mxu0 0
    %660 = vmatpush1.bf16.msra.mxu0 0
    %661 = vmatprep.subr.bf16.mxu0 0
    %662 = vmatpush1.bf16.msra.mxu0 0
    %663 = vmatprep.subr.bf16.mxu0 0
    %664 = vmatpush1.bf16.msra.mxu0 0
    %665 = vmatprep.subr.bf16.mxu0 0
    %666 = vmatpush1.bf16.msra.mxu0 0
    %667 = vmatprep.subr.bf16.mxu0 0
    %668 = vmatpush1.bf16.msra.mxu0 0
    %669 = vmatprep.subr.bf16.mxu0 0
    %670 = vmatpush1.bf16.msra.mxu0 0
    %671 = vmatprep.subr.bf16.mxu0 0
    %672 = vmatpush1.bf16.msra.mxu0 0
    %673 = vmatprep.subr.bf16.mxu0 0
    %674 = vmatpush1.bf16.msra.mxu0 0
    %675 = vmatprep.subr.bf16.mxu0 0
    %676 = vmatpush1.bf16.msra.mxu0 0
    %677 = vmatprep.subr.bf16.mxu0 0
    %678 = vmatpush1.bf16.msra.mxu0 0
    %679 = vmatprep.subr.bf16.mxu0 0
    %680 = vmatpush1.bf16.msra.mxu0 0
    %681 = vmatprep.subr.bf16.mxu0 0
    %682 = vmatpush1.bf16.msra.mxu0 0
    %683 = vmatprep.subr.bf16.mxu0 0
    %684 = vmatpush1.bf16.msra.mxu0 0
    %685 = vmatprep.subr.bf16.mxu0 0
    %686 = vmatpush1.bf16.msra.mxu0 0
    %687 = vmatprep.mubr.bf16.mxu0 0
    %688 = vmatmul.mubr.bf16.gmra.mrb[0].mxu0 %v650
    %v689 = vpop.f32.mrb[0].mxu0
    %v690 = vadd.f32 %v635, %v689
    %v691 = vpop.f32.mrb[0].mxu0
    %v692 = vpop.f32.mrb[0].mxu0
    %v693 = vadd.f32 %v635, %v692
    %v694 = vpop.f32.mrb[0].mxu0
    %695 = vmatprep.mubr.bf16.mxu0 0
    %696 = vmatmul.mubr.bf16.gmra.mrb[0].mxu0 %v653
    %v697 = vpop.f32.mrb[0].mxu0
    %v698 = vadd.f32 %v635, %v697
    %v699 = vpop.f32.mrb[0].mxu0
    %v700 = vpop.f32.mrb[0].mxu0
    %v701 = vadd.f32 %v635, %v700
    %v702 = vpop.f32.mrb[0].mxu0
    %703 = vdwg.mxu0
    %v704 = vmul.f32 %v690, 0.35355338
    %v705 = vmul.f32 %v693, 0.35355338
    %v706 = vmul.f32 %v698, 0.35355338
    %v707 = vmul.f32 %v701, 0.35355338
    %v708 = vmul.f32 %v704, %v45
    %v709 = vmul.f32 %v705, %v46
    %v710 = vmul.f32 %v704, %v47
    %v711 = vmul.f32 %v705, %v48
    %v712 = vmul.f32 %v704, %v49
    %v713 = vmul.f32 %v705, %v50
    %v714 = vmul.f32 %v704, %v51
    %v715 = vmul.f32 %v705, %v52
    %718 = vrot.lane.b32.xlu0 %v690, 96
    %v719 = vpop.permute.xlu0 %718
    %720 = vrot.lane.b32.xlu0 %v693, 96
    %v721 = vpop.permute.xlu0 %720
    %724 = vxpose.xlu0.b32.start [1/16] %v719, 128
    %725 = vxpose.xlu0.b32.cont [2/16] %v721, 128
    %726 = vxpose.xlu0.b32.cont [3/16] 0.0, 128
    %727 = vxpose.xlu0.b32.cont [4/16] 0.0, 128
    %728 = vxpose.xlu0.b32.cont [5/16] 0.0, 128
    %729 = vxpose.xlu0.b32.cont [6/16] 0.0, 128
    %730 = vxpose.xlu0.b32.cont [7/16] 0.0, 128
    %731 = vxpose.xlu0.b32.cont [8/16] 0.0, 128
    %732 = vxpose.xlu0.b32.cont [9/16] 0.0, 128
    %733 = vxpose.xlu0.b32.cont [10/16] 0.0, 128
    %734 = vxpose.xlu0.b32.cont [11/16] 0.0, 128
    %735 = vxpose.xlu0.b32.cont [12/16] 0.0, 128
    %736 = vxpose.xlu0.b32.cont [13/16] 0.0, 128
    %737 = vxpose.xlu0.b32.cont [14/16] 0.0, 128
    %738 = vxpose.xlu0.b32.cont [15/16] 0.0, 128
    %739 = vxpose.xlu0.b32.end [16/16] 0.0, 128
    %v740 = vpop.trf.xlu0
    %v741 = vpop.trf.xlu0
    %v742 = vpop.trf.xlu0
    %v743 = vpop.trf.xlu0
    %v744 = vpop.trf.xlu0
    %v745 = vpop.trf.xlu0
    %v746 = vpop.trf.xlu0
    %v747 = vpop.trf.xlu0
    %v748 = vpop.trf.xlu0
    %v749 = vpop.trf.xlu0
    %v750 = vpop.trf.xlu0
    %v751 = vpop.trf.xlu0
    %v752 = vpop.trf.xlu0
    %v753 = vpop.trf.xlu0
    %v754 = vpop.trf.xlu0
    %v755 = vpop.trf.xlu0
    %v756 = vpack.c.bf16 %v709, %v708
    %v757 = vpack.c.bf16 %v711, %v710
    %v758 = vpack.c.bf16 %v713, %v712
    %v759 = vpack.c.bf16 %v715, %v714
    %v760 = vpack.c.bf16 %v741, %v740
    %v761 = vpack.c.bf16 %v743, %v742
    %v763 = vsel %vm145, %v756, 0
    %v766 = vsel %vm145, %v757, 0
    %v769 = vsel %vm145, %v758, 0
    %v772 = vsel %vm145, %v759, 0
    %774 = vmatprep.subr.bf16.mxu0 0
    %775 = vmatpush1.bf16.msra.mxu0 %v760
    %776 = vmatprep.subr.bf16.mxu0 0
    %777 = vmatpush1.bf16.msra.mxu0 %v761
    %778 = vmatprep.subr.bf16.mxu0 0
    %779 = vmatpush1.bf16.msra.mxu0 0
    %780 = vmatprep.subr.bf16.mxu0 0
    %781 = vmatpush1.bf16.msra.mxu0 0
    %782 = vmatprep.subr.bf16.mxu0 0
    %783 = vmatpush1.bf16.msra.mxu0 0
    %784 = vmatprep.subr.bf16.mxu0 0
    %785 = vmatpush1.bf16.msra.mxu0 0
    %786 = vmatprep.subr.bf16.mxu0 0
    %787 = vmatpush1.bf16.msra.mxu0 0
    %788 = vmatprep.subr.bf16.mxu0 0
    %789 = vmatpush1.bf16.msra.mxu0 0
    %790 = vmatprep.subr.bf16.mxu0 0
    %791 = vmatpush1.bf16.msra.mxu0 0
    %792 = vmatprep.subr.bf16.mxu0 0
    %793 = vmatpush1.bf16.msra.mxu0 0
    %794 = vmatprep.subr.bf16.mxu0 0
    %795 = vmatpush1.bf16.msra.mxu0 0
    %796 = vmatprep.subr.bf16.mxu0 0
    %797 = vmatpush1.bf16.msra.mxu0 0
    %798 = vmatprep.subr.bf16.mxu0 0
    %799 = vmatpush1.bf16.msra.mxu0 0
    %800 = vmatprep.subr.bf16.mxu0 0
    %801 = vmatpush1.bf16.msra.mxu0 0
    %802 = vmatprep.subr.bf16.mxu0 0
    %803 = vmatpush1.bf16.msra.mxu0 0
    %804 = vmatprep.subr.bf16.mxu0 0
    %805 = vmatpush1.bf16.msra.mxu0 0
    %806 = vmatprep.mubr.bf16.mxu0 0
    %807 = vmatmul.mubr.bf16.gmra.mrb[0].mxu0 %v763
    %v808 = vpop.f32.mrb[0].mxu0
    %v809 = vadd.f32 0.0, %v808
    %v810 = vpop.f32.mrb[0].mxu0
    %v811 = vpop.f32.mrb[0].mxu0
    %v812 = vadd.f32 0.0, %v811
    %v813 = vpop.f32.mrb[0].mxu0
    %814 = vmatprep.mubr.bf16.mxu0 0
    %815 = vmatmul.mubr.bf16.gmra.mrb[0].mxu0 %v766
    %v816 = vpop.f32.mrb[0].mxu0
    %v817 = vadd.f32 0.0, %v816
    %v818 = vpop.f32.mrb[0].mxu0
    %v819 = vpop.f32.mrb[0].mxu0
    %v820 = vadd.f32 0.0, %v819
    %v821 = vpop.f32.mrb[0].mxu0
    %822 = vmatprep.mubr.bf16.mxu0 0
    %823 = vmatmul.mubr.bf16.gmra.mrb[0].mxu0 %v769
    %v824 = vpop.f32.mrb[0].mxu0
    %v825 = vadd.f32 0.0, %v824
    %v826 = vpop.f32.mrb[0].mxu0
    %v827 = vpop.f32.mrb[0].mxu0
    %v828 = vadd.f32 0.0, %v827
    %v829 = vpop.f32.mrb[0].mxu0
    %830 = vmatprep.mubr.bf16.mxu0 0
    %831 = vmatmul.mubr.bf16.gmra.mrb[0].mxu0 %v772
    %v832 = vpop.f32.mrb[0].mxu0
    %v833 = vadd.f32 0.0, %v832
    %v834 = vpop.f32.mrb[0].mxu0
    %v835 = vpop.f32.mrb[0].mxu0
    %v836 = vadd.f32 0.0, %v835
    %v837 = vpop.f32.mrb[0].mxu0
    %838 = vdwg.mxu0
    %vm839 = vcmask 130048
    %v840 = vsel %vm839, %v809, -inf
    %841 = vmax.xlane.f32.xlu0 %v840
    %v842 = vpop.xlane.xlu0 %841
    %v843 = vsel %vm839, %v812, -inf
    %844 = vmax.xlane.f32.xlu0 %v843
    %v845 = vpop.xlane.xlu0 %844
    %v846 = vsel %vm839, %v817, -inf
    %847 = vmax.xlane.f32.xlu0 %v846
    %v848 = vpop.xlane.xlu0 %847
    %v849 = vsel %vm839, %v820, -inf
    %850 = vmax.xlane.f32.xlu0 %v849
    %v851 = vpop.xlane.xlu0 %850
    %v852 = vsel %vm839, %v825, -inf
    %853 = vmax.xlane.f32.xlu0 %v852
    %v854 = vpop.xlane.xlu0 %853
    %v855 = vsel %vm839, %v828, -inf
    %856 = vmax.xlane.f32.xlu0 %v855
    %v857 = vpop.xlane.xlu0 %856
    %v858 = vsel %vm839, %v833, -inf
    %859 = vmax.xlane.f32.xlu0 %v858
    %v860 = vpop.xlane.xlu0 %859
    %v861 = vsel %vm839, %v836, -inf
    %862 = vmax.xlane.f32.xlu0 %v861
    %v863 = vpop.xlane.xlu0 %862
    %v864 = vsub.f32 %v809, %v842
    %v865 = vsub.f32 %v812, %v845
    %v866 = vsub.f32 %v817, %v848
    %v867 = vsub.f32 %v820, %v851
    %v868 = vsub.f32 %v825, %v854
    %v869 = vsub.f32 %v828, %v857
    %v870 = vsub.f32 %v833, %v860
    %v871 = vsub.f32 %v836, %v863
    %v872 = vmul.f32 %v864, 1.442695
    %v873 = vpow.pop %v872
    %v874 = vmul.f32 %v865, 1.442695
    %v875 = vpow.pop %v874
    %v876 = vmul.f32 %v866, 1.442695
    %v877 = vpow.pop %v876
    %v878 = vmul.f32 %v867, 1.442695
    %v879 = vpow.pop %v878
    %v880 = vmul.f32 %v868, 1.442695
    %v881 = vpow.pop %v880
    %v882 = vmul.f32 %v869, 1.442695
    %v883 = vpow.pop %v882
    %v884 = vmul.f32 %v870, 1.442695
    %v885 = vpow.pop %v884
    %v886 = vmul.f32 %v871, 1.442695
    %v887 = vpow.pop %v886
    %v888 = vsel %vm839, %v873, 0.0
    %889 = vadd.xlane.f32.xlu0 %v888
    %v890 = vpop.xlane.xlu0 %889
    %v891 = vsel %vm839, %v875, 0.0
    %892 = vadd.xlane.f32.xlu0 %v891
    %v893 = vpop.xlane.xlu0 %892
    %v894 = vsel %vm839, %v877, 0.0
    %895 = vadd.xlane.f32.xlu0 %v894
    %v896 = vpop.xlane.xlu0 %895
    %v897 = vsel %vm839, %v879, 0.0
    %898 = vadd.xlane.f32.xlu0 %v897
    %v899 = vpop.xlane.xlu0 %898
    %v900 = vsel %vm839, %v881, 0.0
    %901 = vadd.xlane.f32.xlu0 %v900
    %v902 = vpop.xlane.xlu0 %901
    %v903 = vsel %vm839, %v883, 0.0
    %904 = vadd.xlane.f32.xlu0 %v903
    %v905 = vpop.xlane.xlu0 %904
    %v906 = vsel %vm839, %v885, 0.0
    %907 = vadd.xlane.f32.xlu0 %v906
    %v908 = vpop.xlane.xlu0 %907
    %v909 = vsel %vm839, %v887, 0.0
    %910 = vadd.xlane.f32.xlu0 %v909
    %v911 = vpop.xlane.xlu0 %910
    %v912 = vrcp.pop %v890
    %v913 = vrcp.pop %v893
    %v914 = vrcp.pop %v896
    %v915 = vrcp.pop %v899
    %v916 = vrcp.pop %v902
    %v917 = vrcp.pop %v905
    %v918 = vrcp.pop %v908
    %v919 = vrcp.pop %v911
    %v920 = vmul.f32 %v873, %v912
    %v921 = vmul.f32 %v875, %v913
    %v922 = vmul.f32 %v877, %v914
    %v923 = vmul.f32 %v879, %v915
    %v924 = vmul.f32 %v881, %v916
    %v925 = vmul.f32 %v883, %v917
    %v926 = vmul.f32 %v885, %v918
    %v927 = vmul.f32 %v887, %v919
    %v928 = vpack.c.bf16 %v921, %v920
    %v929 = vpack.c.bf16 %v923, %v922
    %v930 = vpack.c.bf16 %v925, %v924
    %v931 = vpack.c.bf16 %v927, %v926
    %v932 = vpack.c.bf16 %v693, %v690
    %934 = vrot.lane.b32.xlu0 %v932, 64
    %v935 = vpop.permute.xlu0 %934
    %v938 = vsel %vm839, %v928, 0
    %v941 = vsel %vm839, %v929, 0
    %v944 = vsel %vm839, %v930, 0
    %v947 = vsel %vm839, %v931, 0
    %949 = vmatprep.subr.bf16.mxu0 0
    %950 = vmatpush1.bf16.msra.mxu0 %v935
    %951 = vmatprep.subr.bf16.mxu0 0
    %952 = vmatpush1.bf16.msra.mxu0 0
    %953 = vmatprep.subr.bf16.mxu0 0
    %954 = vmatpush1.bf16.msra.mxu0 0
    %955 = vmatprep.subr.bf16.mxu0 0
    %956 = vmatpush1.bf16.msra.mxu0 0
    %957 = vmatprep.subr.bf16.mxu0 0
    %958 = vmatpush1.bf16.msra.mxu0 0
    %959 = vmatprep.subr.bf16.mxu0 0
    %960 = vmatpush1.bf16.msra.mxu0 0
    %961 = vmatprep.subr.bf16.mxu0 0
    %962 = vmatpush1.bf16.msra.mxu0 0
    %963 = vmatprep.subr.bf16.mxu0 0
    %964 = vmatpush1.bf16.msra.mxu0 0
    %965 = vmatprep.subr.bf16.mxu0 0
    %966 = vmatpush1.bf16.msra.mxu0 0
    %967 = vmatprep.subr.bf16.mxu0 0
    %968 = vmatpush1.bf16.msra.mxu0 0
    %969 = vmatprep.subr.bf16.mxu0 0
    %970 = vmatpush1.bf16.msra.mxu0 0
    %971 = vmatprep.subr.bf16.mxu0 0
    %972 = vmatpush1.bf16.msra.mxu0 0
    %973 = vmatprep.subr.bf16.mxu0 0
    %974 = vmatpush1.bf16.msra.mxu0 0
    %975 = vmatprep.subr.bf16.mxu0 0
    %976 = vmatpush1.bf16.msra.mxu0 0
    %977 = vmatprep.subr.bf16.mxu0 0
    %978 = vmatpush1.bf16.msra.mxu0 0
    %979 = vmatprep.subr.bf16.mxu0 0
    %980 = vmatpush1.bf16.msra.mxu0 0
    %981 = vmatprep.mubr.bf16.mxu0 0
    %982 = vmatmul.mubr.bf16.gmra.mrb[0].mxu0 %v938
    %v983 = vpop.f32.mrb[0].mxu0
    %v984 = vadd.f32 0.0, %v983
    %v985 = vpop.f32.mrb[0].mxu0
    %v986 = vpop.f32.mrb[0].mxu0
    %v987 = vadd.f32 0.0, %v986
    %v988 = vpop.f32.mrb[0].mxu0
    %989 = vmatprep.mubr.bf16.mxu0 0
    %990 = vmatmul.mubr.bf16.gmra.mrb[0].mxu0 %v941
    %v991 = vpop.f32.mrb[0].mxu0
    %v992 = vadd.f32 0.0, %v991
    %v993 = vpop.f32.mrb[0].mxu0
    %v994 = vpop.f32.mrb[0].mxu0
    %v995 = vadd.f32 0.0, %v994
    %v996 = vpop.f32.mrb[0].mxu0
    %997 = vmatprep.mubr.bf16.mxu0 0
    %998 = vmatmul.mubr.bf16.gmra.mrb[0].mxu0 %v944
    %v999 = vpop.f32.mrb[0].mxu0
    %v1000 = vadd.f32 0.0, %v999
    %v1001 = vpop.f32.mrb[0].mxu0
    %v1002 = vpop.f32.mrb[0].mxu0
    %v1003 = vadd.f32 0.0, %v1002
    %v1004 = vpop.f32.mrb[0].mxu0
    %1005 = vmatprep.mubr.bf16.mxu0 0
    %1006 = vmatmul.mubr.bf16.gmra.mrb[0].mxu0 %v947
    %v1007 = vpop.f32.mrb[0].mxu0
    %v1008 = vadd.f32 0.0, %v1007
    %v1009 = vpop.f32.mrb[0].mxu0
    %v1010 = vpop.f32.mrb[0].mxu0
    %v1011 = vadd.f32 0.0, %v1010
    %v1012 = vpop.f32.mrb[0].mxu0
    %1013 = vdwg.mxu0
    %v1014 = vmul.f32 %v984, %v45
    %v1015 = vmul.f32 %v987, %v46
    %v1016 = vmul.f32 %v992, %v47
    %v1017 = vmul.f32 %v995, %v48
    %v1018 = vmul.f32 %v1000, %v49
    %v1019 = vmul.f32 %v1003, %v50
    %v1020 = vmul.f32 %v1008, %v51
    %v1021 = vmul.f32 %v1011, %v52
    %v1022 = vsel %vm145, %v1014, 0.0
    %v1023 = vsel %vm145, %v1016, 0.0
    %v1024 = vadd.f32 %v1022, %v1023
    %v1025 = vsel %vm145, %v1018, 0.0
    %v1026 = vadd.f32 %v1024, %v1025
    %v1027 = vsel %vm145, %v1020, 0.0
    %v1028 = vadd.f32 %v1026, %v1027
    %v1029 = vsel %vm145, %v1015, 0.0
    %v1030 = vsel %vm145, %v1017, 0.0
    %v1031 = vadd.f32 %v1029, %v1030
    %v1032 = vsel %vm145, %v1019, 0.0
    %v1033 = vadd.f32 %v1031, %v1032
    %v1034 = vsel %vm145, %v1021, 0.0
    %v1035 = vadd.f32 %v1033, %v1034
    %v1036 = vmul.f32 %v706, %v45
    %v1037 = vmul.f32 %v707, %v46
    %v1038 = vmul.f32 %v706, %v47
    %v1039 = vmul.f32 %v707, %v48
    %v1040 = vmul.f32 %v706, %v49
    %v1041 = vmul.f32 %v707, %v50
    %v1042 = vmul.f32 %v706, %v51
    %v1043 = vmul.f32 %v707, %v52
    %1046 = vrot.lane.b32.xlu0 %v698, 96
    %v1047 = vpop.permute.xlu0 %1046
    %1048 = vrot.lane.b32.xlu0 %v701, 96
    %v1049 = vpop.permute.xlu0 %1048
    %1052 = vxpose.xlu0.b32.start [1/16] %v1047, 128
    %1053 = vxpose.xlu0.b32.cont [2/16] %v1049, 128
    %1054 = vxpose.xlu0.b32.cont [3/16] 0.0, 128
    %1055 = vxpose.xlu0.b32.cont [4/16] 0.0, 128
    %1056 = vxpose.xlu0.b32.cont [5/16] 0.0, 128
    %1057 = vxpose.xlu0.b32.cont [6/16] 0.0, 128
    %1058 = vxpose.xlu0.b32.cont [7/16] 0.0, 128
    %1059 = vxpose.xlu0.b32.cont [8/16] 0.0, 128
    %1060 = vxpose.xlu0.b32.cont [9/16] 0.0, 128
    %1061 = vxpose.xlu0.b32.cont [10/16] 0.0, 128
    %1062 = vxpose.xlu0.b32.cont [11/16] 0.0, 128
    %1063 = vxpose.xlu0.b32.cont [12/16] 0.0, 128
    %1064 = vxpose.xlu0.b32.cont [13/16] 0.0, 128
    %1065 = vxpose.xlu0.b32.cont [14/16] 0.0, 128
    %1066 = vxpose.xlu0.b32.cont [15/16] 0.0, 128
    %1067 = vxpose.xlu0.b32.end [16/16] 0.0, 128
    %v1068 = vpop.trf.xlu0
    %v1069 = vpop.trf.xlu0
    %v1070 = vpop.trf.xlu0
    %v1071 = vpop.trf.xlu0
    %v1072 = vpop.trf.xlu0
    %v1073 = vpop.trf.xlu0
    %v1074 = vpop.trf.xlu0
    %v1075 = vpop.trf.xlu0
    %v1076 = vpop.trf.xlu0
    %v1077 = vpop.trf.xlu0
    %v1078 = vpop.trf.xlu0
    %v1079 = vpop.trf.xlu0
    %v1080 = vpop.trf.xlu0
    %v1081 = vpop.trf.xlu0
    %v1082 = vpop.trf.xlu0
    %v1083 = vpop.trf.xlu0
    %v1084 = vpack.c.bf16 %v1037, %v1036
    %v1085 = vpack.c.bf16 %v1039, %v1038
    %v1086 = vpack.c.bf16 %v1041, %v1040
    %v1087 = vpack.c.bf16 %v1043, %v1042
    %v1088 = vpack.c.bf16 %v1069, %v1068
    %v1089 = vpack.c.bf16 %v1071, %v1070
    %v1091 = vsel %vm145, %v1084, 0
    %v1094 = vsel %vm145, %v1085, 0
    %v1097 = vsel %vm145, %v1086, 0
    %v1100 = vsel %vm145, %v1087, 0
    %1102 = vmatprep.subr.bf16.mxu0 0
    %1103 = vmatpush1.bf16.msra.mxu0 %v1088
    %1104 = vmatprep.subr.bf16.mxu0 0
    %1105 = vmatpush1.bf16.msra.mxu0 %v1089
    %1106 = vmatprep.subr.bf16.mxu0 0
    %1107 = vmatpush1.bf16.msra.mxu0 0
    %1108 = vmatprep.subr.bf16.mxu0 0
    %1109 = vmatpush1.bf16.msra.mxu0 0
    %1110 = vmatprep.subr.bf16.mxu0 0
    %1111 = vmatpush1.bf16.msra.mxu0 0
    %1112 = vmatprep.subr.bf16.mxu0 0
    %1113 = vmatpush1.bf16.msra.mxu0 0
    %1114 = vmatprep.subr.bf16.mxu0 0
    %1115 = vmatpush1.bf16.msra.mxu0 0
    %1116 = vmatprep.subr.bf16.mxu0 0
    %1117 = vmatpush1.bf16.msra.mxu0 0
    %1118 = vmatprep.subr.bf16.mxu0 0
    %1119 = vmatpush1.bf16.msra.mxu0 0
    %1120 = vmatprep.subr.bf16.mxu0 0
    %1121 = vmatpush1.bf16.msra.mxu0 0
    %1122 = vmatprep.subr.bf16.mxu0 0
    %1123 = vmatpush1.bf16.msra.mxu0 0
    %1124 = vmatprep.subr.bf16.mxu0 0
    %1125 = vmatpush1.bf16.msra.mxu0 0
    %1126 = vmatprep.subr.bf16.mxu0 0
    %1127 = vmatpush1.bf16.msra.mxu0 0
    %1128 = vmatprep.subr.bf16.mxu0 0
    %1129 = vmatpush1.bf16.msra.mxu0 0
    %1130 = vmatprep.subr.bf16.mxu0 0
    %1131 = vmatpush1.bf16.msra.mxu0 0
    %1132 = vmatprep.subr.bf16.mxu0 0
    %1133 = vmatpush1.bf16.msra.mxu0 0
    %1134 = vmatprep.mubr.bf16.mxu0 0
    %1135 = vmatmul.mubr.bf16.gmra.mrb[0].mxu0 %v1091
    %v1136 = vpop.f32.mrb[0].mxu0
    %v1137 = vadd.f32 0.0, %v1136
    %v1138 = vpop.f32.mrb[0].mxu0
    %v1139 = vpop.f32.mrb[0].mxu0
    %v1140 = vadd.f32 0.0, %v1139
    %v1141 = vpop.f32.mrb[0].mxu0
    %1142 = vmatprep.mubr.bf16.mxu0 0
    %1143 = vmatmul.mubr.bf16.gmra.mrb[0].mxu0 %v1094
    %v1144 = vpop.f32.mrb[0].mxu0
    %v1145 = vadd.f32 0.0, %v1144
    %v1146 = vpop.f32.mrb[0].mxu0
    %v1147 = vpop.f32.mrb[0].mxu0
    %v1148 = vadd.f32 0.0, %v1147
    %v1149 = vpop.f32.mrb[0].mxu0
    %1150 = vmatprep.mubr.bf16.mxu0 0
    %1151 = vmatmul.mubr.bf16.gmra.mrb[0].mxu0 %v1097
    %v1152 = vpop.f32.mrb[0].mxu0
    %v1153 = vadd.f32 0.0, %v1152
    %v1154 = vpop.f32.mrb[0].mxu0
    %v1155 = vpop.f32.mrb[0].mxu0
    %v1156 = vadd.f32 0.0, %v1155
    %v1157 = vpop.f32.mrb[0].mxu0
    %1158 = vmatprep.mubr.bf16.mxu0 0
    %1159 = vmatmul.mubr.bf16.gmra.mrb[0].mxu0 %v1100
    %v1160 = vpop.f32.mrb[0].mxu0
    %v1161 = vadd.f32 0.0, %v1160
    %v1162 = vpop.f32.mrb[0].mxu0
    %v1163 = vpop.f32.mrb[0].mxu0
    %v1164 = vadd.f32 0.0, %v1163
    %v1165 = vpop.f32.mrb[0].mxu0
    %1166 = vdwg.mxu0
    %v1167 = vsel %vm839, %v1137, -inf
    %1168 = vmax.xlane.f32.xlu0 %v1167
    %v1169 = vpop.xlane.xlu0 %1168
    %v1170 = vsel %vm839, %v1140, -inf
    %1171 = vmax.xlane.f32.xlu0 %v1170
    %v1172 = vpop.xlane.xlu0 %1171
    %v1173 = vsel %vm839, %v1145, -inf
    %1174 = vmax.xlane.f32.xlu0 %v1173
    %v1175 = vpop.xlane.xlu0 %1174
    %v1176 = vsel %vm839, %v1148, -inf
    %1177 = vmax.xlane.f32.xlu0 %v1176
    %v1178 = vpop.xlane.xlu0 %1177
    %v1179 = vsel %vm839, %v1153, -inf
    %1180 = vmax.xlane.f32.xlu0 %v1179
    %v1181 = vpop.xlane.xlu0 %1180
    %v1182 = vsel %vm839, %v1156, -inf
    %1183 = vmax.xlane.f32.xlu0 %v1182
    %v1184 = vpop.xlane.xlu0 %1183
    %v1185 = vsel %vm839, %v1161, -inf
    %1186 = vmax.xlane.f32.xlu0 %v1185
    %v1187 = vpop.xlane.xlu0 %1186
    %v1188 = vsel %vm839, %v1164, -inf
    %1189 = vmax.xlane.f32.xlu0 %v1188
    %v1190 = vpop.xlane.xlu0 %1189
    %v1191 = vsub.f32 %v1137, %v1169
    %v1192 = vsub.f32 %v1140, %v1172
    %v1193 = vsub.f32 %v1145, %v1175
    %v1194 = vsub.f32 %v1148, %v1178
    %v1195 = vsub.f32 %v1153, %v1181
    %v1196 = vsub.f32 %v1156, %v1184
    %v1197 = vsub.f32 %v1161, %v1187
    %v1198 = vsub.f32 %v1164, %v1190
    %v1199 = vmul.f32 %v1191, 1.442695
    %v1200 = vpow.pop %v1199
    %v1201 = vmul.f32 %v1192, 1.442695
    %v1202 = vpow.pop %v1201
    %v1203 = vmul.f32 %v1193, 1.442695
    %v1204 = vpow.pop %v1203
    %v1205 = vmul.f32 %v1194, 1.442695
    %v1206 = vpow.pop %v1205
    %v1207 = vmul.f32 %v1195, 1.442695
    %v1208 = vpow.pop %v1207
    %v1209 = vmul.f32 %v1196, 1.442695
    %v1210 = vpow.pop %v1209
    %v1211 = vmul.f32 %v1197, 1.442695
    %v1212 = vpow.pop %v1211
    %v1213 = vmul.f32 %v1198, 1.442695
    %v1214 = vpow.pop %v1213
    %v1215 = vsel %vm839, %v1200, 0.0
    %1216 = vadd.xlane.f32.xlu0 %v1215
    %v1217 = vpop.xlane.xlu0 %1216
    %v1218 = vsel %vm839, %v1202, 0.0
    %1219 = vadd.xlane.f32.xlu0 %v1218
    %v1220 = vpop.xlane.xlu0 %1219
    %v1221 = vsel %vm839, %v1204, 0.0
    %1222 = vadd.xlane.f32.xlu0 %v1221
    %v1223 = vpop.xlane.xlu0 %1222
    %v1224 = vsel %vm839, %v1206, 0.0
    %1225 = vadd.xlane.f32.xlu0 %v1224
    %v1226 = vpop.xlane.xlu0 %1225
    %v1227 = vsel %vm839, %v1208, 0.0
    %1228 = vadd.xlane.f32.xlu0 %v1227
    %v1229 = vpop.xlane.xlu0 %1228
    %v1230 = vsel %vm839, %v1210, 0.0
    %1231 = vadd.xlane.f32.xlu0 %v1230
    %v1232 = vpop.xlane.xlu0 %1231
    %v1233 = vsel %vm839, %v1212, 0.0
    %1234 = vadd.xlane.f32.xlu0 %v1233
    %v1235 = vpop.xlane.xlu0 %1234
    %v1236 = vsel %vm839, %v1214, 0.0
    %1237 = vadd.xlane.f32.xlu0 %v1236
    %v1238 = vpop.xlane.xlu0 %1237
    %v1239 = vrcp.pop %v1217
    %v1240 = vrcp.pop %v1220
    %v1241 = vrcp.pop %v1223
    %v1242 = vrcp.pop %v1226
    %v1243 = vrcp.pop %v1229
    %v1244 = vrcp.pop %v1232
    %v1245 = vrcp.pop %v1235
    %v1246 = vrcp.pop %v1238
    %v1247 = vmul.f32 %v1200, %v1239
    %v1248 = vmul.f32 %v1202, %v1240
    %v1249 = vmul.f32 %v1204, %v1241
    %v1250 = vmul.f32 %v1206, %v1242
    %v1251 = vmul.f32 %v1208, %v1243
    %v1252 = vmul.f32 %v1210, %v1244
    %v1253 = vmul.f32 %v1212, %v1245
    %v1254 = vmul.f32 %v1214, %v1246
    %v1255 = vpack.c.bf16 %v1248, %v1247
    %v1256 = vpack.c.bf16 %v1250, %v1249
    %v1257 = vpack.c.bf16 %v1252, %v1251
    %v1258 = vpack.c.bf16 %v1254, %v1253
    %v1259 = vpack.c.bf16 %v701, %v698
    %1261 = vrot.lane.b32.xlu0 %v1259, 64
    %v1262 = vpop.permute.xlu0 %1261
    %v1265 = vsel %vm839, %v1255, 0
    %v1268 = vsel %vm839, %v1256, 0
    %v1271 = vsel %vm839, %v1257, 0
    %v1274 = vsel %vm839, %v1258, 0
    %1276 = vmatprep.subr.bf16.mxu0 0
    %1277 = vmatpush1.bf16.msra.mxu0 %v1262
    %1278 = vmatprep.subr.bf16.mxu0 0
    %1279 = vmatpush1.bf16.msra.mxu0 0
    %1280 = vmatprep.subr.bf16.mxu0 0
    %1281 = vmatpush1.bf16.msra.mxu0 0
    %1282 = vmatprep.subr.bf16.mxu0 0
    %1283 = vmatpush1.bf16.msra.mxu0 0
    %1284 = vmatprep.subr.bf16.mxu0 0
    %1285 = vmatpush1.bf16.msra.mxu0 0
    %1286 = vmatprep.subr.bf16.mxu0 0
    %1287 = vmatpush1.bf16.msra.mxu0 0
    %1288 = vmatprep.subr.bf16.mxu0 0
    %1289 = vmatpush1.bf16.msra.mxu0 0
    %1290 = vmatprep.subr.bf16.mxu0 0
    %1291 = vmatpush1.bf16.msra.mxu0 0
    %1292 = vmatprep.subr.bf16.mxu0 0
    %1293 = vmatpush1.bf16.msra.mxu0 0
    %1294 = vmatprep.subr.bf16.mxu0 0
    %1295 = vmatpush1.bf16.msra.mxu0 0
    %1296 = vmatprep.subr.bf16.mxu0 0
    %1297 = vmatpush1.bf16.msra.mxu0 0
    %1298 = vmatprep.subr.bf16.mxu0 0
    %1299 = vmatpush1.bf16.msra.mxu0 0
    %1300 = vmatprep.subr.bf16.mxu0 0
    %1301 = vmatpush1.bf16.msra.mxu0 0
    %1302 = vmatprep.subr.bf16.mxu0 0
    %1303 = vmatpush1.bf16.msra.mxu0 0
    %1304 = vmatprep.subr.bf16.mxu0 0
    %1305 = vmatpush1.bf16.msra.mxu0 0
    %1306 = vmatprep.subr.bf16.mxu0 0
    %1307 = vmatpush1.bf16.msra.mxu0 0
    %1308 = vmatprep.mubr.bf16.mxu0 0
    %1309 = vmatmul.mubr.bf16.gmra.mrb[0].mxu0 %v1265
    %v1310 = vpop.f32.mrb[0].mxu0
    %v1311 = vadd.f32 0.0, %v1310
    %v1312 = vpop.f32.mrb[0].mxu0
    %v1313 = vpop.f32.mrb[0].mxu0
    %v1314 = vadd.f32 0.0, %v1313
    %v1315 = vpop.f32.mrb[0].mxu0
    %1316 = vmatprep.mubr.bf16.mxu0 0
    %1317 = vmatmul.mubr.bf16.gmra.mrb[0].mxu0 %v1268
    %v1318 = vpop.f32.mrb[0].mxu0
    %v1319 = vadd.f32 0.0, %v1318
    %v1320 = vpop.f32.mrb[0].mxu0
    %v1321 = vpop.f32.mrb[0].mxu0
    %v1322 = vadd.f32 0.0, %v1321
    %v1323 = vpop.f32.mrb[0].mxu0
    %1324 = vmatprep.mubr.bf16.mxu0 0
    %1325 = vmatmul.mubr.bf16.gmra.mrb[0].mxu0 %v1271
    %v1326 = vpop.f32.mrb[0].mxu0
    %v1327 = vadd.f32 0.0, %v1326
    %v1328 = vpop.f32.mrb[0].mxu0
    %v1329 = vpop.f32.mrb[0].mxu0
    %v1330 = vadd.f32 0.0, %v1329
    %v1331 = vpop.f32.mrb[0].mxu0
    %1332 = vmatprep.mubr.bf16.mxu0 0
    %1333 = vmatmul.mubr.bf16.gmra.mrb[0].mxu0 %v1274
    %v1334 = vpop.f32.mrb[0].mxu0
    %v1335 = vadd.f32 0.0, %v1334
    %v1336 = vpop.f32.mrb[0].mxu0
    %v1337 = vpop.f32.mrb[0].mxu0
    %v1338 = vadd.f32 0.0, %v1337
    %v1339 = vpop.f32.mrb[0].mxu0
    %1340 = vdwg.mxu0
    %v1341 = vmul.f32 %v1311, %v45
    %v1342 = vmul.f32 %v1314, %v46
    %v1343 = vmul.f32 %v1319, %v47
    %v1344 = vmul.f32 %v1322, %v48
    %v1345 = vmul.f32 %v1327, %v49
    %v1346 = vmul.f32 %v1330, %v50
    %v1347 = vmul.f32 %v1335, %v51
    %v1348 = vmul.f32 %v1338, %v52
    %v1349 = vsel %vm145, %v1341, 0.0
    %v1350 = vsel %vm145, %v1343, 0.0
    %v1351 = vadd.f32 %v1349, %v1350
    %v1352 = vsel %vm145, %v1345, 0.0
    %v1353 = vadd.f32 %v1351, %v1352
    %v1354 = vsel %vm145, %v1347, 0.0
    %v1355 = vadd.f32 %v1353, %v1354
    %v1356 = vsel %vm145, %v1342, 0.0
    %v1357 = vsel %vm145, %v1344, 0.0
    %v1358 = vadd.f32 %v1356, %v1357
    %v1359 = vsel %vm145, %v1346, 0.0
    %v1360 = vadd.f32 %v1358, %v1359
    %v1361 = vsel %vm145, %v1348, 0.0
    %v1362 = vadd.f32 %v1360, %v1361
    %v1363 = vld [vmem:[%s6] sm:$0xf]
    %v1364 = vld [vmem:[%s6 + $0x4] sm:$0xf]
    %v1365 = vld [vmem:[%s6 + $0x8] sm:$0xf]
    %v1366 = vld [vmem:[%s6 + $0xc] sm:$0xf]
    %v1367 = vpack.c.bf16 %v1035, %v1028
    %v1368 = vpack.c.bf16 %v1362, %v1355
    %v1369 = vlaneseq
    %v1370 = vshrl.u32 %v1369, 7
    %v1371 = vsub.s32 0, %v1370
    %v1372 = vrot.slane %v623, %v1371
    %v1377 = vunpack.c.l.b16 %v1363
    %v1378 = vunpack.c.l.b16 %v1364
    %v1379 = vunpack.c.l.b16 %v1365
    %v1380 = vunpack.c.l.b16 %v1366
    %v1381 = vpack.c.b16 %v1378, %v1377
    %v1382 = vpack.c.b16 %v1380, %v1379
    %v1386 = vsel %vm145, %v1367, 0
    %v1389 = vsel %vm145, %v1368, 0
    %1391 = vmatprep.subr.bf16.mxu0 0
    %1392 = vmatpush1.bf16.msra.mxu0 %v1381
    %1393 = vmatprep.subr.bf16.mxu0 0
    %1394 = vmatpush1.bf16.msra.mxu0 %v1382
    %1395 = vmatprep.subr.bf16.mxu0 0
    %1396 = vmatpush1.bf16.msra.mxu0 0
    %1397 = vmatprep.subr.bf16.mxu0 0
    %1398 = vmatpush1.bf16.msra.mxu0 0
    %1399 = vmatprep.subr.bf16.mxu0 0
    %1400 = vmatpush1.bf16.msra.mxu0 0
    %1401 = vmatprep.subr.bf16.mxu0 0
    %1402 = vmatpush1.bf16.msra.mxu0 0
    %1403 = vmatprep.subr.bf16.mxu0 0
    %1404 = vmatpush1.bf16.msra.mxu0 0
    %1405 = vmatprep.subr.bf16.mxu0 0
    %1406 = vmatpush1.bf16.msra.mxu0 0
    %1407 = vmatprep.subr.bf16.mxu0 0
    %1408 = vmatpush1.bf16.msra.mxu0 0
    %1409 = vmatprep.subr.bf16.mxu0 0
    %1410 = vmatpush1.bf16.msra.mxu0 0
    %1411 = vmatprep.subr.bf16.mxu0 0
    %1412 = vmatpush1.bf16.msra.mxu0 0
    %1413 = vmatprep.subr.bf16.mxu0 0
    %1414 = vmatpush1.bf16.msra.mxu0 0
    %1415 = vmatprep.subr.bf16.mxu0 0
    %1416 = vmatpush1.bf16.msra.mxu0 0
    %1417 = vmatprep.subr.bf16.mxu0 0
    %1418 = vmatpush1.bf16.msra.mxu0 0
    %1419 = vmatprep.subr.bf16.mxu0 0
    %1420 = vmatpush1.bf16.msra.mxu0 0
    %1421 = vmatprep.subr.bf16.mxu0 0
    %1422 = vmatpush1.bf16.msra.mxu0 0
    %1423 = vmatprep.mubr.bf16.mxu0 0
    %1424 = vmatmul.mubr.bf16.gmra.mrb[0].mxu0 %v1386
    %v1425 = vpop.f32.mrb[0].mxu0
    %v1426 = vadd.f32 %v1372, %v1425
    %v1427 = vpop.f32.mrb[0].mxu0
    %v1428 = vpop.f32.mrb[0].mxu0
    %v1429 = vadd.f32 %v1372, %v1428
    %v1430 = vpop.f32.mrb[0].mxu0
    %1431 = vmatprep.mubr.bf16.mxu0 0
    %1432 = vmatmul.mubr.bf16.gmra.mrb[0].mxu0 %v1389
    %v1433 = vpop.f32.mrb[0].mxu0
    %v1434 = vadd.f32 %v1372, %v1433
    %v1435 = vpop.f32.mrb[0].mxu0
    %v1436 = vpop.f32.mrb[0].mxu0
    %v1437 = vadd.f32 %v1372, %v1436
    %v1438 = vpop.f32.mrb[0].mxu0
    %1439 = vdwg.mxu0
    %v1440 = vadd.f32 %v619, %v1426
    %v1441 = vadd.f32 %v620, %v1429
    %v1442 = vadd.f32 %v621, %v1434
    %v1443 = vadd.f32 %v622, %v1437
    %v1444 = vsel %vm145, %v1440, 0.0
    %1445 = vadd.xlane.f32.xlu0 %v1444
    %v1446 = vpop.xlane.xlu0 %1445
    %v1447 = vsel %vm145, %v1441, 0.0
    %1448 = vadd.xlane.f32.xlu0 %v1447
    %v1449 = vpop.xlane.xlu0 %1448
    %v1450 = vsel %vm145, %v1442, 0.0
    %1451 = vadd.xlane.f32.xlu0 %v1450
    %v1452 = vpop.xlane.xlu0 %1451
    %v1453 = vsel %vm145, %v1443, 0.0
    %1454 = vadd.xlane.f32.xlu0 %v1453
    %v1455 = vpop.xlane.xlu0 %1454
    %v1456 = vmul.f32 %v1446, %v566
    %v1457 = vmul.f32 %v1449, %v566
    %v1458 = vmul.f32 %v1452, %v566
    %v1459 = vmul.f32 %v1455, %v566
    %v1460 = vsub.f32 %v1440, %v1456
    %v1461 = vsub.f32 %v1441, %v1457
    %v1462 = vsub.f32 %v1442, %v1458
    %v1463 = vsub.f32 %v1443, %v1459
    %v1464 = vmul.f32 %v1460, %v1460
    %v1465 = vmul.f32 %v1461, %v1461
    %v1466 = vmul.f32 %v1462, %v1462
    %v1467 = vmul.f32 %v1463, %v1463
    %v1468 = vsel %vm145, %v1464, 0.0
    %1469 = vadd.xlane.f32.xlu0 %v1468
    %v1470 = vpop.xlane.xlu0 %1469
    %v1471 = vsel %vm145, %v1465, 0.0
    %1472 = vadd.xlane.f32.xlu0 %v1471
    %v1473 = vpop.xlane.xlu0 %1472
    %v1474 = vsel %vm145, %v1466, 0.0
    %1475 = vadd.xlane.f32.xlu0 %v1474
    %v1476 = vpop.xlane.xlu0 %1475
    %v1477 = vsel %vm145, %v1467, 0.0
    %1478 = vadd.xlane.f32.xlu0 %v1477
    %v1479 = vpop.xlane.xlu0 %1478
    %v1480 = vmul.f32 %v1470, %v566
    %v1481 = vmul.f32 %v1473, %v566
    %v1482 = vmul.f32 %v1476, %v566
    %v1483 = vmul.f32 %v1479, %v566
    %v1484 = vadd.f32 %v1480, 1e-05
    %v1485 = vadd.f32 %v1481, 1e-05
    %v1486 = vadd.f32 %v1482, 1e-05
    %v1487 = vadd.f32 %v1483, 1e-05
    %v1488 = vrsqrt.pop %v1484
    %v1489 = vrsqrt.pop %v1485
    %v1490 = vrsqrt.pop %v1486
    %v1491 = vrsqrt.pop %v1487
    %v1492 = vmul.f32 %v1460, %v1488
    %v1493 = vmul.f32 %v1461, %v1489
    %v1494 = vmul.f32 %v1462, %v1490
    %v1495 = vmul.f32 %v1463, %v1491
    %v1496 = vlaneseq
    %v1497 = vshrl.u32 %v1496, 7
    %v1498 = vsub.s32 1, %v1497
    %v1499 = vrot.slane %v623, %v1498
    %v1500 = vmul.f32 %v1492, %v1499
    %v1501 = vmul.f32 %v1493, %v1499
    %v1502 = vmul.f32 %v1494, %v1499
    %v1503 = vmul.f32 %v1495, %v1499
    %v1504 = vlaneseq
    %v1505 = vshrl.u32 %v1504, 7
    %v1506 = vsub.s32 2, %v1505
    %v1507 = vrot.slane %v623, %v1506
    %v1508 = vadd.f32 %v1500, %v1507
    %v1509 = vadd.f32 %v1501, %v1507
    %v1510 = vadd.f32 %v1502, %v1507
    %v1511 = vadd.f32 %v1503, %v1507
    %v1512 = vld [vmem:[%s7] sm:$0xf]
    %v1513 = vld [vmem:[%s7 + $0x4] sm:$0xf]
    %v1514 = vld [vmem:[%s7 + $0x8] sm:$0xf]
    %v1515 = vld [vmem:[%s7 + $0xc] sm:$0xf]
    %v1516 = vpack.c.bf16 %v1509, %v1508
    %v1517 = vpack.c.bf16 %v1511, %v1510
    %v1518 = vld [vmem:[%s8] sm:$0x1]
    %v1520 = vlaneseq
    %v1521 = vshrl.u32 %v1520, 7
    %v1522 = vsub.s32 0, %v1521
    %v1523 = vrot.slane %v1518, %v1522
    %v1529 = vunpack.c.l.b16 %v1512
    %v1530 = vunpack.c.l.b16 %v1513
    %v1531 = vunpack.c.l.b16 %v1514
    %v1532 = vunpack.c.l.b16 %v1515
    %v1533 = vpack.c.b16 %v1530, %v1529
    %v1534 = vpack.c.b16 %v1532, %v1531
    %v1538 = vsel %vm145, %v1516, 0
    %v1541 = vsel %vm145, %v1517, 0
    %1543 = vmatprep.subr.bf16.mxu0 0
    %1544 = vmatpush1.bf16.msra.mxu0 %v1533
    %1545 = vmatprep.subr.bf16.mxu0 0
    %1546 = vmatpush1.bf16.msra.mxu0 %v1534
    %1547 = vmatprep.subr.bf16.mxu0 0
    %1548 = vmatpush1.bf16.msra.mxu0 0
    %1549 = vmatprep.subr.bf16.mxu0 0
    %1550 = vmatpush1.bf16.msra.mxu0 0
    %1551 = vmatprep.subr.bf16.mxu0 0
    %1552 = vmatpush1.bf16.msra.mxu0 0
    %1553 = vmatprep.subr.bf16.mxu0 0
    %1554 = vmatpush1.bf16.msra.mxu0 0
    %1555 = vmatprep.subr.bf16.mxu0 0
    %1556 = vmatpush1.bf16.msra.mxu0 0
    %1557 = vmatprep.subr.bf16.mxu0 0
    %1558 = vmatpush1.bf16.msra.mxu0 0
    %1559 = vmatprep.subr.bf16.mxu0 0
    %1560 = vmatpush1.bf16.msra.mxu0 0
    %1561 = vmatprep.subr.bf16.mxu0 0
    %1562 = vmatpush1.bf16.msra.mxu0 0
    %1563 = vmatprep.subr.bf16.mxu0 0
    %1564 = vmatpush1.bf16.msra.mxu0 0
    %1565 = vmatprep.subr.bf16.mxu0 0
    %1566 = vmatpush1.bf16.msra.mxu0 0
    %1567 = vmatprep.subr.bf16.mxu0 0
    %1568 = vmatpush1.bf16.msra.mxu0 0
    %1569 = vmatprep.subr.bf16.mxu0 0
    %1570 = vmatpush1.bf16.msra.mxu0 0
    %1571 = vmatprep.subr.bf16.mxu0 0
    %1572 = vmatpush1.bf16.msra.mxu0 0
    %1573 = vmatprep.subr.bf16.mxu0 0
    %1574 = vmatpush1.bf16.msra.mxu0 0
    %1575 = vmatprep.mubr.bf16.mxu0 0
    %1576 = vmatmul.mubr.bf16.gmra.mrb[0].mxu0 %v1538
    %v1577 = vpop.f32.mrb[0].mxu0
    %v1578 = vadd.f32 %v1523, %v1577
    %v1579 = vpop.f32.mrb[0].mxu0
    %v1580 = vpop.f32.mrb[0].mxu0
    %v1581 = vadd.f32 %v1523, %v1580
    %v1582 = vpop.f32.mrb[0].mxu0
    %1583 = vmatprep.mubr.bf16.mxu0 0
    %1584 = vmatmul.mubr.bf16.gmra.mrb[0].mxu0 %v1541
    %v1585 = vpop.f32.mrb[0].mxu0
    %v1586 = vadd.f32 %v1523, %v1585
    %v1587 = vpop.f32.mrb[0].mxu0
    %v1588 = vpop.f32.mrb[0].mxu0
    %v1589 = vadd.f32 %v1523, %v1588
    %v1590 = vpop.f32.mrb[0].mxu0
    %1591 = vdwg.mxu0
    %v1592 = vmax.f32 %v1578, 0.0
    %v1593 = vmax.f32 %v1581, 0.0
    %v1594 = vmax.f32 %v1586, 0.0
    %v1595 = vmax.f32 %v1589, 0.0
    %v1596 = vld [vmem:[%s9] sm:$0xf]
    %v1597 = vld [vmem:[%s9 + $0x4] sm:$0xf]
    %v1598 = vld [vmem:[%s9 + $0x8] sm:$0xf]
    %v1599 = vld [vmem:[%s9 + $0xc] sm:$0xf]
    %v1600 = vld [vmem:[%s9 + $0x10] sm:$0xf]
    %v1601 = vld [vmem:[%s9 + $0x14] sm:$0xf]
    %v1602 = vld [vmem:[%s9 + $0x18] sm:$0xf]
    %v1603 = vld [vmem:[%s9 + $0x1c] sm:$0xf]
    %v1604 = vpack.c.bf16 %v1593, %v1592
    %v1605 = vpack.c.bf16 %v1595, %v1594
    %v1606 = vlaneseq
    %v1607 = vshrl.u32 %v1606, 7
    %v1608 = vsub.s32 3, %v1607
    %v1609 = vrot.slane %v623, %v1608
    %v1618 = vunpack.c.l.b16 %v1596
    %v1619 = vunpack.c.l.b16 %v1597
    %v1620 = vunpack.c.l.b16 %v1598
    %v1621 = vunpack.c.l.b16 %v1599
    %v1622 = vunpack.c.l.b16 %v1600
    %v1623 = vunpack.c.l.b16 %v1601
    %v1624 = vunpack.c.l.b16 %v1602
    %v1625 = vunpack.c.l.b16 %v1603
    %v1626 = vpack.c.b16 %v1619, %v1618
    %v1627 = vpack.c.b16 %v1621, %v1620
    %v1628 = vpack.c.b16 %v1623, %v1622
    %v1629 = vpack.c.b16 %v1625, %v1624
    %v1635 = vsel %vm148, %v1604, 0
    %v1638 = vsel %vm148, %v1605, 0
    %1640 = vmatprep.subr.bf16.mxu0 0
    %1641 = vmatpush1.bf16.msra.mxu0 %v1626
    %1642 = vmatprep.subr.bf16.mxu0 0
    %1643 = vmatpush1.bf16.msra.mxu0 %v1627
    %1644 = vmatprep.subr.bf16.mxu0 0
    %1645 = vmatpush1.bf16.msra.mxu0 %v1628
    %1646 = vmatprep.subr.bf16.mxu0 0
    %1647 = vmatpush1.bf16.msra.mxu0 %v1629
    %1648 = vmatprep.subr.bf16.mxu0 0
    %1649 = vmatpush1.bf16.msra.mxu0 0
    %1650 = vmatprep.subr.bf16.mxu0 0
    %1651 = vmatpush1.bf16.msra.mxu0 0
    %1652 = vmatprep.subr.bf16.mxu0 0
    %1653 = vmatpush1.bf16.msra.mxu0 0
    %1654 = vmatprep.subr.bf16.mxu0 0
    %1655 = vmatpush1.bf16.msra.mxu0 0
    %1656 = vmatprep.subr.bf16.mxu0 0
    %1657 = vmatpush1.bf16.msra.mxu0 0
    %1658 = vmatprep.subr.bf16.mxu0 0
    %1659 = vmatpush1.bf16.msra.mxu0 0
    %1660 = vmatprep.subr.bf16.mxu0 0
    %1661 = vmatpush1.bf16.msra.mxu0 0
    %1662 = vmatprep.subr.bf16.mxu0 0
    %1663 = vmatpush1.bf16.msra.mxu0 0
    %1664 = vmatprep.subr.bf16.mxu0 0
    %1665 = vmatpush1.bf16.msra.mxu0 0
    %1666 = vmatprep.subr.bf16.mxu0 0
    %1667 = vmatpush1.bf16.msra.mxu0 0
    %1668 = vmatprep.subr.bf16.mxu0 0
    %1669 = vmatpush1.bf16.msra.mxu0 0
    %1670 = vmatprep.subr.bf16.mxu0 0
    %1671 = vmatpush1.bf16.msra.mxu0 0
    %1672 = vmatprep.mubr.bf16.mxu0 0
    %1673 = vmatmul.mubr.bf16.gmra.mrb[0].mxu0 %v1635
    %v1674 = vpop.f32.mrb[0].mxu0
    %v1675 = vadd.f32 %v1609, %v1674
    %v1676 = vpop.f32.mrb[0].mxu0
    %v1677 = vpop.f32.mrb[0].mxu0
    %v1678 = vadd.f32 %v1609, %v1677
    %v1679 = vpop.f32.mrb[0].mxu0
    %1680 = vmatprep.mubr.bf16.mxu0 0
    %1681 = vmatmul.mubr.bf16.gmra.mrb[0].mxu0 %v1638
    %v1682 = vpop.f32.mrb[0].mxu0
    %v1683 = vadd.f32 %v1609, %v1682
    %v1684 = vpop.f32.mrb[0].mxu0
    %v1685 = vpop.f32.mrb[0].mxu0
    %v1686 = vadd.f32 %v1609, %v1685
    %v1687 = vpop.f32.mrb[0].mxu0
    %1688 = vdwg.mxu0
    %v1689 = vadd.f32 %v1508, %v1675
    %v1690 = vadd.f32 %v1509, %v1678
    %v1691 = vadd.f32 %v1510, %v1683
    %v1692 = vadd.f32 %v1511, %v1686
    %v1693 = vsel %vm145, %v1689, 0.0
    %1694 = vadd.xlane.f32.xlu0 %v1693
    %v1695 = vpop.xlane.xlu0 %1694
    %v1696 = vsel %vm145, %v1690, 0.0
    %1697 = vadd.xlane.f32.xlu0 %v1696
    %v1698 = vpop.xlane.xlu0 %1697
    %v1699 = vsel %vm145, %v1691, 0.0
    %1700 = vadd.xlane.f32.xlu0 %v1699
    %v1701 = vpop.xlane.xlu0 %1700
    %v1702 = vsel %vm145, %v1692, 0.0
    %1703 = vadd.xlane.f32.xlu0 %v1702
    %v1704 = vpop.xlane.xlu0 %1703
    %v1705 = vmul.f32 %v1695, %v566
    %v1706 = vmul.f32 %v1698, %v566
    %v1707 = vmul.f32 %v1701, %v566
    %v1708 = vmul.f32 %v1704, %v566
    %v1709 = vsub.f32 %v1689, %v1705
    %v1710 = vsub.f32 %v1690, %v1706
    %v1711 = vsub.f32 %v1691, %v1707
    %v1712 = vsub.f32 %v1692, %v1708
    %v1713 = vmul.f32 %v1709, %v1709
    %v1714 = vmul.f32 %v1710, %v1710
    %v1715 = vmul.f32 %v1711, %v1711
    %v1716 = vmul.f32 %v1712, %v1712
    %v1717 = vsel %vm145, %v1713, 0.0
    %1718 = vadd.xlane.f32.xlu0 %v1717
    %v1719 = vpop.xlane.xlu0 %1718
    %v1720 = vsel %vm145, %v1714, 0.0
    %1721 = vadd.xlane.f32.xlu0 %v1720
    %v1722 = vpop.xlane.xlu0 %1721
    %v1723 = vsel %vm145, %v1715, 0.0
    %1724 = vadd.xlane.f32.xlu0 %v1723
    %v1725 = vpop.xlane.xlu0 %1724
    %v1726 = vsel %vm145, %v1716, 0.0
    %1727 = vadd.xlane.f32.xlu0 %v1726
    %v1728 = vpop.xlane.xlu0 %1727
    %v1729 = vmul.f32 %v1719, %v566
    %v1730 = vmul.f32 %v1722, %v566
    %v1731 = vmul.f32 %v1725, %v566
    %v1732 = vmul.f32 %v1728, %v566
    %v1733 = vadd.f32 %v1729, 1e-05
    %v1734 = vadd.f32 %v1730, 1e-05
    %v1735 = vadd.f32 %v1731, 1e-05
    %v1736 = vadd.f32 %v1732, 1e-05
    %v1737 = vrsqrt.pop %v1733
    %v1738 = vrsqrt.pop %v1734
    %v1739 = vrsqrt.pop %v1735
    %v1740 = vrsqrt.pop %v1736
    %v1741 = vmul.f32 %v1709, %v1737
    %v1742 = vmul.f32 %v1710, %v1738
    %v1743 = vmul.f32 %v1711, %v1739
    %v1744 = vmul.f32 %v1712, %v1740
    %v1745 = vlaneseq
    %v1746 = vshrl.u32 %v1745, 7
    %v1747 = vsub.s32 4, %v1746
    %v1748 = vrot.slane %v623, %v1747
    %v1749 = vmul.f32 %v1741, %v1748
    %v1750 = vmul.f32 %v1742, %v1748
    %v1751 = vmul.f32 %v1743, %v1748
    %v1752 = vmul.f32 %v1744, %v1748
    %v1753 = vlaneseq
    %v1754 = vshrl.u32 %v1753, 7
    %v1755 = vsub.s32 5, %v1754
    %v1756 = vrot.slane %v623, %v1755
    %v1757 = vadd.f32 %v1749, %v1756
    %v1758 = vadd.f32 %v1750, %v1756
    %v1759 = vadd.f32 %v1751, %v1756
    %v1760 = vadd.f32 %v1752, %v1756
    %s1761 = scalar_lea.vmem %s10, 8
    %v1762 = vld [vmem:[%s1761] sm:$0x3f]
    %s1763 = scalar_lea.vmem %s4, 16
    %v1764 = vld [vmem:[%s1763] sm:$0xf]
    %v1765 = vld [vmem:[%s1763 + $0x4] sm:$0xf]
    %v1766 = vld [vmem:[%s1763 + $0x8] sm:$0xf]
    %v1767 = vld [vmem:[%s1763 + $0xc] sm:$0xf]
    %v1768 = vpack.c.bf16 %v1758, %v1757
    %v1769 = vpack.c.bf16 %v1760, %v1759
    %s1770 = scalar_lea.vmem %s5, 1
    %v1771 = vld [vmem:[%s1770] sm:$0x1]
    %v1773 = vlaneseq
    %v1774 = vshrl.u32 %v1773, 7
    %v1775 = vsub.s32 0, %v1774
    %v1776 = vrot.slane %v1771, %v1775
    %v1782 = vunpack.c.l.b16 %v1764
    %v1783 = vunpack.c.l.b16 %v1765
    %v1784 = vunpack.c.l.b16 %v1766
    %v1785 = vunpack.c.l.b16 %v1767
    %v1786 = vpack.c.b16 %v1783, %v1782
    %v1787 = vpack.c.b16 %v1785, %v1784
    %v1791 = vsel %vm145, %v1768, 0
    %v1794 = vsel %vm145, %v1769, 0
    %1796 = vmatprep.subr.bf16.mxu0 0
    %1797 = vmatpush1.bf16.msra.mxu0 %v1786
    %1798 = vmatprep.subr.bf16.mxu0 0
    %1799 = vmatpush1.bf16.msra.mxu0 %v1787
    %1800 = vmatprep.subr.bf16.mxu0 0
    %1801 = vmatpush1.bf16.msra.mxu0 0
    %1802 = vmatprep.subr.bf16.mxu0 0
    %1803 = vmatpush1.bf16.msra.mxu0 0
    %1804 = vmatprep.subr.bf16.mxu0 0
    %1805 = vmatpush1.bf16.msra.mxu0 0
    %1806 = vmatprep.subr.bf16.mxu0 0
    %1807 = vmatpush1.bf16.msra.mxu0 0
    %1808 = vmatprep.subr.bf16.mxu0 0
    %1809 = vmatpush1.bf16.msra.mxu0 0
    %1810 = vmatprep.subr.bf16.mxu0 0
    %1811 = vmatpush1.bf16.msra.mxu0 0
    %1812 = vmatprep.subr.bf16.mxu0 0
    %1813 = vmatpush1.bf16.msra.mxu0 0
    %1814 = vmatprep.subr.bf16.mxu0 0
    %1815 = vmatpush1.bf16.msra.mxu0 0
    %1816 = vmatprep.subr.bf16.mxu0 0
    %1817 = vmatpush1.bf16.msra.mxu0 0
    %1818 = vmatprep.subr.bf16.mxu0 0
    %1819 = vmatpush1.bf16.msra.mxu0 0
    %1820 = vmatprep.subr.bf16.mxu0 0
    %1821 = vmatpush1.bf16.msra.mxu0 0
    %1822 = vmatprep.subr.bf16.mxu0 0
    %1823 = vmatpush1.bf16.msra.mxu0 0
    %1824 = vmatprep.subr.bf16.mxu0 0
    %1825 = vmatpush1.bf16.msra.mxu0 0
    %1826 = vmatprep.subr.bf16.mxu0 0
    %1827 = vmatpush1.bf16.msra.mxu0 0
    %1828 = vmatprep.mubr.bf16.mxu0 0
    %1829 = vmatmul.mubr.bf16.gmra.mrb[0].mxu0 %v1791
    %v1830 = vpop.f32.mrb[0].mxu0
    %v1831 = vadd.f32 %v1776, %v1830
    %v1832 = vpop.f32.mrb[0].mxu0
    %v1833 = vpop.f32.mrb[0].mxu0
    %v1834 = vadd.f32 %v1776, %v1833
    %v1835 = vpop.f32.mrb[0].mxu0
    %1836 = vmatprep.mubr.bf16.mxu0 0
    %1837 = vmatmul.mubr.bf16.gmra.mrb[0].mxu0 %v1794
    %v1838 = vpop.f32.mrb[0].mxu0
    %v1839 = vadd.f32 %v1776, %v1838
    %v1840 = vpop.f32.mrb[0].mxu0
    %v1841 = vpop.f32.mrb[0].mxu0
    %v1842 = vadd.f32 %v1776, %v1841
    %v1843 = vpop.f32.mrb[0].mxu0
    %1844 = vdwg.mxu0
    %v1845 = vmul.f32 %v1831, 0.35355338
    %v1846 = vmul.f32 %v1834, 0.35355338
    %v1847 = vmul.f32 %v1839, 0.35355338
    %v1848 = vmul.f32 %v1842, 0.35355338
    %v1849 = vmul.f32 %v1845, %v45
    %v1850 = vmul.f32 %v1846, %v46
    %v1851 = vmul.f32 %v1845, %v47
    %v1852 = vmul.f32 %v1846, %v48
    %v1853 = vmul.f32 %v1845, %v49
    %v1854 = vmul.f32 %v1846, %v50
    %v1855 = vmul.f32 %v1845, %v51
    %v1856 = vmul.f32 %v1846, %v52
    %1859 = vrot.lane.b32.xlu0 %v1831, 96
    %v1860 = vpop.permute.xlu0 %1859
    %1861 = vrot.lane.b32.xlu0 %v1834, 96
    %v1862 = vpop.permute.xlu0 %1861
    %1865 = vxpose.xlu0.b32.start [1/16] %v1860, 128
    %1866 = vxpose.xlu0.b32.cont [2/16] %v1862, 128
    %1867 = vxpose.xlu0.b32.cont [3/16] 0.0, 128
    %1868 = vxpose.xlu0.b32.cont [4/16] 0.0, 128
    %1869 = vxpose.xlu0.b32.cont [5/16] 0.0, 128
    %1870 = vxpose.xlu0.b32.cont [6/16] 0.0, 128
    %1871 = vxpose.xlu0.b32.cont [7/16] 0.0, 128
    %1872 = vxpose.xlu0.b32.cont [8/16] 0.0, 128
    %1873 = vxpose.xlu0.b32.cont [9/16] 0.0, 128
    %1874 = vxpose.xlu0.b32.cont [10/16] 0.0, 128
    %1875 = vxpose.xlu0.b32.cont [11/16] 0.0, 128
    %1876 = vxpose.xlu0.b32.cont [12/16] 0.0, 128
    %1877 = vxpose.xlu0.b32.cont [13/16] 0.0, 128
    %1878 = vxpose.xlu0.b32.cont [14/16] 0.0, 128
    %1879 = vxpose.xlu0.b32.cont [15/16] 0.0, 128
    %1880 = vxpose.xlu0.b32.end [16/16] 0.0, 128
    %v1881 = vpop.trf.xlu0
    %v1882 = vpop.trf.xlu0
    %v1883 = vpop.trf.xlu0
    %v1884 = vpop.trf.xlu0
    %v1885 = vpop.trf.xlu0
    %v1886 = vpop.trf.xlu0
    %v1887 = vpop.trf.xlu0
    %v1888 = vpop.trf.xlu0
    %v1889 = vpop.trf.xlu0
    %v1890 = vpop.trf.xlu0
    %v1891 = vpop.trf.xlu0
    %v1892 = vpop.trf.xlu0
    %v1893 = vpop.trf.xlu0
    %v1894 = vpop.trf.xlu0
    %v1895 = vpop.trf.xlu0
    %v1896 = vpop.trf.xlu0
    %v1897 = vpack.c.bf16 %v1850, %v1849
    %v1898 = vpack.c.bf16 %v1852, %v1851
    %v1899 = vpack.c.bf16 %v1854, %v1853
    %v1900 = vpack.c.bf16 %v1856, %v1855
    %v1901 = vpack.c.bf16 %v1882, %v1881
    %v1902 = vpack.c.bf16 %v1884, %v1883
    %v1904 = vsel %vm145, %v1897, 0
    %v1907 = vsel %vm145, %v1898, 0
    %v1910 = vsel %vm145, %v1899, 0
    %v1913 = vsel %vm145, %v1900, 0
    %1915 = vmatprep.subr.bf16.mxu0 0
    %1916 = vmatpush1.bf16.msra.mxu0 %v1901
    %1917 = vmatprep.subr.bf16.mxu0 0
    %1918 = vmatpush1.bf16.msra.mxu0 %v1902
    %1919 = vmatprep.subr.bf16.mxu0 0
    %1920 = vmatpush1.bf16.msra.mxu0 0
    %1921 = vmatprep.subr.bf16.mxu0 0
    %1922 = vmatpush1.bf16.msra.mxu0 0
    %1923 = vmatprep.subr.bf16.mxu0 0
    %1924 = vmatpush1.bf16.msra.mxu0 0
    %1925 = vmatprep.subr.bf16.mxu0 0
    %1926 = vmatpush1.bf16.msra.mxu0 0
    %1927 = vmatprep.subr.bf16.mxu0 0
    %1928 = vmatpush1.bf16.msra.mxu0 0
    %1929 = vmatprep.subr.bf16.mxu0 0
    %1930 = vmatpush1.bf16.msra.mxu0 0
    %1931 = vmatprep.subr.bf16.mxu0 0
    %1932 = vmatpush1.bf16.msra.mxu0 0
    %1933 = vmatprep.subr.bf16.mxu0 0
    %1934 = vmatpush1.bf16.msra.mxu0 0
    %1935 = vmatprep.subr.bf16.mxu0 0
    %1936 = vmatpush1.bf16.msra.mxu0 0
    %1937 = vmatprep.subr.bf16.mxu0 0
    %1938 = vmatpush1.bf16.msra.mxu0 0
    %1939 = vmatprep.subr.bf16.mxu0 0
    %1940 = vmatpush1.bf16.msra.mxu0 0
    %1941 = vmatprep.subr.bf16.mxu0 0
    %1942 = vmatpush1.bf16.msra.mxu0 0
    %1943 = vmatprep.subr.bf16.mxu0 0
    %1944 = vmatpush1.bf16.msra.mxu0 0
    %1945 = vmatprep.subr.bf16.mxu0 0
    %1946 = vmatpush1.bf16.msra.mxu0 0
    %1947 = vmatprep.mubr.bf16.mxu0 0
    %1948 = vmatmul.mubr.bf16.gmra.mrb[0].mxu0 %v1904
    %v1949 = vpop.f32.mrb[0].mxu0
    %v1950 = vadd.f32 0.0, %v1949
    %v1951 = vpop.f32.mrb[0].mxu0
    %v1952 = vpop.f32.mrb[0].mxu0
    %v1953 = vadd.f32 0.0, %v1952
    %v1954 = vpop.f32.mrb[0].mxu0
    %1955 = vmatprep.mubr.bf16.mxu0 0
    %1956 = vmatmul.mubr.bf16.gmra.mrb[0].mxu0 %v1907
    %v1957 = vpop.f32.mrb[0].mxu0
    %v1958 = vadd.f32 0.0, %v1957
    %v1959 = vpop.f32.mrb[0].mxu0
    %v1960 = vpop.f32.mrb[0].mxu0
    %v1961 = vadd.f32 0.0, %v1960
    %v1962 = vpop.f32.mrb[0].mxu0
    %1963 = vmatprep.mubr.bf16.mxu0 0
    %1964 = vmatmul.mubr.bf16.gmra.mrb[0].mxu0 %v1910
    %v1965 = vpop.f32.mrb[0].mxu0
    %v1966 = vadd.f32 0.0, %v1965
    %v1967 = vpop.f32.mrb[0].mxu0
    %v1968 = vpop.f32.mrb[0].mxu0
    %v1969 = vadd.f32 0.0, %v1968
    %v1970 = vpop.f32.mrb[0].mxu0
    %1971 = vmatprep.mubr.bf16.mxu0 0
    %1972 = vmatmul.mubr.bf16.gmra.mrb[0].mxu0 %v1913
    %v1973 = vpop.f32.mrb[0].mxu0
    %v1974 = vadd.f32 0.0, %v1973
    %v1975 = vpop.f32.mrb[0].mxu0
    %v1976 = vpop.f32.mrb[0].mxu0
    %v1977 = vadd.f32 0.0, %v1976
    %v1978 = vpop.f32.mrb[0].mxu0
    %1979 = vdwg.mxu0
    %v1980 = vsel %vm839, %v1950, -inf
    %1981 = vmax.xlane.f32.xlu0 %v1980
    %v1982 = vpop.xlane.xlu0 %1981
    %v1983 = vsel %vm839, %v1953, -inf
    %1984 = vmax.xlane.f32.xlu0 %v1983
    %v1985 = vpop.xlane.xlu0 %1984
    %v1986 = vsel %vm839, %v1958, -inf
    %1987 = vmax.xlane.f32.xlu0 %v1986
    %v1988 = vpop.xlane.xlu0 %1987
    %v1989 = vsel %vm839, %v1961, -inf
    %1990 = vmax.xlane.f32.xlu0 %v1989
    %v1991 = vpop.xlane.xlu0 %1990
    %v1992 = vsel %vm839, %v1966, -inf
    %1993 = vmax.xlane.f32.xlu0 %v1992
    %v1994 = vpop.xlane.xlu0 %1993
    %v1995 = vsel %vm839, %v1969, -inf
    %1996 = vmax.xlane.f32.xlu0 %v1995
    %v1997 = vpop.xlane.xlu0 %1996
    %v1998 = vsel %vm839, %v1974, -inf
    %1999 = vmax.xlane.f32.xlu0 %v1998
    %v2000 = vpop.xlane.xlu0 %1999
    %v2001 = vsel %vm839, %v1977, -inf
    %2002 = vmax.xlane.f32.xlu0 %v2001
    %v2003 = vpop.xlane.xlu0 %2002
    %v2004 = vsub.f32 %v1950, %v1982
    %v2005 = vsub.f32 %v1953, %v1985
    %v2006 = vsub.f32 %v1958, %v1988
    %v2007 = vsub.f32 %v1961, %v1991
    %v2008 = vsub.f32 %v1966, %v1994
    %v2009 = vsub.f32 %v1969, %v1997
    %v2010 = vsub.f32 %v1974, %v2000
    %v2011 = vsub.f32 %v1977, %v2003
    %v2012 = vmul.f32 %v2004, 1.442695
    %v2013 = vpow.pop %v2012
    %v2014 = vmul.f32 %v2005, 1.442695
    %v2015 = vpow.pop %v2014
    %v2016 = vmul.f32 %v2006, 1.442695
    %v2017 = vpow.pop %v2016
    %v2018 = vmul.f32 %v2007, 1.442695
    %v2019 = vpow.pop %v2018
    %v2020 = vmul.f32 %v2008, 1.442695
    %v2021 = vpow.pop %v2020
    %v2022 = vmul.f32 %v2009, 1.442695
    %v2023 = vpow.pop %v2022
    %v2024 = vmul.f32 %v2010, 1.442695
    %v2025 = vpow.pop %v2024
    %v2026 = vmul.f32 %v2011, 1.442695
    %v2027 = vpow.pop %v2026
    %v2028 = vsel %vm839, %v2013, 0.0
    %2029 = vadd.xlane.f32.xlu0 %v2028
    %v2030 = vpop.xlane.xlu0 %2029
    %v2031 = vsel %vm839, %v2015, 0.0
    %2032 = vadd.xlane.f32.xlu0 %v2031
    %v2033 = vpop.xlane.xlu0 %2032
    %v2034 = vsel %vm839, %v2017, 0.0
    %2035 = vadd.xlane.f32.xlu0 %v2034
    %v2036 = vpop.xlane.xlu0 %2035
    %v2037 = vsel %vm839, %v2019, 0.0
    %2038 = vadd.xlane.f32.xlu0 %v2037
    %v2039 = vpop.xlane.xlu0 %2038
    %v2040 = vsel %vm839, %v2021, 0.0
    %2041 = vadd.xlane.f32.xlu0 %v2040
    %v2042 = vpop.xlane.xlu0 %2041
    %v2043 = vsel %vm839, %v2023, 0.0
    %2044 = vadd.xlane.f32.xlu0 %v2043
    %v2045 = vpop.xlane.xlu0 %2044
    %v2046 = vsel %vm839, %v2025, 0.0
    %2047 = vadd.xlane.f32.xlu0 %v2046
    %v2048 = vpop.xlane.xlu0 %2047
    %v2049 = vsel %vm839, %v2027, 0.0
    %2050 = vadd.xlane.f32.xlu0 %v2049
    %v2051 = vpop.xlane.xlu0 %2050
    %v2052 = vrcp.pop %v2030
    %v2053 = vrcp.pop %v2033
    %v2054 = vrcp.pop %v2036
    %v2055 = vrcp.pop %v2039
    %v2056 = vrcp.pop %v2042
    %v2057 = vrcp.pop %v2045
    %v2058 = vrcp.pop %v2048
    %v2059 = vrcp.pop %v2051
    %v2060 = vmul.f32 %v2013, %v2052
    %v2061 = vmul.f32 %v2015, %v2053
    %v2062 = vmul.f32 %v2017, %v2054
    %v2063 = vmul.f32 %v2019, %v2055
    %v2064 = vmul.f32 %v2021, %v2056
    %v2065 = vmul.f32 %v2023, %v2057
    %v2066 = vmul.f32 %v2025, %v2058
    %v2067 = vmul.f32 %v2027, %v2059
    %v2068 = vpack.c.bf16 %v2061, %v2060
    %v2069 = vpack.c.bf16 %v2063, %v2062
    %v2070 = vpack.c.bf16 %v2065, %v2064
    %v2071 = vpack.c.bf16 %v2067, %v2066
    %v2072 = vpack.c.bf16 %v1834, %v1831
    %2074 = vrot.lane.b32.xlu0 %v2072, 64
    %v2075 = vpop.permute.xlu0 %2074
    %v2078 = vsel %vm839, %v2068, 0
    %v2081 = vsel %vm839, %v2069, 0
    %v2084 = vsel %vm839, %v2070, 0
    %v2087 = vsel %vm839, %v2071, 0
    %2089 = vmatprep.subr.bf16.mxu0 0
    %2090 = vmatpush1.bf16.msra.mxu0 %v2075
    %2091 = vmatprep.subr.bf16.mxu0 0
    %2092 = vmatpush1.bf16.msra.mxu0 0
    %2093 = vmatprep.subr.bf16.mxu0 0
    %2094 = vmatpush1.bf16.msra.mxu0 0
    %2095 = vmatprep.subr.bf16.mxu0 0
    %2096 = vmatpush1.bf16.msra.mxu0 0
    %2097 = vmatprep.subr.bf16.mxu0 0
    %2098 = vmatpush1.bf16.msra.mxu0 0
    %2099 = vmatprep.subr.bf16.mxu0 0
    %2100 = vmatpush1.bf16.msra.mxu0 0
    %2101 = vmatprep.subr.bf16.mxu0 0
    %2102 = vmatpush1.bf16.msra.mxu0 0
    %2103 = vmatprep.subr.bf16.mxu0 0
    %2104 = vmatpush1.bf16.msra.mxu0 0
    %2105 = vmatprep.subr.bf16.mxu0 0
    %2106 = vmatpush1.bf16.msra.mxu0 0
    %2107 = vmatprep.subr.bf16.mxu0 0
    %2108 = vmatpush1.bf16.msra.mxu0 0
    %2109 = vmatprep.subr.bf16.mxu0 0
    %2110 = vmatpush1.bf16.msra.mxu0 0
    %2111 = vmatprep.subr.bf16.mxu0 0
    %2112 = vmatpush1.bf16.msra.mxu0 0
    %2113 = vmatprep.subr.bf16.mxu0 0
    %2114 = vmatpush1.bf16.msra.mxu0 0
    %2115 = vmatprep.subr.bf16.mxu0 0
    %2116 = vmatpush1.bf16.msra.mxu0 0
    %2117 = vmatprep.subr.bf16.mxu0 0
    %2118 = vmatpush1.bf16.msra.mxu0 0
    %2119 = vmatprep.subr.bf16.mxu0 0
    %2120 = vmatpush1.bf16.msra.mxu0 0
    %2121 = vmatprep.mubr.bf16.mxu0 0
    %2122 = vmatmul.mubr.bf16.gmra.mrb[0].mxu0 %v2078
    %v2123 = vpop.f32.mrb[0].mxu0
    %v2124 = vadd.f32 0.0, %v2123
    %v2125 = vpop.f32.mrb[0].mxu0
    %v2126 = vpop.f32.mrb[0].mxu0
    %v2127 = vadd.f32 0.0, %v2126
    %v2128 = vpop.f32.mrb[0].mxu0
    %2129 = vmatprep.mubr.bf16.mxu0 0
    %2130 = vmatmul.mubr.bf16.gmra.mrb[0].mxu0 %v2081
    %v2131 = vpop.f32.mrb[0].mxu0
    %v2132 = vadd.f32 0.0, %v2131
    %v2133 = vpop.f32.mrb[0].mxu0
    %v2134 = vpop.f32.mrb[0].mxu0
    %v2135 = vadd.f32 0.0, %v2134
    %v2136 = vpop.f32.mrb[0].mxu0
    %2137 = vmatprep.mubr.bf16.mxu0 0
    %2138 = vmatmul.mubr.bf16.gmra.mrb[0].mxu0 %v2084
    %v2139 = vpop.f32.mrb[0].mxu0
    %v2140 = vadd.f32 0.0, %v2139
    %v2141 = vpop.f32.mrb[0].mxu0
    %v2142 = vpop.f32.mrb[0].mxu0
    %v2143 = vadd.f32 0.0, %v2142
    %v2144 = vpop.f32.mrb[0].mxu0
    %2145 = vmatprep.mubr.bf16.mxu0 0
    %2146 = vmatmul.mubr.bf16.gmra.mrb[0].mxu0 %v2087
    %v2147 = vpop.f32.mrb[0].mxu0
    %v2148 = vadd.f32 0.0, %v2147
    %v2149 = vpop.f32.mrb[0].mxu0
    %v2150 = vpop.f32.mrb[0].mxu0
    %v2151 = vadd.f32 0.0, %v2150
    %v2152 = vpop.f32.mrb[0].mxu0
    %2153 = vdwg.mxu0
    %v2154 = vmul.f32 %v2124, %v45
    %v2155 = vmul.f32 %v2127, %v46
    %v2156 = vmul.f32 %v2132, %v47
    %v2157 = vmul.f32 %v2135, %v48
    %v2158 = vmul.f32 %v2140, %v49
    %v2159 = vmul.f32 %v2143, %v50
    %v2160 = vmul.f32 %v2148, %v51
    %v2161 = vmul.f32 %v2151, %v52
    %v2162 = vsel %vm145, %v2154, 0.0
    %v2163 = vsel %vm145, %v2156, 0.0
    %v2164 = vadd.f32 %v2162, %v2163
    %v2165 = vsel %vm145, %v2158, 0.0
    %v2166 = vadd.f32 %v2164, %v2165
    %v2167 = vsel %vm145, %v2160, 0.0
    %v2168 = vadd.f32 %v2166, %v2167
    %v2169 = vsel %vm145, %v2155, 0.0
    %v2170 = vsel %vm145, %v2157, 0.0
    %v2171 = vadd.f32 %v2169, %v2170
    %v2172 = vsel %vm145, %v2159, 0.0
    %v2173 = vadd.f32 %v2171, %v2172
    %v2174 = vsel %vm145, %v2161, 0.0
    %v2175 = vadd.f32 %v2173, %v2174
    %v2176 = vmul.f32 %v1847, %v45
    %v2177 = vmul.f32 %v1848, %v46
    %v2178 = vmul.f32 %v1847, %v47
    %v2179 = vmul.f32 %v1848, %v48
    %v2180 = vmul.f32 %v1847, %v49
    %v2181 = vmul.f32 %v1848, %v50
    %v2182 = vmul.f32 %v1847, %v51
    %v2183 = vmul.f32 %v1848, %v52
    %2186 = vrot.lane.b32.xlu0 %v1839, 96
    %v2187 = vpop.permute.xlu0 %2186
    %2188 = vrot.lane.b32.xlu0 %v1842, 96
    %v2189 = vpop.permute.xlu0 %2188
    %2192 = vxpose.xlu0.b32.start [1/16] %v2187, 128
    %2193 = vxpose.xlu0.b32.cont [2/16] %v2189, 128
    %2194 = vxpose.xlu0.b32.cont [3/16] 0.0, 128
    %2195 = vxpose.xlu0.b32.cont [4/16] 0.0, 128
    %2196 = vxpose.xlu0.b32.cont [5/16] 0.0, 128
    %2197 = vxpose.xlu0.b32.cont [6/16] 0.0, 128
    %2198 = vxpose.xlu0.b32.cont [7/16] 0.0, 128
    %2199 = vxpose.xlu0.b32.cont [8/16] 0.0, 128
    %2200 = vxpose.xlu0.b32.cont [9/16] 0.0, 128
    %2201 = vxpose.xlu0.b32.cont [10/16] 0.0, 128
    %2202 = vxpose.xlu0.b32.cont [11/16] 0.0, 128
    %2203 = vxpose.xlu0.b32.cont [12/16] 0.0, 128
    %2204 = vxpose.xlu0.b32.cont [13/16] 0.0, 128
    %2205 = vxpose.xlu0.b32.cont [14/16] 0.0, 128
    %2206 = vxpose.xlu0.b32.cont [15/16] 0.0, 128
    %2207 = vxpose.xlu0.b32.end [16/16] 0.0, 128
    %v2208 = vpop.trf.xlu0
    %v2209 = vpop.trf.xlu0
    %v2210 = vpop.trf.xlu0
    %v2211 = vpop.trf.xlu0
    %v2212 = vpop.trf.xlu0
    %v2213 = vpop.trf.xlu0
    %v2214 = vpop.trf.xlu0
    %v2215 = vpop.trf.xlu0
    %v2216 = vpop.trf.xlu0
    %v2217 = vpop.trf.xlu0
    %v2218 = vpop.trf.xlu0
    %v2219 = vpop.trf.xlu0
    %v2220 = vpop.trf.xlu0
    %v2221 = vpop.trf.xlu0
    %v2222 = vpop.trf.xlu0
    %v2223 = vpop.trf.xlu0
    %v2224 = vpack.c.bf16 %v2177, %v2176
    %v2225 = vpack.c.bf16 %v2179, %v2178
    %v2226 = vpack.c.bf16 %v2181, %v2180
    %v2227 = vpack.c.bf16 %v2183, %v2182
    %v2228 = vpack.c.bf16 %v2209, %v2208
    %v2229 = vpack.c.bf16 %v2211, %v2210
    %v2231 = vsel %vm145, %v2224, 0
    %v2234 = vsel %vm145, %v2225, 0
    %v2237 = vsel %vm145, %v2226, 0
    %v2240 = vsel %vm145, %v2227, 0
    %2242 = vmatprep.subr.bf16.mxu0 0
    %2243 = vmatpush1.bf16.msra.mxu0 %v2228
    %2244 = vmatprep.subr.bf16.mxu0 0
    %2245 = vmatpush1.bf16.msra.mxu0 %v2229
    %2246 = vmatprep.subr.bf16.mxu0 0
    %2247 = vmatpush1.bf16.msra.mxu0 0
    %2248 = vmatprep.subr.bf16.mxu0 0
    %2249 = vmatpush1.bf16.msra.mxu0 0
    %2250 = vmatprep.subr.bf16.mxu0 0
    %2251 = vmatpush1.bf16.msra.mxu0 0
    %2252 = vmatprep.subr.bf16.mxu0 0
    %2253 = vmatpush1.bf16.msra.mxu0 0
    %2254 = vmatprep.subr.bf16.mxu0 0
    %2255 = vmatpush1.bf16.msra.mxu0 0
    %2256 = vmatprep.subr.bf16.mxu0 0
    %2257 = vmatpush1.bf16.msra.mxu0 0
    %2258 = vmatprep.subr.bf16.mxu0 0
    %2259 = vmatpush1.bf16.msra.mxu0 0
    %2260 = vmatprep.subr.bf16.mxu0 0
    %2261 = vmatpush1.bf16.msra.mxu0 0
    %2262 = vmatprep.subr.bf16.mxu0 0
    %2263 = vmatpush1.bf16.msra.mxu0 0
    %2264 = vmatprep.subr.bf16.mxu0 0
    %2265 = vmatpush1.bf16.msra.mxu0 0
    %2266 = vmatprep.subr.bf16.mxu0 0
    %2267 = vmatpush1.bf16.msra.mxu0 0
    %2268 = vmatprep.subr.bf16.mxu0 0
    %2269 = vmatpush1.bf16.msra.mxu0 0
    %2270 = vmatprep.subr.bf16.mxu0 0
    %2271 = vmatpush1.bf16.msra.mxu0 0
    %2272 = vmatprep.subr.bf16.mxu0 0
    %2273 = vmatpush1.bf16.msra.mxu0 0
    %2274 = vmatprep.mubr.bf16.mxu0 0
    %2275 = vmatmul.mubr.bf16.gmra.mrb[0].mxu0 %v2231
    %v2276 = vpop.f32.mrb[0].mxu0
    %v2277 = vadd.f32 0.0, %v2276
    %v2278 = vpop.f32.mrb[0].mxu0
    %v2279 = vpop.f32.mrb[0].mxu0
    %v2280 = vadd.f32 0.0, %v2279
    %v2281 = vpop.f32.mrb[0].mxu0
    %2282 = vmatprep.mubr.bf16.mxu0 0
    %2283 = vmatmul.mubr.bf16.gmra.mrb[0].mxu0 %v2234
    %v2284 = vpop.f32.mrb[0].mxu0
    %v2285 = vadd.f32 0.0, %v2284
    %v2286 = vpop.f32.mrb[0].mxu0
    %v2287 = vpop.f32.mrb[0].mxu0
    %v2288 = vadd.f32 0.0, %v2287
    %v2289 = vpop.f32.mrb[0].mxu0
    %2290 = vmatprep.mubr.bf16.mxu0 0
    %2291 = vmatmul.mubr.bf16.gmra.mrb[0].mxu0 %v2237
    %v2292 = vpop.f32.mrb[0].mxu0
    %v2293 = vadd.f32 0.0, %v2292
    %v2294 = vpop.f32.mrb[0].mxu0
    %v2295 = vpop.f32.mrb[0].mxu0
    %v2296 = vadd.f32 0.0, %v2295
    %v2297 = vpop.f32.mrb[0].mxu0
    %2298 = vmatprep.mubr.bf16.mxu0 0
    %2299 = vmatmul.mubr.bf16.gmra.mrb[0].mxu0 %v2240
    %v2300 = vpop.f32.mrb[0].mxu0
    %v2301 = vadd.f32 0.0, %v2300
    %v2302 = vpop.f32.mrb[0].mxu0
    %v2303 = vpop.f32.mrb[0].mxu0
    %v2304 = vadd.f32 0.0, %v2303
    %v2305 = vpop.f32.mrb[0].mxu0
    %2306 = vdwg.mxu0
    %v2307 = vsel %vm839, %v2277, -inf
    %2308 = vmax.xlane.f32.xlu0 %v2307
    %v2309 = vpop.xlane.xlu0 %2308
    %v2310 = vsel %vm839, %v2280, -inf
    %2311 = vmax.xlane.f32.xlu0 %v2310
    %v2312 = vpop.xlane.xlu0 %2311
    %v2313 = vsel %vm839, %v2285, -inf
    %2314 = vmax.xlane.f32.xlu0 %v2313
    %v2315 = vpop.xlane.xlu0 %2314
    %v2316 = vsel %vm839, %v2288, -inf
    %2317 = vmax.xlane.f32.xlu0 %v2316
    %v2318 = vpop.xlane.xlu0 %2317
    %v2319 = vsel %vm839, %v2293, -inf
    %2320 = vmax.xlane.f32.xlu0 %v2319
    %v2321 = vpop.xlane.xlu0 %2320
    %v2322 = vsel %vm839, %v2296, -inf
    %2323 = vmax.xlane.f32.xlu0 %v2322
    %v2324 = vpop.xlane.xlu0 %2323
    %v2325 = vsel %vm839, %v2301, -inf
    %2326 = vmax.xlane.f32.xlu0 %v2325
    %v2327 = vpop.xlane.xlu0 %2326
    %v2328 = vsel %vm839, %v2304, -inf
    %2329 = vmax.xlane.f32.xlu0 %v2328
    %v2330 = vpop.xlane.xlu0 %2329
    %v2331 = vsub.f32 %v2277, %v2309
    %v2332 = vsub.f32 %v2280, %v2312
    %v2333 = vsub.f32 %v2285, %v2315
    %v2334 = vsub.f32 %v2288, %v2318
    %v2335 = vsub.f32 %v2293, %v2321
    %v2336 = vsub.f32 %v2296, %v2324
    %v2337 = vsub.f32 %v2301, %v2327
    %v2338 = vsub.f32 %v2304, %v2330
    %v2339 = vmul.f32 %v2331, 1.442695
    %v2340 = vpow.pop %v2339
    %v2341 = vmul.f32 %v2332, 1.442695
    %v2342 = vpow.pop %v2341
    %v2343 = vmul.f32 %v2333, 1.442695
    %v2344 = vpow.pop %v2343
    %v2345 = vmul.f32 %v2334, 1.442695
    %v2346 = vpow.pop %v2345
    %v2347 = vmul.f32 %v2335, 1.442695
    %v2348 = vpow.pop %v2347
    %v2349 = vmul.f32 %v2336, 1.442695
    %v2350 = vpow.pop %v2349
    %v2351 = vmul.f32 %v2337, 1.442695
    %v2352 = vpow.pop %v2351
    %v2353 = vmul.f32 %v2338, 1.442695
    %v2354 = vpow.pop %v2353
    %v2355 = vsel %vm839, %v2340, 0.0
    %2356 = vadd.xlane.f32.xlu0 %v2355
    %v2357 = vpop.xlane.xlu0 %2356
    %v2358 = vsel %vm839, %v2342, 0.0
    %2359 = vadd.xlane.f32.xlu0 %v2358
    %v2360 = vpop.xlane.xlu0 %2359
    %v2361 = vsel %vm839, %v2344, 0.0
    %2362 = vadd.xlane.f32.xlu0 %v2361
    %v2363 = vpop.xlane.xlu0 %2362
    %v2364 = vsel %vm839, %v2346, 0.0
    %2365 = vadd.xlane.f32.xlu0 %v2364
    %v2366 = vpop.xlane.xlu0 %2365
    %v2367 = vsel %vm839, %v2348, 0.0
    %2368 = vadd.xlane.f32.xlu0 %v2367
    %v2369 = vpop.xlane.xlu0 %2368
    %v2370 = vsel %vm839, %v2350, 0.0
    %2371 = vadd.xlane.f32.xlu0 %v2370
    %v2372 = vpop.xlane.xlu0 %2371
    %v2373 = vsel %vm839, %v2352, 0.0
    %2374 = vadd.xlane.f32.xlu0 %v2373
    %v2375 = vpop.xlane.xlu0 %2374
    %v2376 = vsel %vm839, %v2354, 0.0
    %2377 = vadd.xlane.f32.xlu0 %v2376
    %v2378 = vpop.xlane.xlu0 %2377
    %v2379 = vrcp.pop %v2357
    %v2380 = vrcp.pop %v2360
    %v2381 = vrcp.pop %v2363
    %v2382 = vrcp.pop %v2366
    %v2383 = vrcp.pop %v2369
    %v2384 = vrcp.pop %v2372
    %v2385 = vrcp.pop %v2375
    %v2386 = vrcp.pop %v2378
    %v2387 = vmul.f32 %v2340, %v2379
    %v2388 = vmul.f32 %v2342, %v2380
    %v2389 = vmul.f32 %v2344, %v2381
    %v2390 = vmul.f32 %v2346, %v2382
    %v2391 = vmul.f32 %v2348, %v2383
    %v2392 = vmul.f32 %v2350, %v2384
    %v2393 = vmul.f32 %v2352, %v2385
    %v2394 = vmul.f32 %v2354, %v2386
    %v2395 = vpack.c.bf16 %v2388, %v2387
    %v2396 = vpack.c.bf16 %v2390, %v2389
    %v2397 = vpack.c.bf16 %v2392, %v2391
    %v2398 = vpack.c.bf16 %v2394, %v2393
    %v2399 = vpack.c.bf16 %v1842, %v1839
    %2401 = vrot.lane.b32.xlu0 %v2399, 64
    %v2402 = vpop.permute.xlu0 %2401
    %v2405 = vsel %vm839, %v2395, 0
    %v2408 = vsel %vm839, %v2396, 0
    %v2411 = vsel %vm839, %v2397, 0
    %v2414 = vsel %vm839, %v2398, 0
    %2416 = vmatprep.subr.bf16.mxu0 0
    %2417 = vmatpush1.bf16.msra.mxu0 %v2402
    %2418 = vmatprep.subr.bf16.mxu0 0
    %2419 = vmatpush1.bf16.msra.mxu0 0
    %2420 = vmatprep.subr.bf16.mxu0 0
    %2421 = vmatpush1.bf16.msra.mxu0 0
    %2422 = vmatprep.subr.bf16.mxu0 0
    %2423 = vmatpush1.bf16.msra.mxu0 0
    %2424 = vmatprep.subr.bf16.mxu0 0
    %2425 = vmatpush1.bf16.msra.mxu0 0
    %2426 = vmatprep.subr.bf16.mxu0 0
    %2427 = vmatpush1.bf16.msra.mxu0 0
    %2428 = vmatprep.subr.bf16.mxu0 0
    %2429 = vmatpush1.bf16.msra.mxu0 0
    %2430 = vmatprep.subr.bf16.mxu0 0
    %2431 = vmatpush1.bf16.msra.mxu0 0
    %2432 = vmatprep.subr.bf16.mxu0 0
    %2433 = vmatpush1.bf16.msra.mxu0 0
    %2434 = vmatprep.subr.bf16.mxu0 0
    %2435 = vmatpush1.bf16.msra.mxu0 0
    %2436 = vmatprep.subr.bf16.mxu0 0
    %2437 = vmatpush1.bf16.msra.mxu0 0
    %2438 = vmatprep.subr.bf16.mxu0 0
    %2439 = vmatpush1.bf16.msra.mxu0 0
    %2440 = vmatprep.subr.bf16.mxu0 0
    %2441 = vmatpush1.bf16.msra.mxu0 0
    %2442 = vmatprep.subr.bf16.mxu0 0
    %2443 = vmatpush1.bf16.msra.mxu0 0
    %2444 = vmatprep.subr.bf16.mxu0 0
    %2445 = vmatpush1.bf16.msra.mxu0 0
    %2446 = vmatprep.subr.bf16.mxu0 0
    %2447 = vmatpush1.bf16.msra.mxu0 0
    %2448 = vmatprep.mubr.bf16.mxu0 0
    %2449 = vmatmul.mubr.bf16.gmra.mrb[0].mxu0 %v2405
    %v2450 = vpop.f32.mrb[0].mxu0
    %v2451 = vadd.f32 0.0, %v2450
    %v2452 = vpop.f32.mrb[0].mxu0
    %v2453 = vpop.f32.mrb[0].mxu0
    %v2454 = vadd.f32 0.0, %v2453
    %v2455 = vpop.f32.mrb[0].mxu0
    %2456 = vmatprep.mubr.bf16.mxu0 0
    %2457 = vmatmul.mubr.bf16.gmra.mrb[0].mxu0 %v2408
    %v2458 = vpop.f32.mrb[0].mxu0
    %v2459 = vadd.f32 0.0, %v2458
    %v2460 = vpop.f32.mrb[0].mxu0
    %v2461 = vpop.f32.mrb[0].mxu0
    %v2462 = vadd.f32 0.0, %v2461
    %v2463 = vpop.f32.mrb[0].mxu0
    %2464 = vmatprep.mubr.bf16.mxu0 0
    %2465 = vmatmul.mubr.bf16.gmra.mrb[0].mxu0 %v2411
    %v2466 = vpop.f32.mrb[0].mxu0
    %v2467 = vadd.f32 0.0, %v2466
    %v2468 = vpop.f32.mrb[0].mxu0
    %v2469 = vpop.f32.mrb[0].mxu0
    %v2470 = vadd.f32 0.0, %v2469
    %v2471 = vpop.f32.mrb[0].mxu0
    %2472 = vmatprep.mubr.bf16.mxu0 0
    %2473 = vmatmul.mubr.bf16.gmra.mrb[0].mxu0 %v2414
    %v2474 = vpop.f32.mrb[0].mxu0
    %v2475 = vadd.f32 0.0, %v2474
    %v2476 = vpop.f32.mrb[0].mxu0
    %v2477 = vpop.f32.mrb[0].mxu0
    %v2478 = vadd.f32 0.0, %v2477
    %v2479 = vpop.f32.mrb[0].mxu0
    %2480 = vdwg.mxu0
    %v2481 = vmul.f32 %v2451, %v45
    %v2482 = vmul.f32 %v2454, %v46
    %v2483 = vmul.f32 %v2459, %v47
    %v2484 = vmul.f32 %v2462, %v48
    %v2485 = vmul.f32 %v2467, %v49
    %v2486 = vmul.f32 %v2470, %v50
    %v2487 = vmul.f32 %v2475, %v51
    %v2488 = vmul.f32 %v2478, %v52
    %v2489 = vsel %vm145, %v2481, 0.0
    %v2490 = vsel %vm145, %v2483, 0.0
    %v2491 = vadd.f32 %v2489, %v2490
    %v2492 = vsel %vm145, %v2485, 0.0
    %v2493 = vadd.f32 %v2491, %v2492
    %v2494 = vsel %vm145, %v2487, 0.0
    %v2495 = vadd.f32 %v2493, %v2494
    %v2496 = vsel %vm145, %v2482, 0.0
    %v2497 = vsel %vm145, %v2484, 0.0
    %v2498 = vadd.f32 %v2496, %v2497
    %v2499 = vsel %vm145, %v2486, 0.0
    %v2500 = vadd.f32 %v2498, %v2499
    %v2501 = vsel %vm145, %v2488, 0.0
    %v2502 = vadd.f32 %v2500, %v2501
    %s2503 = scalar_lea.vmem %s6, 16
    %v2504 = vld [vmem:[%s2503] sm:$0xf]
    %v2505 = vld [vmem:[%s2503 + $0x4] sm:$0xf]
    %v2506 = vld [vmem:[%s2503 + $0x8] sm:$0xf]
    %v2507 = vld [vmem:[%s2503 + $0xc] sm:$0xf]
    %v2508 = vpack.c.bf16 %v2175, %v2168
    %v2509 = vpack.c.bf16 %v2502, %v2495
    %v2510 = vlaneseq
    %v2511 = vshrl.u32 %v2510, 7
    %v2512 = vsub.s32 0, %v2511
    %v2513 = vrot.slane %v1762, %v2512
    %v2518 = vunpack.c.l.b16 %v2504
    %v2519 = vunpack.c.l.b16 %v2505
    %v2520 = vunpack.c.l.b16 %v2506
    %v2521 = vunpack.c.l.b16 %v2507
    %v2522 = vpack.c.b16 %v2519, %v2518
    %v2523 = vpack.c.b16 %v2521, %v2520
    %v2527 = vsel %vm145, %v2508, 0
    %v2530 = vsel %vm145, %v2509, 0
    %2532 = vmatprep.subr.bf16.mxu0 0
    %2533 = vmatpush1.bf16.msra.mxu0 %v2522
    %2534 = vmatprep.subr.bf16.mxu0 0
    %2535 = vmatpush1.bf16.msra.mxu0 %v2523
    %2536 = vmatprep.subr.bf16.mxu0 0
    %2537 = vmatpush1.bf16.msra.mxu0 0
    %2538 = vmatprep.subr.bf16.mxu0 0
    %2539 = vmatpush1.bf16.msra.mxu0 0
    %2540 = vmatprep.subr.bf16.mxu0 0
    %2541 = vmatpush1.bf16.msra.mxu0 0
    %2542 = vmatprep.subr.bf16.mxu0 0
    %2543 = vmatpush1.bf16.msra.mxu0 0
    %2544 = vmatprep.subr.bf16.mxu0 0
    %2545 = vmatpush1.bf16.msra.mxu0 0
    %2546 = vmatprep.subr.bf16.mxu0 0
    %2547 = vmatpush1.bf16.msra.mxu0 0
    %2548 = vmatprep.subr.bf16.mxu0 0
    %2549 = vmatpush1.bf16.msra.mxu0 0
    %2550 = vmatprep.subr.bf16.mxu0 0
    %2551 = vmatpush1.bf16.msra.mxu0 0
    %2552 = vmatprep.subr.bf16.mxu0 0
    %2553 = vmatpush1.bf16.msra.mxu0 0
    %2554 = vmatprep.subr.bf16.mxu0 0
    %2555 = vmatpush1.bf16.msra.mxu0 0
    %2556 = vmatprep.subr.bf16.mxu0 0
    %2557 = vmatpush1.bf16.msra.mxu0 0
    %2558 = vmatprep.subr.bf16.mxu0 0
    %2559 = vmatpush1.bf16.msra.mxu0 0
    %2560 = vmatprep.subr.bf16.mxu0 0
    %2561 = vmatpush1.bf16.msra.mxu0 0
    %2562 = vmatprep.subr.bf16.mxu0 0
    %2563 = vmatpush1.bf16.msra.mxu0 0
    %2564 = vmatprep.mubr.bf16.mxu0 0
    %2565 = vmatmul.mubr.bf16.gmra.mrb[0].mxu0 %v2527
    %v2566 = vpop.f32.mrb[0].mxu0
    %v2567 = vadd.f32 %v2513, %v2566
    %v2568 = vpop.f32.mrb[0].mxu0
    %v2569 = vpop.f32.mrb[0].mxu0
    %v2570 = vadd.f32 %v2513, %v2569
    %v2571 = vpop.f32.mrb[0].mxu0
    %2572 = vmatprep.mubr.bf16.mxu0 0
    %2573 = vmatmul.mubr.bf16.gmra.mrb[0].mxu0 %v2530
    %v2574 = vpop.f32.mrb[0].mxu0
    %v2575 = vadd.f32 %v2513, %v2574
    %v2576 = vpop.f32.mrb[0].mxu0
    %v2577 = vpop.f32.mrb[0].mxu0
    %v2578 = vadd.f32 %v2513, %v2577
    %v2579 = vpop.f32.mrb[0].mxu0
    %2580 = vdwg.mxu0
    %v2581 = vadd.f32 %v1757, %v2567
    %v2582 = vadd.f32 %v1758, %v2570
    %v2583 = vadd.f32 %v1759, %v2575
    %v2584 = vadd.f32 %v1760, %v2578
    %v2585 = vsel %vm145, %v2581, 0.0
    %2586 = vadd.xlane.f32.xlu0 %v2585
    %v2587 = vpop.xlane.xlu0 %2586
    %v2588 = vsel %vm145, %v2582, 0.0
    %2589 = vadd.xlane.f32.xlu0 %v2588
    %v2590 = vpop.xlane.xlu0 %2589
    %v2591 = vsel %vm145, %v2583, 0.0
    %2592 = vadd.xlane.f32.xlu0 %v2591
    %v2593 = vpop.xlane.xlu0 %2592
    %v2594 = vsel %vm145, %v2584, 0.0
    %2595 = vadd.xlane.f32.xlu0 %v2594
    %v2596 = vpop.xlane.xlu0 %2595
    %v2597 = vmul.f32 %v2587, %v566
    %v2598 = vmul.f32 %v2590, %v566
    %v2599 = vmul.f32 %v2593, %v566
    %v2600 = vmul.f32 %v2596, %v566
    %v2601 = vsub.f32 %v2581, %v2597
    %v2602 = vsub.f32 %v2582, %v2598
    %v2603 = vsub.f32 %v2583, %v2599
    %v2604 = vsub.f32 %v2584, %v2600
    %v2605 = vmul.f32 %v2601, %v2601
    %v2606 = vmul.f32 %v2602, %v2602
    %v2607 = vmul.f32 %v2603, %v2603
    %v2608 = vmul.f32 %v2604, %v2604
    %v2609 = vsel %vm145, %v2605, 0.0
    %2610 = vadd.xlane.f32.xlu0 %v2609
    %v2611 = vpop.xlane.xlu0 %2610
    %v2612 = vsel %vm145, %v2606, 0.0
    %2613 = vadd.xlane.f32.xlu0 %v2612
    %v2614 = vpop.xlane.xlu0 %2613
    %v2615 = vsel %vm145, %v2607, 0.0
    %2616 = vadd.xlane.f32.xlu0 %v2615
    %v2617 = vpop.xlane.xlu0 %2616
    %v2618 = vsel %vm145, %v2608, 0.0
    %2619 = vadd.xlane.f32.xlu0 %v2618
    %v2620 = vpop.xlane.xlu0 %2619
    %v2621 = vmul.f32 %v2611, %v566
    %v2622 = vmul.f32 %v2614, %v566
    %v2623 = vmul.f32 %v2617, %v566
    %v2624 = vmul.f32 %v2620, %v566
    %v2625 = vadd.f32 %v2621, 1e-05
    %v2626 = vadd.f32 %v2622, 1e-05
    %v2627 = vadd.f32 %v2623, 1e-05
    %v2628 = vadd.f32 %v2624, 1e-05
    %v2629 = vrsqrt.pop %v2625
    %v2630 = vrsqrt.pop %v2626
    %v2631 = vrsqrt.pop %v2627
    %v2632 = vrsqrt.pop %v2628
    %v2633 = vmul.f32 %v2601, %v2629
    %v2634 = vmul.f32 %v2602, %v2630
    %v2635 = vmul.f32 %v2603, %v2631
    %v2636 = vmul.f32 %v2604, %v2632
    %v2637 = vlaneseq
    %v2638 = vshrl.u32 %v2637, 7
    %v2639 = vsub.s32 1, %v2638
    %v2640 = vrot.slane %v1762, %v2639
    %v2641 = vmul.f32 %v2633, %v2640
    %v2642 = vmul.f32 %v2634, %v2640
    %v2643 = vmul.f32 %v2635, %v2640
    %v2644 = vmul.f32 %v2636, %v2640
    %v2645 = vlaneseq
    %v2646 = vshrl.u32 %v2645, 7
    %v2647 = vsub.s32 2, %v2646
    %v2648 = vrot.slane %v1762, %v2647
    %v2649 = vadd.f32 %v2641, %v2648
    %v2650 = vadd.f32 %v2642, %v2648
    %v2651 = vadd.f32 %v2643, %v2648
    %v2652 = vadd.f32 %v2644, %v2648
    %s2653 = scalar_lea.vmem %s7, 16
    %v2654 = vld [vmem:[%s2653] sm:$0xf]
    %v2655 = vld [vmem:[%s2653 + $0x4] sm:$0xf]
    %v2656 = vld [vmem:[%s2653 + $0x8] sm:$0xf]
    %v2657 = vld [vmem:[%s2653 + $0xc] sm:$0xf]
    %v2658 = vpack.c.bf16 %v2650, %v2649
    %v2659 = vpack.c.bf16 %v2652, %v2651
    %s2660 = scalar_lea.vmem %s8, 1
    %v2661 = vld [vmem:[%s2660] sm:$0x1]
    %v2663 = vlaneseq
    %v2664 = vshrl.u32 %v2663, 7
    %v2665 = vsub.s32 0, %v2664
    %v2666 = vrot.slane %v2661, %v2665
    %v2672 = vunpack.c.l.b16 %v2654
    %v2673 = vunpack.c.l.b16 %v2655
    %v2674 = vunpack.c.l.b16 %v2656
    %v2675 = vunpack.c.l.b16 %v2657
    %v2676 = vpack.c.b16 %v2673, %v2672
    %v2677 = vpack.c.b16 %v2675, %v2674
    %v2681 = vsel %vm145, %v2658, 0
    %v2684 = vsel %vm145, %v2659, 0
    %2686 = vmatprep.subr.bf16.mxu0 0
    %2687 = vmatpush1.bf16.msra.mxu0 %v2676
    %2688 = vmatprep.subr.bf16.mxu0 0
    %2689 = vmatpush1.bf16.msra.mxu0 %v2677
    %2690 = vmatprep.subr.bf16.mxu0 0
    %2691 = vmatpush1.bf16.msra.mxu0 0
    %2692 = vmatprep.subr.bf16.mxu0 0
    %2693 = vmatpush1.bf16.msra.mxu0 0
    %2694 = vmatprep.subr.bf16.mxu0 0
    %2695 = vmatpush1.bf16.msra.mxu0 0
    %2696 = vmatprep.subr.bf16.mxu0 0
    %2697 = vmatpush1.bf16.msra.mxu0 0
    %2698 = vmatprep.subr.bf16.mxu0 0
    %2699 = vmatpush1.bf16.msra.mxu0 0
    %2700 = vmatprep.subr.bf16.mxu0 0
    %2701 = vmatpush1.bf16.msra.mxu0 0
    %2702 = vmatprep.subr.bf16.mxu0 0
    %2703 = vmatpush1.bf16.msra.mxu0 0
    %2704 = vmatprep.subr.bf16.mxu0 0
    %2705 = vmatpush1.bf16.msra.mxu0 0
    %2706 = vmatprep.subr.bf16.mxu0 0
    %2707 = vmatpush1.bf16.msra.mxu0 0
    %2708 = vmatprep.subr.bf16.mxu0 0
    %2709 = vmatpush1.bf16.msra.mxu0 0
    %2710 = vmatprep.subr.bf16.mxu0 0
    %2711 = vmatpush1.bf16.msra.mxu0 0
    %2712 = vmatprep.subr.bf16.mxu0 0
    %2713 = vmatpush1.bf16.msra.mxu0 0
    %2714 = vmatprep.subr.bf16.mxu0 0
    %2715 = vmatpush1.bf16.msra.mxu0 0
    %2716 = vmatprep.subr.bf16.mxu0 0
    %2717 = vmatpush1.bf16.msra.mxu0 0
    %2718 = vmatprep.mubr.bf16.mxu0 0
    %2719 = vmatmul.mubr.bf16.gmra.mrb[0].mxu0 %v2681
    %v2720 = vpop.f32.mrb[0].mxu0
    %v2721 = vadd.f32 %v2666, %v2720
    %v2722 = vpop.f32.mrb[0].mxu0
    %v2723 = vpop.f32.mrb[0].mxu0
    %v2724 = vadd.f32 %v2666, %v2723
    %v2725 = vpop.f32.mrb[0].mxu0
    %2726 = vmatprep.mubr.bf16.mxu0 0
    %2727 = vmatmul.mubr.bf16.gmra.mrb[0].mxu0 %v2684
    %v2728 = vpop.f32.mrb[0].mxu0
    %v2729 = vadd.f32 %v2666, %v2728
    %v2730 = vpop.f32.mrb[0].mxu0
    %v2731 = vpop.f32.mrb[0].mxu0
    %v2732 = vadd.f32 %v2666, %v2731
    %v2733 = vpop.f32.mrb[0].mxu0
    %2734 = vdwg.mxu0
    %v2735 = vmax.f32 %v2721, 0.0
    %v2736 = vmax.f32 %v2724, 0.0
    %v2737 = vmax.f32 %v2729, 0.0
    %v2738 = vmax.f32 %v2732, 0.0
    %s2739 = scalar_lea.vmem %s9, 32
    %v2740 = vld [vmem:[%s2739] sm:$0xf]
    %v2741 = vld [vmem:[%s2739 + $0x4] sm:$0xf]
    %v2742 = vld [vmem:[%s2739 + $0x8] sm:$0xf]
    %v2743 = vld [vmem:[%s2739 + $0xc] sm:$0xf]
    %v2744 = vld [vmem:[%s2739 + $0x10] sm:$0xf]
    %v2745 = vld [vmem:[%s2739 + $0x14] sm:$0xf]
    %v2746 = vld [vmem:[%s2739 + $0x18] sm:$0xf]
    %v2747 = vld [vmem:[%s2739 + $0x1c] sm:$0xf]
    %v2748 = vpack.c.bf16 %v2736, %v2735
    %v2749 = vpack.c.bf16 %v2738, %v2737
    %v2750 = vlaneseq
    %v2751 = vshrl.u32 %v2750, 7
    %v2752 = vsub.s32 3, %v2751
    %v2753 = vrot.slane %v1762, %v2752
    %v2762 = vunpack.c.l.b16 %v2740
    %v2763 = vunpack.c.l.b16 %v2741
    %v2764 = vunpack.c.l.b16 %v2742
    %v2765 = vunpack.c.l.b16 %v2743
    %v2766 = vunpack.c.l.b16 %v2744
    %v2767 = vunpack.c.l.b16 %v2745
    %v2768 = vunpack.c.l.b16 %v2746
    %v2769 = vunpack.c.l.b16 %v2747
    %v2770 = vpack.c.b16 %v2763, %v2762
    %v2771 = vpack.c.b16 %v2765, %v2764
    %v2772 = vpack.c.b16 %v2767, %v2766
    %v2773 = vpack.c.b16 %v2769, %v2768
    %v2779 = vsel %vm148, %v2748, 0
    %v2782 = vsel %vm148, %v2749, 0
    %2784 = vmatprep.subr.bf16.mxu0 0
    %2785 = vmatpush1.bf16.msra.mxu0 %v2770
    %2786 = vmatprep.subr.bf16.mxu0 0
    %2787 = vmatpush1.bf16.msra.mxu0 %v2771
    %2788 = vmatprep.subr.bf16.mxu0 0
    %2789 = vmatpush1.bf16.msra.mxu0 %v2772
    %2790 = vmatprep.subr.bf16.mxu0 0
    %2791 = vmatpush1.bf16.msra.mxu0 %v2773
    %2792 = vmatprep.subr.bf16.mxu0 0
    %2793 = vmatpush1.bf16.msra.mxu0 0
    %2794 = vmatprep.subr.bf16.mxu0 0
    %2795 = vmatpush1.bf16.msra.mxu0 0
    %2796 = vmatprep.subr.bf16.mxu0 0
    %2797 = vmatpush1.bf16.msra.mxu0 0
    %2798 = vmatprep.subr.bf16.mxu0 0
    %2799 = vmatpush1.bf16.msra.mxu0 0
    %2800 = vmatprep.subr.bf16.mxu0 0
    %2801 = vmatpush1.bf16.msra.mxu0 0
    %2802 = vmatprep.subr.bf16.mxu0 0
    %2803 = vmatpush1.bf16.msra.mxu0 0
    %2804 = vmatprep.subr.bf16.mxu0 0
    %2805 = vmatpush1.bf16.msra.mxu0 0
    %2806 = vmatprep.subr.bf16.mxu0 0
    %2807 = vmatpush1.bf16.msra.mxu0 0
    %2808 = vmatprep.subr.bf16.mxu0 0
    %2809 = vmatpush1.bf16.msra.mxu0 0
    %2810 = vmatprep.subr.bf16.mxu0 0
    %2811 = vmatpush1.bf16.msra.mxu0 0
    %2812 = vmatprep.subr.bf16.mxu0 0
    %2813 = vmatpush1.bf16.msra.mxu0 0
    %2814 = vmatprep.subr.bf16.mxu0 0
    %2815 = vmatpush1.bf16.msra.mxu0 0
    %2816 = vmatprep.mubr.bf16.mxu0 0
    %2817 = vmatmul.mubr.bf16.gmra.mrb[0].mxu0 %v2779
    %v2818 = vpop.f32.mrb[0].mxu0
    %v2819 = vadd.f32 %v2753, %v2818
    %v2820 = vpop.f32.mrb[0].mxu0
    %v2821 = vpop.f32.mrb[0].mxu0
    %v2822 = vadd.f32 %v2753, %v2821
    %v2823 = vpop.f32.mrb[0].mxu0
    %2824 = vmatprep.mubr.bf16.mxu0 0
    %2825 = vmatmul.mubr.bf16.gmra.mrb[0].mxu0 %v2782
    %v2826 = vpop.f32.mrb[0].mxu0
    %v2827 = vadd.f32 %v2753, %v2826
    %v2828 = vpop.f32.mrb[0].mxu0
    %v2829 = vpop.f32.mrb[0].mxu0
    %v2830 = vadd.f32 %v2753, %v2829
    %v2831 = vpop.f32.mrb[0].mxu0
    %2832 = vdwg.mxu0
    %v2833 = vadd.f32 %v2649, %v2819
    %v2834 = vadd.f32 %v2650, %v2822
    %v2835 = vadd.f32 %v2651, %v2827
    %v2836 = vadd.f32 %v2652, %v2830
    %v2837 = vsel %vm145, %v2833, 0.0
    %2838 = vadd.xlane.f32.xlu0 %v2837
    %v2839 = vpop.xlane.xlu0 %2838
    %v2840 = vsel %vm145, %v2834, 0.0
    %2841 = vadd.xlane.f32.xlu0 %v2840
    %v2842 = vpop.xlane.xlu0 %2841
    %v2843 = vsel %vm145, %v2835, 0.0
    %2844 = vadd.xlane.f32.xlu0 %v2843
    %v2845 = vpop.xlane.xlu0 %2844
    %v2846 = vsel %vm145, %v2836, 0.0
    %2847 = vadd.xlane.f32.xlu0 %v2846
    %v2848 = vpop.xlane.xlu0 %2847
    %v2849 = vmul.f32 %v2839, %v566
    %v2850 = vmul.f32 %v2842, %v566
    %v2851 = vmul.f32 %v2845, %v566
    %v2852 = vmul.f32 %v2848, %v566
    %v2853 = vsub.f32 %v2833, %v2849
    %v2854 = vsub.f32 %v2834, %v2850
    %v2855 = vsub.f32 %v2835, %v2851
    %v2856 = vsub.f32 %v2836, %v2852
    %v2857 = vmul.f32 %v2853, %v2853
    %v2858 = vmul.f32 %v2854, %v2854
    %v2859 = vmul.f32 %v2855, %v2855
    %v2860 = vmul.f32 %v2856, %v2856
    %v2861 = vsel %vm145, %v2857, 0.0
    %2862 = vadd.xlane.f32.xlu0 %v2861
    %v2863 = vpop.xlane.xlu0 %2862
    %v2864 = vsel %vm145, %v2858, 0.0
    %2865 = vadd.xlane.f32.xlu0 %v2864
    %v2866 = vpop.xlane.xlu0 %2865
    %v2867 = vsel %vm145, %v2859, 0.0
    %2868 = vadd.xlane.f32.xlu0 %v2867
    %v2869 = vpop.xlane.xlu0 %2868
    %v2870 = vsel %vm145, %v2860, 0.0
    %2871 = vadd.xlane.f32.xlu0 %v2870
    %v2872 = vpop.xlane.xlu0 %2871
    %v2873 = vmul.f32 %v2863, %v566
    %v2874 = vmul.f32 %v2866, %v566
    %v2875 = vmul.f32 %v2869, %v566
    %v2876 = vmul.f32 %v2872, %v566
    %v2877 = vadd.f32 %v2873, 1e-05
    %v2878 = vadd.f32 %v2874, 1e-05
    %v2879 = vadd.f32 %v2875, 1e-05
    %v2880 = vadd.f32 %v2876, 1e-05
    %v2881 = vrsqrt.pop %v2877
    %v2882 = vrsqrt.pop %v2878
    %v2883 = vrsqrt.pop %v2879
    %v2884 = vrsqrt.pop %v2880
    %v2885 = vmul.f32 %v2853, %v2881
    %v2886 = vmul.f32 %v2854, %v2882
    %v2887 = vmul.f32 %v2855, %v2883
    %v2888 = vmul.f32 %v2856, %v2884
    %v2889 = vlaneseq
    %v2890 = vshrl.u32 %v2889, 7
    %v2891 = vsub.s32 4, %v2890
    %v2892 = vrot.slane %v1762, %v2891
    %v2893 = vmul.f32 %v2885, %v2892
    %v2894 = vmul.f32 %v2886, %v2892
    %v2895 = vmul.f32 %v2887, %v2892
    %v2896 = vmul.f32 %v2888, %v2892
    %v2897 = vlaneseq
    %v2898 = vshrl.u32 %v2897, 7
    %v2899 = vsub.s32 5, %v2898
    %v2900 = vrot.slane %v1762, %v2899
    %v2901 = vadd.f32 %v2893, %v2900
    %v2902 = vadd.f32 %v2894, %v2900
    %v2903 = vadd.f32 %v2895, %v2900
    %v2904 = vadd.f32 %v2896, %v2900
    %2905 = vst.msk [vmem:[#allocation2] sm:$0xff] %vm145, %v2901
    %2906 = vst.msk [vmem:[#allocation2 + $0x8] sm:$0xff] %vm145, %v2902
    %2907 = vst.msk [vmem:[#allocation2 + $0x10] sm:$0xff] %vm145, %v2903
    %2908 = vst.msk [vmem:[#allocation2 + $0x18] sm:$0xff] %vm145, %v2904
    // Predicated region
    $region46: #{tpu_custom_call.1} parent=1 // pred_check
      _
    $region47: #{tpu_custom_call.1} parent=1 // pred_check_branch
      %2910 = sbr.rel (0) target = $region49
    $region48: #{tpu_custom_call.1} parent=1 // pred_region
      %s2912 = ssub.s32 512, 512
      %2913 = vsyncadd [#allocation3], %s2912
      %s2914 = sshll.u32 [#allocation2], 4
      %s2915 = int_to_ptr.vmem [resolvable:$true] %s2914
      %2920 = dma.vmem_to_hbm [thread:$0]  %s2915, 512, %s11, [#allocation3], 128, 128, 8
    $region49: #{tpu_custom_call.1} parent=1 // pred_fallthru
      _
    // Predicated region
    $region50: #{tpu_custom_call.1} parent=1 // pred_check
      _
    $region51: #{tpu_custom_call.1} parent=1 // pred_check_branch
      %2922 = sbr.rel (0) target = $region53
    $region52: #{tpu_custom_call.1} parent=1 // pred_region
      %2923 = dma.done [#allocation3], 512
    $region53: #{tpu_custom_call.1} parent=1 // pred_fallthru
      _
    %2924 = vsyncpa [#allocation3], 1

</llo_original>
